<compile_context>
chip_gen: v5e
topology: v5e:2x2
jax: 0.10.0
libtpu: 0.0.40
codegen_flags: <defaults>
</compile_context>

<pallas_src>
import functools

import jax
import jax.numpy as jnp
from jax.experimental import pallas as pl
from jax.experimental.pallas import tpu as pltpu


def _round_up(x, m):
    return ((x + m - 1) // m) * m


def sae_kernel(x_ref, w1_ref, b1_ref, w2_ref, b2_ref,
               w3_ref, b3_ref, w4_ref, b4_ref, o_ref):
    # One batch tile resident in VMEM; all four fused Linear(+sigmoid) layers
    # run on the MXU/VPU with f32 accumulation.
    x = x_ref[...].astype(w1_ref.dtype)                # [tb, nb] f32 -> bf16 (free VPU cast)

    h1 = jnp.dot(x, w1_ref[...], preferred_element_type=jnp.float32) + b1_ref[...]
    h1 = jax.nn.sigmoid(h1)                            # [tb, 20] f32

    h2 = jnp.dot(h1, w2_ref[...], preferred_element_type=jnp.float32) + b2_ref[...]
    h2 = jax.nn.sigmoid(h2)                            # [tb, 10] f32

    h3 = jnp.dot(h2, w3_ref[...], preferred_element_type=jnp.float32) + b3_ref[...]
    h3 = jax.nn.sigmoid(h3)                            # [tb, 20] f32

    out = jnp.dot(h3.astype(w4_ref.dtype), w4_ref[...],
                  preferred_element_type=jnp.float32) + b4_ref[...]
    o_ref[...] = out.astype(o_ref.dtype)               # [tb, nb]


@functools.partial(jax.jit, static_argnames=("tile_b", "out_dtype"))
def sae_forward(x, prepped, tile_b=128, out_dtype=jnp.float32):
    """x: [B, nb_movies] float32.

    prepped: output of prepare_params(): w1 [nb,20] bf16, w2 [20,10] f32,
    w3 [10,20] f32, w4 [20,nb] bf16, biases b1..b4 as [1, out] f32 rows.
    """
    B, nb = x.shape

    # Sublane-friendly batch tile (f32 in / f32-or-bf16 out => 8-row multiple).
    tb = max(8, _round_up(min(tile_b, B), 8))
    grid = (pl.cdiv(B, tb),)   # partial last block: OOB reads are dont-care rows,
                               # OOB writes are dropped; rows are independent.

    def x_map(i):    # batch-tiled input / output
        return (i, 0)

    def rep(i):      # weights/biases: single block, resident across the grid
        return (0, 0)

    w1, b1 = prepped["w1"], prepped["b1"]
    w2, b2 = prepped["w2"], prepped["b2"]
    w3, b3 = prepped["w3"], prepped["b3"]
    w4, b4 = prepped["w4"], prepped["b4"]

    out = pl.pallas_call(
        sae_kernel,
        out_shape=jax.ShapeDtypeStruct((B, nb), out_dtype),
        grid_spec=pltpu.PrefetchScalarGridSpec(
            num_scalar_prefetch=0,
            grid=grid,
            in_specs=[
                pl.BlockSpec((tb, nb), x_map),        # x tile  [tb, nb]  f32
                pl.BlockSpec(w1.shape, rep),          # W1 [nb, 20]  bf16
                pl.BlockSpec(b1.shape, rep),          # b1 [1, 20]   f32
                pl.BlockSpec(w2.shape, rep),          # W2 [20, 10]  f32
                pl.BlockSpec(b2.shape, rep),          # b2 [1, 10]   f32
                pl.BlockSpec(w3.shape, rep),          # W3 [10, 20]  f32
                pl.BlockSpec(b3.shape, rep),          # b3 [1, 20]   f32
                pl.BlockSpec(w4.shape, rep),          # W4 [20, nb]  bf16
                pl.BlockSpec(b4.shape, rep),          # b4 [1, nb]   f32
            ],
            out_specs=pl.BlockSpec((tb, nb), x_map),
        ),
        compiler_params=pltpu.CompilerParams(
            # Megacore-shard the batch axis; working set (~5 MiB: 2x f32 x tile
            # + 2x out tile + resident weights) fits default scoped VMEM on
            # v5e/v6e/v7x, so no vmem_limit override is needed.
            dimension_semantics=("parallel",),
        ),
    )(x, w1, b1, w2, b2, w3, b3, w4, b4)

    return out


def init_params(key, nb_movies):
    """Deterministic init matching PyTorch Linear shapes.

    PyTorch nn.Linear(in, out): weight [out, in], bias [out], both
    U(-1/sqrt(in), 1/sqrt(in)).  We store the weight transposed as [in, out]
    and the bias as a [1, out] row so it broadcasts over the batch tile.
    """
    dims = [(nb_movies, 20), (20, 10), (10, 20), (20, nb_movies)]
    params = {}
    keys = jax.random.split(key, 2 * len(dims))
    for idx, (fan_in, fan_out) in enumerate(dims):
        bound = 1.0 / jnp.sqrt(jnp.float32(fan_in))
        wk, bk = keys[2 * idx], keys[2 * idx + 1]
        params[f"w{idx + 1}"] = jax.random.uniform(
            wk, (fan_in, fan_out), jnp.float32, -bound, bound)
        params[f"b{idx + 1}"] = jax.random.uniform(
            bk, (1, fan_out), jnp.float32, -bound, bound)
    return params


def prepare_params(params, io_dtype=jnp.bfloat16):
    """One-time preprocessing (hoisted out of the per-call path): store the two
    large weight matrices in bf16 to halve their resident/HBM footprint."""
    p = dict(params)
    p["w1"] = params["w1"].astype(io_dtype)
    p["w4"] = params["w4"].astype(io_dtype)
    return p


def sae_reference(x, prepped):
    """Pure-JAX reference mirroring the kernel exactly (bf16 inputs to fc1/fc4,
    f32 accumulation, f32 fc2/fc3 and sigmoids)."""
    f32 = jnp.float32
    h = jax.nn.sigmoid(
        jnp.dot(x.astype(prepped["w1"].dtype), prepped["w1"],
                preferred_element_type=f32) + prepped["b1"])
    h = jax.nn.sigmoid(jnp.dot(h, prepped["w2"], preferred_element_type=f32)
                       + prepped["b2"])
    h = jax.nn.sigmoid(jnp.dot(h, prepped["w3"], preferred_element_type=f32)
                       + prepped["b3"])
    return (jnp.dot(h.astype(prepped["w4"].dtype), prepped["w4"],
                    preferred_element_type=f32) + prepped["b4"])


if __name__ == "__main__":
    # Deterministic problem at MovieLens-100k scale: 512 "users", 1682 movies.
    # tile_b=128 -> 4-step parallel grid (2 steps per TensorCore on v7x).
    key = jax.random.PRNGKey(0)
    k_x, k_p = jax.random.split(key)

    B = 512
    NB_MOVIES = 1682

    x = jax.random.uniform(k_x, (B, NB_MOVIES), jnp.float32, 0.0, 5.0)
    params = init_params(k_p, NB_MOVIES)
    prepped = prepare_params(params)          # one-time bf16 cast of W1 / W4

    out = sae_forward(x, prepped, tile_b=128, out_dtype=jnp.float32)
    out = jax.block_until_ready(out)

    ref = sae_reference(x, prepped)
    assert out.shape == (B, NB_MOVIES)
    max_err = float(jnp.max(jnp.abs(out - ref)))
    assert jnp.allclose(out, ref, atol=5e-3, rtol=5e-3), (
        f"mismatch vs reference (max abs err {max_err})")

    print("KERNEL_OK")
</pallas_src>

<mosaic_0001>
module attributes {stable_mosaic.version = 11 : i64} {
  func.func @sae_kernel(%arg0: i32, %arg1: memref<128x1682xf32, #tpu.memory_space<vmem>>, %arg2: memref<1682x20xbf16, #tpu.memory_space<vmem>>, %arg3: memref<1x20xf32, #tpu.memory_space<vmem>>, %arg4: memref<20x10xf32, #tpu.memory_space<vmem>>, %arg5: memref<1x10xf32, #tpu.memory_space<vmem>>, %arg6: memref<10x20xf32, #tpu.memory_space<vmem>>, %arg7: memref<1x20xf32, #tpu.memory_space<vmem>>, %arg8: memref<20x1682xbf16, #tpu.memory_space<vmem>>, %arg9: memref<1x1682xf32, #tpu.memory_space<vmem>>, %arg10: memref<128x1682xf32, #tpu.memory_space<vmem>>) attributes {dimension_semantics = [#tpu.dimension_semantics<parallel>], iteration_bounds = array<i64: 4>, scalar_prefetch = 0 : i64, scratch_operands = 0 : i64, tpu.core_type = #tpu.core_type<tc>, window_params = [{transform_indices = @transform_0, window_bounds = array<i64: 128, 1682>}, {pipeline_mode = #tpu.pipeline_mode<synchronous>, transform_indices = @transform_1, window_bounds = array<i64: 1682, 20>}, {pipeline_mode = #tpu.pipeline_mode<synchronous>, transform_indices = @transform_2, window_bounds = array<i64: 1, 20>}, {pipeline_mode = #tpu.pipeline_mode<synchronous>, transform_indices = @transform_3, window_bounds = array<i64: 20, 10>}, {pipeline_mode = #tpu.pipeline_mode<synchronous>, transform_indices = @transform_4, window_bounds = array<i64: 1, 10>}, {pipeline_mode = #tpu.pipeline_mode<synchronous>, transform_indices = @transform_5, window_bounds = array<i64: 10, 20>}, {pipeline_mode = #tpu.pipeline_mode<synchronous>, transform_indices = @transform_6, window_bounds = array<i64: 1, 20>}, {pipeline_mode = #tpu.pipeline_mode<synchronous>, transform_indices = @transform_7, window_bounds = array<i64: 20, 1682>}, {pipeline_mode = #tpu.pipeline_mode<synchronous>, transform_indices = @transform_8, window_bounds = array<i64: 1, 1682>}, {transform_indices = @transform_9, window_bounds = array<i64: 128, 1682>}]} {
    %c0 = arith.constant 0 : index
    %c0_0 = arith.constant 0 : index
    %0 = vector.load %arg1[%c0, %c0_0] : memref<128x1682xf32, #tpu.memory_space<vmem>>, vector<128x1682xf32>
    %1 = arith.truncf %0 : vector<128x1682xf32> to vector<128x1682xbf16>
    %c0_1 = arith.constant 0 : index
    %c0_2 = arith.constant 0 : index
    %2 = vector.load %arg2[%c0_1, %c0_2] : memref<1682x20xbf16, #tpu.memory_space<vmem>>, vector<1682x20xbf16>
    %cst = arith.constant dense<0.000000e+00> : vector<128x20xf32>
    %3 = tpu.matmul %1, %2, %cst {dimension_numbers = #tpu.dot_dimension_numbers<[1], [0], [0], [1], [0, 0, 1, 1], [], []>} : vector<128x1682xbf16>, vector<1682x20xbf16>, vector<128x20xf32> -> vector<128x20xf32>
    %c0_3 = arith.constant 0 : index
    %c0_4 = arith.constant 0 : index
    %4 = vector.load %arg3[%c0_3, %c0_4] : memref<1x20xf32, #tpu.memory_space<vmem>>, vector<1x20xf32>
    %5 = vector.broadcast %4 : vector<1x20xf32> to vector<128x20xf32>
    %6 = arith.addf %3, %5 : vector<128x20xf32>
    %7 = arith.negf %6 : vector<128x20xf32>
    %8 = math.exp %7 : vector<128x20xf32>
    %cst_5 = arith.constant 1.000000e+00 : f32
    %9 = vector.broadcast %cst_5 : f32 to vector<128x20xf32>
    %10 = arith.addf %9, %8 : vector<128x20xf32>
    %11 = arith.divf %9, %10 : vector<128x20xf32>
    %c0_6 = arith.constant 0 : index
    %c0_7 = arith.constant 0 : index
    %12 = vector.load %arg4[%c0_6, %c0_7] : memref<20x10xf32, #tpu.memory_space<vmem>>, vector<20x10xf32>
    %cst_8 = arith.constant dense<0.000000e+00> : vector<128x10xf32>
    %13 = tpu.matmul %11, %12, %cst_8 {dimension_numbers = #tpu.dot_dimension_numbers<[1], [0], [0], [1], [0, 0, 1, 1], [], []>} : vector<128x20xf32>, vector<20x10xf32>, vector<128x10xf32> -> vector<128x10xf32>
    %c0_9 = arith.constant 0 : index
    %c0_10 = arith.constant 0 : index
    %14 = vector.load %arg5[%c0_9, %c0_10] : memref<1x10xf32, #tpu.memory_space<vmem>>, vector<1x10xf32>
    %15 = vector.broadcast %14 : vector<1x10xf32> to vector<128x10xf32>
    %16 = arith.addf %13, %15 : vector<128x10xf32>
    %17 = arith.negf %16 : vector<128x10xf32>
    %18 = math.exp %17 : vector<128x10xf32>
    %cst_11 = arith.constant 1.000000e+00 : f32
    %19 = vector.broadcast %cst_11 : f32 to vector<128x10xf32>
    %20 = arith.addf %19, %18 : vector<128x10xf32>
    %21 = arith.divf %19, %20 : vector<128x10xf32>
    %c0_12 = arith.constant 0 : index
    %c0_13 = arith.constant 0 : index
    %22 = vector.load %arg6[%c0_12, %c0_13] : memref<10x20xf32, #tpu.memory_space<vmem>>, vector<10x20xf32>
    %cst_14 = arith.constant dense<0.000000e+00> : vector<128x20xf32>
    %23 = tpu.matmul %21, %22, %cst_14 {dimension_numbers = #tpu.dot_dimension_numbers<[1], [0], [0], [1], [0, 0, 1, 1], [], []>} : vector<128x10xf32>, vector<10x20xf32>, vector<128x20xf32> -> vector<128x20xf32>
    %c0_15 = arith.constant 0 : index
    %c0_16 = arith.constant 0 : index
    %24 = vector.load %arg7[%c0_15, %c0_16] : memref<1x20xf32, #tpu.memory_space<vmem>>, vector<1x20xf32>
    %25 = vector.broadcast %24 : vector<1x20xf32> to vector<128x20xf32>
    %26 = arith.addf %23, %25 : vector<128x20xf32>
    %27 = arith.negf %26 : vector<128x20xf32>
    %28 = math.exp %27 : vector<128x20xf32>
    %cst_17 = arith.constant 1.000000e+00 : f32
    %29 = vector.broadcast %cst_17 : f32 to vector<128x20xf32>
    %30 = arith.addf %29, %28 : vector<128x20xf32>
    %31 = arith.divf %29, %30 : vector<128x20xf32>
    %32 = arith.truncf %31 : vector<128x20xf32> to vector<128x20xbf16>
    %c0_18 = arith.constant 0 : index
    %c0_19 = arith.constant 0 : index
    %33 = vector.load %arg8[%c0_18, %c0_19] : memref<20x1682xbf16, #tpu.memory_space<vmem>>, vector<20x1682xbf16>
    %cst_20 = arith.constant dense<0.000000e+00> : vector<128x1682xf32>
    %34 = tpu.matmul %32, %33, %cst_20 {dimension_numbers = #tpu.dot_dimension_numbers<[1], [0], [0], [1], [0, 0, 1, 1], [], []>} : vector<128x20xbf16>, vector<20x1682xbf16>, vector<128x1682xf32> -> vector<128x1682xf32>
    %c0_21 = arith.constant 0 : index
    %c0_22 = arith.constant 0 : index
    %35 = vector.load %arg9[%c0_21, %c0_22] : memref<1x1682xf32, #tpu.memory_space<vmem>>, vector<1x1682xf32>
    %36 = vector.broadcast %35 : vector<1x1682xf32> to vector<128x1682xf32>
    %37 = arith.addf %34, %36 : vector<128x1682xf32>
    %c0_23 = arith.constant 0 : index
    %c0_24 = arith.constant 0 : index
    %38 = vector.load %arg10[%c0_23, %c0_24] : memref<128x1682xf32, #tpu.memory_space<vmem>>, vector<128x1682xf32>
    tpu.vector_store %arg10[%c0_23, %c0_24], %37 {strides = array<i32>} : memref<128x1682xf32, #tpu.memory_space<vmem>>, vector<128x1682xf32>,
    return
  }
  func.func @transform_0(%arg0: i32) -> (i32, i32) {
    %c0_i32 = arith.constant 0 : i32
    %c0_i32_0 = arith.constant 0 : i32
    return %arg0, %c0_i32 : i32, i32
  }
  func.func @transform_1(%arg0: i32) -> (i32, i32) {
    %c0_i32 = arith.constant 0 : i32
    %c0_i32_0 = arith.constant 0 : i32
    %c0_i32_1 = arith.constant 0 : i32
    return %c0_i32, %c0_i32_0 : i32, i32
  }
  func.func @transform_2(%arg0: i32) -> (i32, i32) {
    %c0_i32 = arith.constant 0 : i32
    %c0_i32_0 = arith.constant 0 : i32
    %c0_i32_1 = arith.constant 0 : i32
    return %c0_i32, %c0_i32_0 : i32, i32
  }
  func.func @transform_3(%arg0: i32) -> (i32, i32) {
    %c0_i32 = arith.constant 0 : i32
    %c0_i32_0 = arith.constant 0 : i32
    %c0_i32_1 = arith.constant 0 : i32
    return %c0_i32, %c0_i32_0 : i32, i32
  }
  func.func @transform_4(%arg0: i32) -> (i32, i32) {
    %c0_i32 = arith.constant 0 : i32
    %c0_i32_0 = arith.constant 0 : i32
    %c0_i32_1 = arith.constant 0 : i32
    return %c0_i32, %c0_i32_0 : i32, i32
  }
  func.func @transform_5(%arg0: i32) -> (i32, i32) {
    %c0_i32 = arith.constant 0 : i32
    %c0_i32_0 = arith.constant 0 : i32
    %c0_i32_1 = arith.constant 0 : i32
    return %c0_i32, %c0_i32_0 : i32, i32
  }
  func.func @transform_6(%arg0: i32) -> (i32, i32) {
    %c0_i32 = arith.constant 0 : i32
    %c0_i32_0 = arith.constant 0 : i32
    %c0_i32_1 = arith.constant 0 : i32
    return %c0_i32, %c0_i32_0 : i32, i32
  }
  func.func @transform_7(%arg0: i32) -> (i32, i32) {
    %c0_i32 = arith.constant 0 : i32
    %c0_i32_0 = arith.constant 0 : i32
    %c0_i32_1 = arith.constant 0 : i32
    return %c0_i32, %c0_i32_0 : i32, i32
  }
  func.func @transform_8(%arg0: i32) -> (i32, i32) {
    %c0_i32 = arith.constant 0 : i32
    %c0_i32_0 = arith.constant 0 : i32
    %c0_i32_1 = arith.constant 0 : i32
    return %c0_i32, %c0_i32_0 : i32, i32
  }
  func.func @transform_9(%arg0: i32) -> (i32, i32) {
    %c0_i32 = arith.constant 0 : i32
    %c0_i32_0 = arith.constant 0 : i32
    return %arg0, %c0_i32 : i32, i32
  }
}

</mosaic_0001>

<llo_original>
// kernel: sae_forward.1
$region0: #{sae_forward.1}
  #allocation0 [shape = 'u32[]', space=smem, size = 0x4, offset = 0x4, fixed_abs, tag = 'smem constant byte address 0x4 - core index']
  #allocation1 [shape = 'u32[72,128]{1,0:T(1,128)}', space=vmem, size = 0x9000, scoped, tag = 'internal scratch']
  %s0 = inlined_call_operand.vmem [shape: f32[512,1682], index: 0, kind: input, shape index: {}]
  %s1 = inlined_call_operand.vmem [shape: bf16[1682,20], index: 1, kind: input, shape index: {}]
  %s2 = inlined_call_operand.vmem [shape: f32[1,20], index: 2, kind: input, shape index: {}]
  %s3 = inlined_call_operand.vmem [shape: f32[20,10], index: 3, kind: input, shape index: {}]
  %s4 = inlined_call_operand.vmem [shape: f32[1,10], index: 4, kind: input, shape index: {}]
  %s5 = inlined_call_operand.vmem [shape: f32[10,20], index: 5, kind: input, shape index: {}]
  %s6 = inlined_call_operand.vmem [shape: f32[1,20], index: 6, kind: input, shape index: {}]
  %s7 = inlined_call_operand.vmem [shape: bf16[20,1682], index: 7, kind: input, shape index: {}]
  %s8 = inlined_call_operand.vmem [shape: f32[1,1682], index: 8, kind: input, shape index: {}]
  %s9 = inlined_call_operand.vmem [shape: f32[512,1682], index: 9, kind: output, shape index: {}]
  %s10 = sld [smem:[#allocation0]]
  $region69: #{sae_forward.1} parent=0
    _
  %s12 = ssub.s32 1, %s10
  %s13 = scalar_select 0, %s12, %s10
  loop: start=0, step=1, limit=6
  $region2: #{sae_forward.1} parent=0 // loop_pre_header
    _
  $region3: #{sae_forward.1} parent=0 // loop_header
    %s15 = sphi 0, %s19
    %p16 = scmp.ge.s32.totalorder %s15, 6
    %s25 = sphi 0, %s27
    %s28 = sphi 0, %s25
    %s29 = sphi 0, %s28
    %s45 = sphi 0, %s29
    %s49 = sphi 0, %s49
    %s51 = sphi 0, %s49
    %s52 = sphi 0, %s51
    %s66 = sphi 0, %s52
    %s70 = sphi 0, %s70
    %s72 = sphi 0, %s70
    %s73 = sphi 0, %s72
    %s87 = sphi 0, %s73
    %s91 = sphi 0, %s91
    %s93 = sphi 0, %s91
    %s94 = sphi 0, %s93
    %s108 = sphi 0, %s94
    %s112 = sphi 0, %s112
    %s114 = sphi 0, %s112
    %s115 = sphi 0, %s114
    %s129 = sphi 0, %s115
    %s133 = sphi 0, %s133
    %s135 = sphi 0, %s133
    %s136 = sphi 0, %s135
    %s150 = sphi 0, %s136
    %s154 = sphi 0, %s154
    %s156 = sphi 0, %s154
    %s157 = sphi 0, %s156
    %s171 = sphi 0, %s157
    %s175 = sphi 0, %s175
    %s177 = sphi 0, %s175
    %s178 = sphi 0, %s177
    %s192 = sphi 0, %s178
    %s196 = sphi 0, %s196
    %s198 = sphi 0, %s196
    %s199 = sphi 0, %s198
    %s213 = sphi 0, %s199
    %s219 = sphi 0, %s221
    %s222 = sphi 0, %s219
    %s223 = sphi 0, %s222
    %s239 = sphi 0, %s223
  $region4: #{sae_forward.1} parent=0 // loop_header_branch
    %18 = sbr.rel (%p16) target = $region8
  $region5: #{sae_forward.1} parent=0 // loop_body
    %s20 = ssub.s32 %s15, 1
    %s21 = ssub.s32 %s15, 2
    %s22 = sadd.s32 %s15, 1
    %s23 = ssub.s32 %s15, %s22
    %p24 = scmp.eq.s32.totalorder %s23, 0
    %s26 = sadd.s32 %s25, 1
    %s27 = scalar_select %p24, %s25, %s26
    %p30 = pneg %p24
    %p31 = scmp.eq.s32.totalorder %s15, 3
    %p32 = por %p30, %p31
    %p33 = scmp.ne.s32.totalorder %s25, %s28
    %p34 = scmp.eq.s32.totalorder %s15, 0
    %p35 = por %p33, %p34
    %p36 = scmp.ne.s32.totalorder %s25, %s28
    %p37 = scmp.eq.s32.totalorder %s20, 3
    %p38 = por %p36, %p37
    %p39 = scmp.ne.s32.totalorder %s28, %s29
    %p40 = scmp.eq.s32.totalorder %s20, 0
    %p41 = por %p39, %p40
    %p42 = scmp.ne.s32.totalorder %s28, %s29
    %p43 = scmp.eq.s32.totalorder %s21, 3
    %p44 = por %p42, %p43
    %p46 = scmp.ne.s32.totalorder %s29, %s45
    %p47 = scmp.eq.s32.totalorder %s21, 0
    %p48 = por %p46, %p47
    %s50 = sadd.s32 %s49, 1
    %p53 = scmp.eq.s32.totalorder %s15, 3
    %p54 = scmp.ne.s32.totalorder %s49, %s51
    %p55 = scmp.eq.s32.totalorder %s15, 0
    %p56 = por %p54, %p55
    %p57 = scmp.ne.s32.totalorder %s49, %s51
    %p58 = scmp.eq.s32.totalorder %s20, 3
    %p59 = por %p57, %p58
    %p60 = scmp.ne.s32.totalorder %s51, %s52
    %p61 = scmp.eq.s32.totalorder %s20, 0
    %p62 = por %p60, %p61
    %p63 = scmp.ne.s32.totalorder %s51, %s52
    %p64 = scmp.eq.s32.totalorder %s21, 3
    %p65 = por %p63, %p64
    %p67 = scmp.ne.s32.totalorder %s52, %s66
    %p68 = scmp.eq.s32.totalorder %s21, 0
    %p69 = por %p67, %p68
    %s71 = sadd.s32 %s70, 1
    %p74 = scmp.eq.s32.totalorder %s15, 3
    %p75 = scmp.ne.s32.totalorder %s70, %s72
    %p76 = scmp.eq.s32.totalorder %s15, 0
    %p77 = por %p75, %p76
    %p78 = scmp.ne.s32.totalorder %s70, %s72
    %p79 = scmp.eq.s32.totalorder %s20, 3
    %p80 = por %p78, %p79
    %p81 = scmp.ne.s32.totalorder %s72, %s73
    %p82 = scmp.eq.s32.totalorder %s20, 0
    %p83 = por %p81, %p82
    %p84 = scmp.ne.s32.totalorder %s72, %s73
    %p85 = scmp.eq.s32.totalorder %s21, 3
    %p86 = por %p84, %p85
    %p88 = scmp.ne.s32.totalorder %s73, %s87
    %p89 = scmp.eq.s32.totalorder %s21, 0
    %p90 = por %p88, %p89
    %s92 = sadd.s32 %s91, 1
    %p95 = scmp.eq.s32.totalorder %s15, 3
    %p96 = scmp.ne.s32.totalorder %s91, %s93
    %p97 = scmp.eq.s32.totalorder %s15, 0
    %p98 = por %p96, %p97
    %p99 = scmp.ne.s32.totalorder %s91, %s93
    %p100 = scmp.eq.s32.totalorder %s20, 3
    %p101 = por %p99, %p100
    %p102 = scmp.ne.s32.totalorder %s93, %s94
    %p103 = scmp.eq.s32.totalorder %s20, 0
    %p104 = por %p102, %p103
    %p105 = scmp.ne.s32.totalorder %s93, %s94
    %p106 = scmp.eq.s32.totalorder %s21, 3
    %p107 = por %p105, %p106
    %p109 = scmp.ne.s32.totalorder %s94, %s108
    %p110 = scmp.eq.s32.totalorder %s21, 0
    %p111 = por %p109, %p110
    %s113 = sadd.s32 %s112, 1
    %p116 = scmp.eq.s32.totalorder %s15, 3
    %p117 = scmp.ne.s32.totalorder %s112, %s114
    %p118 = scmp.eq.s32.totalorder %s15, 0
    %p119 = por %p117, %p118
    %p120 = scmp.ne.s32.totalorder %s112, %s114
    %p121 = scmp.eq.s32.totalorder %s20, 3
    %p122 = por %p120, %p121
    %p123 = scmp.ne.s32.totalorder %s114, %s115
    %p124 = scmp.eq.s32.totalorder %s20, 0
    %p125 = por %p123, %p124
    %p126 = scmp.ne.s32.totalorder %s114, %s115
    %p127 = scmp.eq.s32.totalorder %s21, 3
    %p128 = por %p126, %p127
    %p130 = scmp.ne.s32.totalorder %s115, %s129
    %p131 = scmp.eq.s32.totalorder %s21, 0
    %p132 = por %p130, %p131
    %s134 = sadd.s32 %s133, 1
    %p137 = scmp.eq.s32.totalorder %s15, 3
    %p138 = scmp.ne.s32.totalorder %s133, %s135
    %p139 = scmp.eq.s32.totalorder %s15, 0
    %p140 = por %p138, %p139
    %p141 = scmp.ne.s32.totalorder %s133, %s135
    %p142 = scmp.eq.s32.totalorder %s20, 3
    %p143 = por %p141, %p142
    %p144 = scmp.ne.s32.totalorder %s135, %s136
    %p145 = scmp.eq.s32.totalorder %s20, 0
    %p146 = por %p144, %p145
    %p147 = scmp.ne.s32.totalorder %s135, %s136
    %p148 = scmp.eq.s32.totalorder %s21, 3
    %p149 = por %p147, %p148
    %p151 = scmp.ne.s32.totalorder %s136, %s150
    %p152 = scmp.eq.s32.totalorder %s21, 0
    %p153 = por %p151, %p152
    %s155 = sadd.s32 %s154, 1
    %p158 = scmp.eq.s32.totalorder %s15, 3
    %p159 = scmp.ne.s32.totalorder %s154, %s156
    %p160 = scmp.eq.s32.totalorder %s15, 0
    %p161 = por %p159, %p160
    %p162 = scmp.ne.s32.totalorder %s154, %s156
    %p163 = scmp.eq.s32.totalorder %s20, 3
    %p164 = por %p162, %p163
    %p165 = scmp.ne.s32.totalorder %s156, %s157
    %p166 = scmp.eq.s32.totalorder %s20, 0
    %p167 = por %p165, %p166
    %p168 = scmp.ne.s32.totalorder %s156, %s157
    %p169 = scmp.eq.s32.totalorder %s21, 3
    %p170 = por %p168, %p169
    %p172 = scmp.ne.s32.totalorder %s157, %s171
    %p173 = scmp.eq.s32.totalorder %s21, 0
    %p174 = por %p172, %p173
    %s176 = sadd.s32 %s175, 1
    %p179 = scmp.eq.s32.totalorder %s15, 3
    %p180 = scmp.ne.s32.totalorder %s175, %s177
    %p181 = scmp.eq.s32.totalorder %s15, 0
    %p182 = por %p180, %p181
    %p183 = scmp.ne.s32.totalorder %s175, %s177
    %p184 = scmp.eq.s32.totalorder %s20, 3
    %p185 = por %p183, %p184
    %p186 = scmp.ne.s32.totalorder %s177, %s178
    %p187 = scmp.eq.s32.totalorder %s20, 0
    %p188 = por %p186, %p187
    %p189 = scmp.ne.s32.totalorder %s177, %s178
    %p190 = scmp.eq.s32.totalorder %s21, 3
    %p191 = por %p189, %p190
    %p193 = scmp.ne.s32.totalorder %s178, %s192
    %p194 = scmp.eq.s32.totalorder %s21, 0
    %p195 = por %p193, %p194
    %s197 = sadd.s32 %s196, 1
    %p200 = scmp.eq.s32.totalorder %s15, 3
    %p201 = scmp.ne.s32.totalorder %s196, %s198
    %p202 = scmp.eq.s32.totalorder %s15, 0
    %p203 = por %p201, %p202
    %p204 = scmp.ne.s32.totalorder %s196, %s198
    %p205 = scmp.eq.s32.totalorder %s20, 3
    %p206 = por %p204, %p205
    %p207 = scmp.ne.s32.totalorder %s198, %s199
    %p208 = scmp.eq.s32.totalorder %s20, 0
    %p209 = por %p207, %p208
    %p210 = scmp.ne.s32.totalorder %s198, %s199
    %p211 = scmp.eq.s32.totalorder %s21, 3
    %p212 = por %p210, %p211
    %p214 = scmp.ne.s32.totalorder %s199, %s213
    %p215 = scmp.eq.s32.totalorder %s21, 0
    %p216 = por %p214, %p215
    %s217 = ssub.s32 %s15, %s22
    %p218 = scmp.eq.s32.totalorder %s217, 0
    %s220 = sadd.s32 %s219, 1
    %s221 = scalar_select %p218, %s219, %s220
    %p224 = pneg %p218
    %p225 = scmp.eq.s32.totalorder %s15, 3
    %p226 = por %p224, %p225
    %p227 = scmp.ne.s32.totalorder %s219, %s222
    %p228 = scmp.eq.s32.totalorder %s15, 0
    %p229 = por %p227, %p228
    %p230 = scmp.ne.s32.totalorder %s219, %s222
    %p231 = scmp.eq.s32.totalorder %s20, 3
    %p232 = por %p230, %p231
    %p233 = scmp.ne.s32.totalorder %s222, %s223
    %p234 = scmp.eq.s32.totalorder %s20, 0
    %p235 = por %p233, %p234
    %p236 = scmp.ne.s32.totalorder %s222, %s223
    %p237 = scmp.eq.s32.totalorder %s21, 3
    %p238 = por %p236, %p237
    %p240 = scmp.ne.s32.totalorder %s223, %s239
    %p241 = scmp.eq.s32.totalorder %s21, 0
    %p242 = por %p240, %p241
    %p243 = scmp.le.s32.totalorder 1, %s15
    %p244 = scmp.lt.s32.totalorder %s15, 5
    %p245 = pnand %p243, %p244
    %p246 = pneg %p245
    // Predicated region
    $region9: #{sae_forward.1} parent=5 // pred_check
      _
    $region10: #{sae_forward.1} parent=5 // pred_check_branch
      %248 = sbr.rel (%p245) target = $region12
    $region11: #{sae_forward.1} parent=5 // pred_region
      %s249 = ssub.s32 %s15, 1
      // Predicated region
      $region13: #{sae_forward.1} parent=11 // pred_check
        %p250 = pneg %p62
      $region14: #{sae_forward.1} parent=11 // pred_check_branch
        %252 = sbr.rel (%p250) target = $region16
      $region15: #{sae_forward.1} parent=11 // pred_region
        _
      $region16: #{sae_forward.1} parent=11 // pred_fallthru
        _
      // Predicated region
      $region17: #{sae_forward.1} parent=11 // pred_check
        %p253 = pneg %p83
      $region18: #{sae_forward.1} parent=11 // pred_check_branch
        %255 = sbr.rel (%p253) target = $region20
      $region19: #{sae_forward.1} parent=11 // pred_region
        _
      $region20: #{sae_forward.1} parent=11 // pred_fallthru
        _
      // Predicated region
      $region21: #{sae_forward.1} parent=11 // pred_check
        %p256 = pneg %p104
      $region22: #{sae_forward.1} parent=11 // pred_check_branch
        %258 = sbr.rel (%p256) target = $region24
      $region23: #{sae_forward.1} parent=11 // pred_region
        _
      $region24: #{sae_forward.1} parent=11 // pred_fallthru
        _
      // Predicated region
      $region25: #{sae_forward.1} parent=11 // pred_check
        %p259 = pneg %p125
      $region26: #{sae_forward.1} parent=11 // pred_check_branch
        %261 = sbr.rel (%p259) target = $region28
      $region27: #{sae_forward.1} parent=11 // pred_region
        _
      $region28: #{sae_forward.1} parent=11 // pred_fallthru
        _
      // Predicated region
      $region29: #{sae_forward.1} parent=11 // pred_check
        %p262 = pneg %p146
      $region30: #{sae_forward.1} parent=11 // pred_check_branch
        %264 = sbr.rel (%p262) target = $region32
      $region31: #{sae_forward.1} parent=11 // pred_region
        _
      $region32: #{sae_forward.1} parent=11 // pred_fallthru
        _
      // Predicated region
      $region33: #{sae_forward.1} parent=11 // pred_check
        %p265 = pneg %p167
      $region34: #{sae_forward.1} parent=11 // pred_check_branch
        %267 = sbr.rel (%p265) target = $region36
      $region35: #{sae_forward.1} parent=11 // pred_region
        _
      $region36: #{sae_forward.1} parent=11 // pred_fallthru
        _
      // Predicated region
      $region37: #{sae_forward.1} parent=11 // pred_check
        %p268 = pneg %p188
      $region38: #{sae_forward.1} parent=11 // pred_check_branch
        %270 = sbr.rel (%p268) target = $region40
      $region39: #{sae_forward.1} parent=11 // pred_region
        _
      $region40: #{sae_forward.1} parent=11 // pred_fallthru
        _
      // Predicated region
      $region41: #{sae_forward.1} parent=11 // pred_check
        %p271 = pneg %p209
      $region42: #{sae_forward.1} parent=11 // pred_check_branch
        %273 = sbr.rel (%p271) target = $region44
      $region43: #{sae_forward.1} parent=11 // pred_region
        _
      $region44: #{sae_forward.1} parent=11 // pred_fallthru
        _
    $region12: #{sae_forward.1} parent=5 // pred_fallthru
      _
    %p274 = scmp.lt.s32.totalorder %s15, 4
    // Predicated region
    $region45: #{sae_forward.1} parent=5 // pred_check
      %p275 = pneg %p274
    $region46: #{sae_forward.1} parent=5 // pred_check_branch
      %277 = sbr.rel (%p275) target = $region48
    $region47: #{sae_forward.1} parent=5 // pred_region
      // Predicated region
      $region49: #{sae_forward.1} parent=47 // pred_check
        %p278 = pneg %p35
      $region50: #{sae_forward.1} parent=47 // pred_check_branch
        %280 = sbr.rel (%p278) target = $region52
      $region51: #{sae_forward.1} parent=47 // pred_region
        %s281 = smul.u32 16, %s15
        %p282 = scmp.lt.s32.totalorder %s281, 63
        %s283 = scalar_select %p282, %s281, 63
        %s284 = smul.addr %s283, 14
        %s285 = smul.addr %s284, 8
        %s286 = scalar_lea.vmem %s0, %s285
        %s287 = smul.u32 16, %s15
      $region52: #{sae_forward.1} parent=47 // pred_fallthru
        _
    $region48: #{sae_forward.1} parent=5 // pred_fallthru
      _
    %p288 = scmp.le.s32.totalorder 1, %s15
    %p289 = scmp.lt.s32.totalorder %s15, 5
    %p290 = pnand %p288, %p289
    %p291 = pneg %p290
    // Predicated region
    $region53: #{sae_forward.1} parent=5 // pred_check
      _
    $region54: #{sae_forward.1} parent=5 // pred_check_branch
      %293 = sbr.rel (%p290) target = $region56
    $region55: #{sae_forward.1} parent=5 // pred_region
      %s294 = ssub.s32 %s15, 1
      %s295 = smul.u32 16, %s20
      %p296 = scmp.lt.s32.totalorder %s295, 63
      %s297 = scalar_select %p296, %s295, 63
      %s298 = smul.addr %s297, 14
      %s299 = smul.addr %s298, 8
      %s300 = scalar_lea.vmem %s0, %s299
      %p301 = pneg %p41
      %p302 = pneg %p38
      %p303 = pneg %p62
      %p304 = pneg %p59
      %p305 = pneg %p83
      %p306 = pneg %p80
      %p307 = pneg %p104
      %p308 = pneg %p101
      %p309 = pneg %p125
      %p310 = pneg %p122
      %p311 = pneg %p146
      %p312 = pneg %p143
      %p313 = pneg %p167
      %p314 = pneg %p164
      %p315 = pneg %p188
      %p316 = pneg %p185
      %p317 = pneg %p209
      %p318 = pneg %p206
      %p319 = pneg %p235
      %p320 = pneg %p232
      %s321 = smul.u32 16, %s20
      %p322 = scmp.lt.s32.totalorder %s321, 63
      %s323 = scalar_select %p322, %s321, 63
      %s324 = smul.addr %s323, 14
      %s325 = smul.addr %s324, 8
      %s326 = scalar_lea.vmem %s9, %s325
      %s327 = smul.u32 16, %s20
      %p328 = scmp.lt.s32.totalorder %s327, 63
      %s329 = scalar_select %p328, %s327, 63
      %s330 = smul.addr %s329, 14
      %s331 = smul.addr %s330, 8
      %s332 = scalar_lea.vmem %s0, %s331
      %s333 = smul.u32 16, %s20
      %s334 = smul.u32 16, %s20
      %p335 = scmp.lt.s32.totalorder %s334, 63
      %s336 = scalar_select %p335, %s334, 63
      %s337 = smul.addr %s336, 14
      %s338 = smul.addr %s337, 8
      %s339 = scalar_lea.vmem %s9, %s338
      %s340 = smul.u32 16, %s20
      %v342 = vld [vmem:[%s332] sm:$0xff]
      %v343 = vld [vmem:[%s332 + $0x8] sm:$0xff]
      %v344 = vld [vmem:[%s332 + $0x10] sm:$0xff]
      %v345 = vld [vmem:[%s332 + $0x18] sm:$0xff]
      %v346 = vld [vmem:[%s332 + $0x20] sm:$0xff]
      %v347 = vld [vmem:[%s332 + $0x28] sm:$0xff]
      %v348 = vld [vmem:[%s332 + $0x30] sm:$0xff]
      %v349 = vld [vmem:[%s332 + $0x38] sm:$0xff]
      %v350 = vld [vmem:[%s332 + $0x40] sm:$0xff]
      %v351 = vld [vmem:[%s332 + $0x48] sm:$0xff]
      %v352 = vld [vmem:[%s332 + $0x50] sm:$0xff]
      %v353 = vld [vmem:[%s332 + $0x58] sm:$0xff]
      %v354 = vld [vmem:[%s332 + $0x60] sm:$0xff]
      %v355 = vld [vmem:[%s332 + $0x68] sm:$0xff]
      %v356 = vld [vmem:[%s332 + $0x70] sm:$0xff]
      %v357 = vld [vmem:[%s332 + $0x78] sm:$0xff]
      %v358 = vld [vmem:[%s332 + $0x80] sm:$0xff]
      %v359 = vld [vmem:[%s332 + $0x88] sm:$0xff]
      %v360 = vld [vmem:[%s332 + $0x90] sm:$0xff]
      %v361 = vld [vmem:[%s332 + $0x98] sm:$0xff]
      %v362 = vld [vmem:[%s332 + $0xa0] sm:$0xff]
      %v363 = vld [vmem:[%s332 + $0xa8] sm:$0xff]
      %v364 = vld [vmem:[%s332 + $0xb0] sm:$0xff]
      %v365 = vld [vmem:[%s332 + $0xb8] sm:$0xff]
      %v366 = vld [vmem:[%s332 + $0xc0] sm:$0xff]
      %v367 = vld [vmem:[%s332 + $0xc8] sm:$0xff]
      %v368 = vld [vmem:[%s332 + $0xd0] sm:$0xff]
      %v369 = vld [vmem:[%s332 + $0xd8] sm:$0xff]
      %v370 = vld [vmem:[%s332 + $0xe0] sm:$0xff]
      %v371 = vld [vmem:[%s332 + $0xe8] sm:$0xff]
      %v372 = vld [vmem:[%s332 + $0xf0] sm:$0xff]
      %v373 = vld [vmem:[%s332 + $0xf8] sm:$0xff]
      %v374 = vld [vmem:[%s332 + $0x100] sm:$0xff]
      %v375 = vld [vmem:[%s332 + $0x108] sm:$0xff]
      %v376 = vld [vmem:[%s332 + $0x110] sm:$0xff]
      %v377 = vld [vmem:[%s332 + $0x118] sm:$0xff]
      %v378 = vld [vmem:[%s332 + $0x120] sm:$0xff]
      %v379 = vld [vmem:[%s332 + $0x128] sm:$0xff]
      %v380 = vld [vmem:[%s332 + $0x130] sm:$0xff]
      %v381 = vld [vmem:[%s332 + $0x138] sm:$0xff]
      %v382 = vld [vmem:[%s332 + $0x140] sm:$0xff]
      %v383 = vld [vmem:[%s332 + $0x148] sm:$0xff]
      %v384 = vld [vmem:[%s332 + $0x150] sm:$0xff]
      %v385 = vld [vmem:[%s332 + $0x158] sm:$0xff]
      %v386 = vld [vmem:[%s332 + $0x160] sm:$0xff]
      %v387 = vld [vmem:[%s332 + $0x168] sm:$0xff]
      %v388 = vld [vmem:[%s332 + $0x170] sm:$0xff]
      %v389 = vld [vmem:[%s332 + $0x178] sm:$0xff]
      %v390 = vld [vmem:[%s332 + $0x180] sm:$0xff]
      %v391 = vld [vmem:[%s332 + $0x188] sm:$0xff]
      %v392 = vld [vmem:[%s332 + $0x190] sm:$0xff]
      %v393 = vld [vmem:[%s332 + $0x198] sm:$0xff]
      %v394 = vld [vmem:[%s332 + $0x1a0] sm:$0xff]
      %v395 = vld [vmem:[%s332 + $0x1a8] sm:$0xff]
      %v396 = vld [vmem:[%s332 + $0x1b0] sm:$0xff]
      %v397 = vld [vmem:[%s332 + $0x1b8] sm:$0xff]
      %v398 = vld [vmem:[%s332 + $0x1c0] sm:$0xff]
      %v399 = vld [vmem:[%s332 + $0x1c8] sm:$0xff]
      %v400 = vld [vmem:[%s332 + $0x1d0] sm:$0xff]
      %v401 = vld [vmem:[%s332 + $0x1d8] sm:$0xff]
      %v402 = vld [vmem:[%s332 + $0x1e0] sm:$0xff]
      %v403 = vld [vmem:[%s332 + $0x1e8] sm:$0xff]
      %v404 = vld [vmem:[%s332 + $0x1f0] sm:$0xff]
      %v405 = vld [vmem:[%s332 + $0x1f8] sm:$0xff]
      %v406 = vld [vmem:[%s332 + $0x200] sm:$0xff]
      %v407 = vld [vmem:[%s332 + $0x208] sm:$0xff]
      %v408 = vld [vmem:[%s332 + $0x210] sm:$0xff]
      %v409 = vld [vmem:[%s332 + $0x218] sm:$0xff]
      %v410 = vld [vmem:[%s332 + $0x220] sm:$0xff]
      %v411 = vld [vmem:[%s332 + $0x228] sm:$0xff]
      %v412 = vld [vmem:[%s332 + $0x230] sm:$0xff]
      %v413 = vld [vmem:[%s332 + $0x238] sm:$0xff]
      %v414 = vld [vmem:[%s332 + $0x240] sm:$0xff]
      %v415 = vld [vmem:[%s332 + $0x248] sm:$0xff]
      %v416 = vld [vmem:[%s332 + $0x250] sm:$0xff]
      %v417 = vld [vmem:[%s332 + $0x258] sm:$0xff]
      %v418 = vld [vmem:[%s332 + $0x260] sm:$0xff]
      %v419 = vld [vmem:[%s332 + $0x268] sm:$0xff]
      %v420 = vld [vmem:[%s332 + $0x270] sm:$0xff]
      %v421 = vld [vmem:[%s332 + $0x278] sm:$0xff]
      %v422 = vld [vmem:[%s332 + $0x280] sm:$0xff]
      %v423 = vld [vmem:[%s332 + $0x288] sm:$0xff]
      %v424 = vld [vmem:[%s332 + $0x290] sm:$0xff]
      %v425 = vld [vmem:[%s332 + $0x298] sm:$0xff]
      %v426 = vld [vmem:[%s332 + $0x2a0] sm:$0xff]
      %v427 = vld [vmem:[%s332 + $0x2a8] sm:$0xff]
      %v428 = vld [vmem:[%s332 + $0x2b0] sm:$0xff]
      %v429 = vld [vmem:[%s332 + $0x2b8] sm:$0xff]
      %v430 = vld [vmem:[%s332 + $0x2c0] sm:$0xff]
      %v431 = vld [vmem:[%s332 + $0x2c8] sm:$0xff]
      %v432 = vld [vmem:[%s332 + $0x2d0] sm:$0xff]
      %v433 = vld [vmem:[%s332 + $0x2d8] sm:$0xff]
      %v434 = vld [vmem:[%s332 + $0x2e0] sm:$0xff]
      %v435 = vld [vmem:[%s332 + $0x2e8] sm:$0xff]
      %v436 = vld [vmem:[%s332 + $0x2f0] sm:$0xff]
      %v437 = vld [vmem:[%s332 + $0x2f8] sm:$0xff]
      %v438 = vld [vmem:[%s332 + $0x300] sm:$0xff]
      %v439 = vld [vmem:[%s332 + $0x308] sm:$0xff]
      %v440 = vld [vmem:[%s332 + $0x310] sm:$0xff]
      %v441 = vld [vmem:[%s332 + $0x318] sm:$0xff]
      %v442 = vld [vmem:[%s332 + $0x320] sm:$0xff]
      %v443 = vld [vmem:[%s332 + $0x328] sm:$0xff]
      %v444 = vld [vmem:[%s332 + $0x330] sm:$0xff]
      %v445 = vld [vmem:[%s332 + $0x338] sm:$0xff]
      %v446 = vld [vmem:[%s332 + $0x340] sm:$0xff]
      %v447 = vld [vmem:[%s332 + $0x348] sm:$0xff]
      %v448 = vld [vmem:[%s332 + $0x350] sm:$0xff]
      %v449 = vld [vmem:[%s332 + $0x358] sm:$0xff]
      %v450 = vld [vmem:[%s332 + $0x360] sm:$0xff]
      %v451 = vld [vmem:[%s332 + $0x368] sm:$0xff]
      %v452 = vld [vmem:[%s332 + $0x370] sm:$0xff]
      %v453 = vld [vmem:[%s332 + $0x378] sm:$0xff]
      %v454 = vld [vmem:[%s332 + $0x380] sm:$0xff]
      %v455 = vld [vmem:[%s332 + $0x388] sm:$0xff]
      %v456 = vld [vmem:[%s332 + $0x390] sm:$0xff]
      %v457 = vld [vmem:[%s332 + $0x398] sm:$0xff]
      %v458 = vld [vmem:[%s332 + $0x3a0] sm:$0xff]
      %v459 = vld [vmem:[%s332 + $0x3a8] sm:$0xff]
      %v460 = vld [vmem:[%s332 + $0x3b0] sm:$0xff]
      %v461 = vld [vmem:[%s332 + $0x3b8] sm:$0xff]
      %v462 = vld [vmem:[%s332 + $0x3c0] sm:$0xff]
      %v463 = vld [vmem:[%s332 + $0x3c8] sm:$0xff]
      %v464 = vld [vmem:[%s332 + $0x3d0] sm:$0xff]
      %v465 = vld [vmem:[%s332 + $0x3d8] sm:$0xff]
      %v466 = vld [vmem:[%s332 + $0x3e0] sm:$0xff]
      %v467 = vld [vmem:[%s332 + $0x3e8] sm:$0xff]
      %v468 = vld [vmem:[%s332 + $0x3f0] sm:$0xff]
      %v469 = vld [vmem:[%s332 + $0x3f8] sm:$0xff]
      %v470 = vld [vmem:[%s332 + $0x400] sm:$0xff]
      %v471 = vld [vmem:[%s332 + $0x408] sm:$0xff]
      %v472 = vld [vmem:[%s332 + $0x410] sm:$0xff]
      %v473 = vld [vmem:[%s332 + $0x418] sm:$0xff]
      %v474 = vld [vmem:[%s332 + $0x420] sm:$0xff]
      %v475 = vld [vmem:[%s332 + $0x428] sm:$0xff]
      %v476 = vld [vmem:[%s332 + $0x430] sm:$0xff]
      %v477 = vld [vmem:[%s332 + $0x438] sm:$0xff]
      %v478 = vld [vmem:[%s332 + $0x440] sm:$0xff]
      %v479 = vld [vmem:[%s332 + $0x448] sm:$0xff]
      %v480 = vld [vmem:[%s332 + $0x450] sm:$0xff]
      %v481 = vld [vmem:[%s332 + $0x458] sm:$0xff]
      %v482 = vld [vmem:[%s332 + $0x460] sm:$0xff]
      %v483 = vld [vmem:[%s332 + $0x468] sm:$0xff]
      %v484 = vld [vmem:[%s332 + $0x470] sm:$0xff]
      %v485 = vld [vmem:[%s332 + $0x478] sm:$0xff]
      %v486 = vld [vmem:[%s332 + $0x480] sm:$0xff]
      %v487 = vld [vmem:[%s332 + $0x488] sm:$0xff]
      %v488 = vld [vmem:[%s332 + $0x490] sm:$0xff]
      %v489 = vld [vmem:[%s332 + $0x498] sm:$0xff]
      %v490 = vld [vmem:[%s332 + $0x4a0] sm:$0xff]
      %v491 = vld [vmem:[%s332 + $0x4a8] sm:$0xff]
      %v492 = vld [vmem:[%s332 + $0x4b0] sm:$0xff]
      %v493 = vld [vmem:[%s332 + $0x4b8] sm:$0xff]
      %v494 = vld [vmem:[%s332 + $0x4c0] sm:$0xff]
      %v495 = vld [vmem:[%s332 + $0x4c8] sm:$0xff]
      %v496 = vld [vmem:[%s332 + $0x4d0] sm:$0xff]
      %v497 = vld [vmem:[%s332 + $0x4d8] sm:$0xff]
      %v498 = vld [vmem:[%s332 + $0x4e0] sm:$0xff]
      %v499 = vld [vmem:[%s332 + $0x4e8] sm:$0xff]
      %v500 = vld [vmem:[%s332 + $0x4f0] sm:$0xff]
      %v501 = vld [vmem:[%s332 + $0x4f8] sm:$0xff]
      %v502 = vld [vmem:[%s332 + $0x500] sm:$0xff]
      %v503 = vld [vmem:[%s332 + $0x508] sm:$0xff]
      %v504 = vld [vmem:[%s332 + $0x510] sm:$0xff]
      %v505 = vld [vmem:[%s332 + $0x518] sm:$0xff]
      %v506 = vld [vmem:[%s332 + $0x520] sm:$0xff]
      %v507 = vld [vmem:[%s332 + $0x528] sm:$0xff]
      %v508 = vld [vmem:[%s332 + $0x530] sm:$0xff]
      %v509 = vld [vmem:[%s332 + $0x538] sm:$0xff]
      %v510 = vld [vmem:[%s332 + $0x540] sm:$0xff]
      %v511 = vld [vmem:[%s332 + $0x548] sm:$0xff]
      %v512 = vld [vmem:[%s332 + $0x550] sm:$0xff]
      %v513 = vld [vmem:[%s332 + $0x558] sm:$0xff]
      %v514 = vld [vmem:[%s332 + $0x560] sm:$0xff]
      %v515 = vld [vmem:[%s332 + $0x568] sm:$0xff]
      %v516 = vld [vmem:[%s332 + $0x570] sm:$0xff]
      %v517 = vld [vmem:[%s332 + $0x578] sm:$0xff]
      %v518 = vld [vmem:[%s332 + $0x580] sm:$0xff]
      %v519 = vld [vmem:[%s332 + $0x588] sm:$0xff]
      %v520 = vld [vmem:[%s332 + $0x590] sm:$0xff]
      %v521 = vld [vmem:[%s332 + $0x598] sm:$0xff]
      %v522 = vld [vmem:[%s332 + $0x5a0] sm:$0xff]
      %v523 = vld [vmem:[%s332 + $0x5a8] sm:$0xff]
      %v524 = vld [vmem:[%s332 + $0x5b0] sm:$0xff]
      %v525 = vld [vmem:[%s332 + $0x5b8] sm:$0xff]
      %v526 = vld [vmem:[%s332 + $0x5c0] sm:$0xff]
      %v527 = vld [vmem:[%s332 + $0x5c8] sm:$0xff]
      %v528 = vld [vmem:[%s332 + $0x5d0] sm:$0xff]
      %v529 = vld [vmem:[%s332 + $0x5d8] sm:$0xff]
      %v530 = vld [vmem:[%s332 + $0x5e0] sm:$0xff]
      %v531 = vld [vmem:[%s332 + $0x5e8] sm:$0xff]
      %v532 = vld [vmem:[%s332 + $0x5f0] sm:$0xff]
      %v533 = vld [vmem:[%s332 + $0x5f8] sm:$0xff]
      %v534 = vld [vmem:[%s332 + $0x600] sm:$0xff]
      %v535 = vld [vmem:[%s332 + $0x608] sm:$0xff]
      %v536 = vld [vmem:[%s332 + $0x610] sm:$0xff]
      %v537 = vld [vmem:[%s332 + $0x618] sm:$0xff]
      %v538 = vld [vmem:[%s332 + $0x620] sm:$0xff]
      %v539 = vld [vmem:[%s332 + $0x628] sm:$0xff]
      %v540 = vld [vmem:[%s332 + $0x630] sm:$0xff]
      %v541 = vld [vmem:[%s332 + $0x638] sm:$0xff]
      %v542 = vld [vmem:[%s332 + $0x640] sm:$0xff]
      %v543 = vld [vmem:[%s332 + $0x648] sm:$0xff]
      %v544 = vld [vmem:[%s332 + $0x650] sm:$0xff]
      %v545 = vld [vmem:[%s332 + $0x658] sm:$0xff]
      %v546 = vld [vmem:[%s332 + $0x660] sm:$0xff]
      %v547 = vld [vmem:[%s332 + $0x668] sm:$0xff]
      %v548 = vld [vmem:[%s332 + $0x670] sm:$0xff]
      %v549 = vld [vmem:[%s332 + $0x678] sm:$0xff]
      %v550 = vld [vmem:[%s332 + $0x680] sm:$0xff]
      %v551 = vld [vmem:[%s332 + $0x688] sm:$0xff]
      %v552 = vld [vmem:[%s332 + $0x690] sm:$0xff]
      %v553 = vld [vmem:[%s332 + $0x698] sm:$0xff]
      %v554 = vld [vmem:[%s332 + $0x6a0] sm:$0xff]
      %v555 = vld [vmem:[%s332 + $0x6a8] sm:$0xff]
      %v556 = vld [vmem:[%s332 + $0x6b0] sm:$0xff]
      %v557 = vld [vmem:[%s332 + $0x6b8] sm:$0xff]
      %v558 = vld [vmem:[%s332 + $0x6c0] sm:$0xff]
      %v559 = vld [vmem:[%s332 + $0x6c8] sm:$0xff]
      %v560 = vld [vmem:[%s332 + $0x6d0] sm:$0xff]
      %v561 = vld [vmem:[%s332 + $0x6d8] sm:$0xff]
      %v562 = vld [vmem:[%s332 + $0x6e0] sm:$0xff]
      %v563 = vld [vmem:[%s332 + $0x6e8] sm:$0xff]
      %v564 = vld [vmem:[%s332 + $0x6f0] sm:$0xff]
      %v565 = vld [vmem:[%s332 + $0x6f8] sm:$0xff]
      %v566 = vpack.c.bf16 %v356, %v342
      %v567 = vpack.c.bf16 %v357, %v343
      %v568 = vpack.c.bf16 %v358, %v344
      %v569 = vpack.c.bf16 %v359, %v345
      %v570 = vpack.c.bf16 %v360, %v346
      %v571 = vpack.c.bf16 %v361, %v347
      %v572 = vpack.c.bf16 %v362, %v348
      %v573 = vpack.c.bf16 %v363, %v349
      %v574 = vpack.c.bf16 %v364, %v350
      %v575 = vpack.c.bf16 %v365, %v351
      %v576 = vpack.c.bf16 %v366, %v352
      %v577 = vpack.c.bf16 %v367, %v353
      %v578 = vpack.c.bf16 %v368, %v354
      %v579 = vpack.c.bf16 %v369, %v355
      %v580 = vpack.c.bf16 %v384, %v370
      %v581 = vpack.c.bf16 %v385, %v371
      %v582 = vpack.c.bf16 %v386, %v372
      %v583 = vpack.c.bf16 %v387, %v373
      %v584 = vpack.c.bf16 %v388, %v374
      %v585 = vpack.c.bf16 %v389, %v375
      %v586 = vpack.c.bf16 %v390, %v376
      %v587 = vpack.c.bf16 %v391, %v377
      %v588 = vpack.c.bf16 %v392, %v378
      %v589 = vpack.c.bf16 %v393, %v379
      %v590 = vpack.c.bf16 %v394, %v380
      %v591 = vpack.c.bf16 %v395, %v381
      %v592 = vpack.c.bf16 %v396, %v382
      %v593 = vpack.c.bf16 %v397, %v383
      %v594 = vpack.c.bf16 %v412, %v398
      %v595 = vpack.c.bf16 %v413, %v399
      %v596 = vpack.c.bf16 %v414, %v400
      %v597 = vpack.c.bf16 %v415, %v401
      %v598 = vpack.c.bf16 %v416, %v402
      %v599 = vpack.c.bf16 %v417, %v403
      %v600 = vpack.c.bf16 %v418, %v404
      %v601 = vpack.c.bf16 %v419, %v405
      %v602 = vpack.c.bf16 %v420, %v406
      %v603 = vpack.c.bf16 %v421, %v407
      %v604 = vpack.c.bf16 %v422, %v408
      %v605 = vpack.c.bf16 %v423, %v409
      %v606 = vpack.c.bf16 %v424, %v410
      %v607 = vpack.c.bf16 %v425, %v411
      %v608 = vpack.c.bf16 %v440, %v426
      %v609 = vpack.c.bf16 %v441, %v427
      %v610 = vpack.c.bf16 %v442, %v428
      %v611 = vpack.c.bf16 %v443, %v429
      %v612 = vpack.c.bf16 %v444, %v430
      %v613 = vpack.c.bf16 %v445, %v431
      %v614 = vpack.c.bf16 %v446, %v432
      %v615 = vpack.c.bf16 %v447, %v433
      %v616 = vpack.c.bf16 %v448, %v434
      %v617 = vpack.c.bf16 %v449, %v435
      %v618 = vpack.c.bf16 %v450, %v436
      %v619 = vpack.c.bf16 %v451, %v437
      %v620 = vpack.c.bf16 %v452, %v438
      %v621 = vpack.c.bf16 %v453, %v439
      %v622 = vpack.c.bf16 %v468, %v454
      %v623 = vpack.c.bf16 %v469, %v455
      %v624 = vpack.c.bf16 %v470, %v456
      %v625 = vpack.c.bf16 %v471, %v457
      %v626 = vpack.c.bf16 %v472, %v458
      %v627 = vpack.c.bf16 %v473, %v459
      %v628 = vpack.c.bf16 %v474, %v460
      %v629 = vpack.c.bf16 %v475, %v461
      %v630 = vpack.c.bf16 %v476, %v462
      %v631 = vpack.c.bf16 %v477, %v463
      %v632 = vpack.c.bf16 %v478, %v464
      %v633 = vpack.c.bf16 %v479, %v465
      %v634 = vpack.c.bf16 %v480, %v466
      %v635 = vpack.c.bf16 %v481, %v467
      %v636 = vpack.c.bf16 %v496, %v482
      %v637 = vpack.c.bf16 %v497, %v483
      %v638 = vpack.c.bf16 %v498, %v484
      %v639 = vpack.c.bf16 %v499, %v485
      %v640 = vpack.c.bf16 %v500, %v486
      %v641 = vpack.c.bf16 %v501, %v487
      %v642 = vpack.c.bf16 %v502, %v488
      %v643 = vpack.c.bf16 %v503, %v489
      %v644 = vpack.c.bf16 %v504, %v490
      %v645 = vpack.c.bf16 %v505, %v491
      %v646 = vpack.c.bf16 %v506, %v492
      %v647 = vpack.c.bf16 %v507, %v493
      %v648 = vpack.c.bf16 %v508, %v494
      %v649 = vpack.c.bf16 %v509, %v495
      %v650 = vpack.c.bf16 %v524, %v510
      %v651 = vpack.c.bf16 %v525, %v511
      %v652 = vpack.c.bf16 %v526, %v512
      %v653 = vpack.c.bf16 %v527, %v513
      %v654 = vpack.c.bf16 %v528, %v514
      %v655 = vpack.c.bf16 %v529, %v515
      %v656 = vpack.c.bf16 %v530, %v516
      %v657 = vpack.c.bf16 %v531, %v517
      %v658 = vpack.c.bf16 %v532, %v518
      %v659 = vpack.c.bf16 %v533, %v519
      %v660 = vpack.c.bf16 %v534, %v520
      %v661 = vpack.c.bf16 %v535, %v521
      %v662 = vpack.c.bf16 %v536, %v522
      %v663 = vpack.c.bf16 %v537, %v523
      %v664 = vpack.c.bf16 %v552, %v538
      %v665 = vpack.c.bf16 %v553, %v539
      %v666 = vpack.c.bf16 %v554, %v540
      %v667 = vpack.c.bf16 %v555, %v541
      %v668 = vpack.c.bf16 %v556, %v542
      %v669 = vpack.c.bf16 %v557, %v543
      %v670 = vpack.c.bf16 %v558, %v544
      %v671 = vpack.c.bf16 %v559, %v545
      %v672 = vpack.c.bf16 %v560, %v546
      %v673 = vpack.c.bf16 %v561, %v547
      %v674 = vpack.c.bf16 %v562, %v548
      %v675 = vpack.c.bf16 %v563, %v549
      %v676 = vpack.c.bf16 %v564, %v550
      %v677 = vpack.c.bf16 %v565, %v551
      %v678 = vld [vmem:[%s1] sm:$0xf]
      %v679 = vld [vmem:[%s1 + $0x4] sm:$0xf]
      %v680 = vld [vmem:[%s1 + $0x8] sm:$0xf]
      %v681 = vld [vmem:[%s1 + $0xc] sm:$0xf]
      %v682 = vld [vmem:[%s1 + $0x10] sm:$0xf]
      %v683 = vld [vmem:[%s1 + $0x14] sm:$0xf]
      %v684 = vld [vmem:[%s1 + $0x18] sm:$0xf]
      %v685 = vld [vmem:[%s1 + $0x1c] sm:$0xf]
      %v686 = vld [vmem:[%s1 + $0x20] sm:$0xf]
      %v687 = vld [vmem:[%s1 + $0x24] sm:$0xf]
      %v688 = vld [vmem:[%s1 + $0x28] sm:$0xf]
      %v689 = vld [vmem:[%s1 + $0x2c] sm:$0xf]
      %v690 = vld [vmem:[%s1 + $0x30] sm:$0xf]
      %v691 = vld [vmem:[%s1 + $0x34] sm:$0xf]
      %v692 = vld [vmem:[%s1 + $0x38] sm:$0xf]
      %v693 = vld [vmem:[%s1 + $0x3c] sm:$0xf]
      %v694 = vld [vmem:[%s1 + $0x40] sm:$0xf]
      %v695 = vld [vmem:[%s1 + $0x44] sm:$0xf]
      %v696 = vld [vmem:[%s1 + $0x48] sm:$0xf]
      %v697 = vld [vmem:[%s1 + $0x4c] sm:$0xf]
      %v698 = vld [vmem:[%s1 + $0x50] sm:$0xf]
      %v699 = vld [vmem:[%s1 + $0x54] sm:$0xf]
      %v700 = vld [vmem:[%s1 + $0x58] sm:$0xf]
      %v701 = vld [vmem:[%s1 + $0x5c] sm:$0xf]
      %v702 = vld [vmem:[%s1 + $0x60] sm:$0xf]
      %v703 = vld [vmem:[%s1 + $0x64] sm:$0xf]
      %v704 = vld [vmem:[%s1 + $0x68] sm:$0xf]
      %v705 = vld [vmem:[%s1 + $0x6c] sm:$0xf]
      %v706 = vld [vmem:[%s1 + $0x70] sm:$0xf]
      %v707 = vld [vmem:[%s1 + $0x74] sm:$0xf]
      %v708 = vld [vmem:[%s1 + $0x78] sm:$0xf]
      %v709 = vld [vmem:[%s1 + $0x7c] sm:$0xf]
      %v710 = vld [vmem:[%s1 + $0x80] sm:$0xf]
      %v711 = vld [vmem:[%s1 + $0x84] sm:$0xf]
      %v712 = vld [vmem:[%s1 + $0x88] sm:$0xf]
      %v713 = vld [vmem:[%s1 + $0x8c] sm:$0xf]
      %v714 = vld [vmem:[%s1 + $0x90] sm:$0xf]
      %v715 = vld [vmem:[%s1 + $0x94] sm:$0xf]
      %v716 = vld [vmem:[%s1 + $0x98] sm:$0xf]
      %v717 = vld [vmem:[%s1 + $0x9c] sm:$0xf]
      %v718 = vld [vmem:[%s1 + $0xa0] sm:$0xf]
      %v719 = vld [vmem:[%s1 + $0xa4] sm:$0xf]
      %v720 = vld [vmem:[%s1 + $0xa8] sm:$0xf]
      %v721 = vld [vmem:[%s1 + $0xac] sm:$0xf]
      %v722 = vld [vmem:[%s1 + $0xb0] sm:$0xf]
      %v723 = vld [vmem:[%s1 + $0xb4] sm:$0xf]
      %v724 = vld [vmem:[%s1 + $0xb8] sm:$0xf]
      %v725 = vld [vmem:[%s1 + $0xbc] sm:$0xf]
      %v726 = vld [vmem:[%s1 + $0xc0] sm:$0xf]
      %v727 = vld [vmem:[%s1 + $0xc4] sm:$0xf]
      %v728 = vld [vmem:[%s1 + $0xc8] sm:$0xf]
      %v729 = vld [vmem:[%s1 + $0xcc] sm:$0xf]
      %v730 = vld [vmem:[%s1 + $0xd0] sm:$0xf]
      %v731 = vld [vmem:[%s1 + $0xd4] sm:$0xf]
      %v732 = vld [vmem:[%s1 + $0xd8] sm:$0xf]
      %v733 = vld [vmem:[%s1 + $0xdc] sm:$0xf]
      %v734 = vld [vmem:[%s1 + $0xe0] sm:$0xf]
      %v735 = vld [vmem:[%s1 + $0xe4] sm:$0xf]
      %v736 = vld [vmem:[%s1 + $0xe8] sm:$0xf]
      %v737 = vld [vmem:[%s1 + $0xec] sm:$0xf]
      %v738 = vld [vmem:[%s1 + $0xf0] sm:$0xf]
      %v739 = vld [vmem:[%s1 + $0xf4] sm:$0xf]
      %v740 = vld [vmem:[%s1 + $0xf8] sm:$0xf]
      %v741 = vld [vmem:[%s1 + $0xfc] sm:$0xf]
      %v742 = vld [vmem:[%s1 + $0x100] sm:$0xf]
      %v743 = vld [vmem:[%s1 + $0x104] sm:$0xf]
      %v744 = vld [vmem:[%s1 + $0x108] sm:$0xf]
      %v745 = vld [vmem:[%s1 + $0x10c] sm:$0xf]
      %v746 = vld [vmem:[%s1 + $0x110] sm:$0xf]
      %v747 = vld [vmem:[%s1 + $0x114] sm:$0xf]
      %v748 = vld [vmem:[%s1 + $0x118] sm:$0xf]
      %v749 = vld [vmem:[%s1 + $0x11c] sm:$0xf]
      %v750 = vld [vmem:[%s1 + $0x120] sm:$0xf]
      %v751 = vld [vmem:[%s1 + $0x124] sm:$0xf]
      %v752 = vld [vmem:[%s1 + $0x128] sm:$0xf]
      %v753 = vld [vmem:[%s1 + $0x12c] sm:$0xf]
      %v754 = vld [vmem:[%s1 + $0x130] sm:$0xf]
      %v755 = vld [vmem:[%s1 + $0x134] sm:$0xf]
      %v756 = vld [vmem:[%s1 + $0x138] sm:$0xf]
      %v757 = vld [vmem:[%s1 + $0x13c] sm:$0xf]
      %v758 = vld [vmem:[%s1 + $0x140] sm:$0xf]
      %v759 = vld [vmem:[%s1 + $0x144] sm:$0xf]
      %v760 = vld [vmem:[%s1 + $0x148] sm:$0xf]
      %v761 = vld [vmem:[%s1 + $0x14c] sm:$0xf]
      %v762 = vld [vmem:[%s1 + $0x150] sm:$0xf]
      %v763 = vld [vmem:[%s1 + $0x154] sm:$0xf]
      %v764 = vld [vmem:[%s1 + $0x158] sm:$0xf]
      %v765 = vld [vmem:[%s1 + $0x15c] sm:$0xf]
      %v766 = vld [vmem:[%s1 + $0x160] sm:$0xf]
      %v767 = vld [vmem:[%s1 + $0x164] sm:$0xf]
      %v768 = vld [vmem:[%s1 + $0x168] sm:$0xf]
      %v769 = vld [vmem:[%s1 + $0x16c] sm:$0xf]
      %v770 = vld [vmem:[%s1 + $0x170] sm:$0xf]
      %v771 = vld [vmem:[%s1 + $0x174] sm:$0xf]
      %v772 = vld [vmem:[%s1 + $0x178] sm:$0xf]
      %v773 = vld [vmem:[%s1 + $0x17c] sm:$0xf]
      %v774 = vld [vmem:[%s1 + $0x180] sm:$0xf]
      %v775 = vld [vmem:[%s1 + $0x184] sm:$0xf]
      %v776 = vld [vmem:[%s1 + $0x188] sm:$0xf]
      %v777 = vld [vmem:[%s1 + $0x18c] sm:$0xf]
      %v778 = vld [vmem:[%s1 + $0x190] sm:$0xf]
      %v779 = vld [vmem:[%s1 + $0x194] sm:$0xf]
      %v780 = vld [vmem:[%s1 + $0x198] sm:$0xf]
      %v781 = vld [vmem:[%s1 + $0x19c] sm:$0xf]
      %v782 = vld [vmem:[%s1 + $0x1a0] sm:$0xf]
      %v783 = vld [vmem:[%s1 + $0x1a4] sm:$0xf]
      %v784 = vld [vmem:[%s1 + $0x1a8] sm:$0xf]
      %v785 = vld [vmem:[%s1 + $0x1ac] sm:$0xf]
      %v786 = vld [vmem:[%s1 + $0x1b0] sm:$0xf]
      %v787 = vld [vmem:[%s1 + $0x1b4] sm:$0xf]
      %v788 = vld [vmem:[%s1 + $0x1b8] sm:$0xf]
      %v789 = vld [vmem:[%s1 + $0x1bc] sm:$0xf]
      %v790 = vld [vmem:[%s1 + $0x1c0] sm:$0xf]
      %v791 = vld [vmem:[%s1 + $0x1c4] sm:$0xf]
      %v792 = vld [vmem:[%s1 + $0x1c8] sm:$0xf]
      %v793 = vld [vmem:[%s1 + $0x1cc] sm:$0xf]
      %v794 = vld [vmem:[%s1 + $0x1d0] sm:$0xf]
      %v795 = vld [vmem:[%s1 + $0x1d4] sm:$0xf]
      %v796 = vld [vmem:[%s1 + $0x1d8] sm:$0xf]
      %v797 = vld [vmem:[%s1 + $0x1dc] sm:$0xf]
      %v798 = vld [vmem:[%s1 + $0x1e0] sm:$0xf]
      %v799 = vld [vmem:[%s1 + $0x1e4] sm:$0xf]
      %v800 = vld [vmem:[%s1 + $0x1e8] sm:$0xf]
      %v801 = vld [vmem:[%s1 + $0x1ec] sm:$0xf]
      %v802 = vld [vmem:[%s1 + $0x1f0] sm:$0xf]
      %v803 = vld [vmem:[%s1 + $0x1f4] sm:$0xf]
      %v804 = vld [vmem:[%s1 + $0x1f8] sm:$0xf]
      %v805 = vld [vmem:[%s1 + $0x1fc] sm:$0xf]
      %v806 = vld [vmem:[%s1 + $0x200] sm:$0xf]
      %v807 = vld [vmem:[%s1 + $0x204] sm:$0xf]
      %v808 = vld [vmem:[%s1 + $0x208] sm:$0xf]
      %v809 = vld [vmem:[%s1 + $0x20c] sm:$0xf]
      %v810 = vld [vmem:[%s1 + $0x210] sm:$0xf]
      %v811 = vld [vmem:[%s1 + $0x214] sm:$0xf]
      %v812 = vld [vmem:[%s1 + $0x218] sm:$0xf]
      %v813 = vld [vmem:[%s1 + $0x21c] sm:$0xf]
      %v814 = vld [vmem:[%s1 + $0x220] sm:$0xf]
      %v815 = vld [vmem:[%s1 + $0x224] sm:$0xf]
      %v816 = vld [vmem:[%s1 + $0x228] sm:$0xf]
      %v817 = vld [vmem:[%s1 + $0x22c] sm:$0xf]
      %v818 = vld [vmem:[%s1 + $0x230] sm:$0xf]
      %v819 = vld [vmem:[%s1 + $0x234] sm:$0xf]
      %v820 = vld [vmem:[%s1 + $0x238] sm:$0xf]
      %v821 = vld [vmem:[%s1 + $0x23c] sm:$0xf]
      %v822 = vld [vmem:[%s1 + $0x240] sm:$0xf]
      %v823 = vld [vmem:[%s1 + $0x244] sm:$0xf]
      %v824 = vld [vmem:[%s1 + $0x248] sm:$0xf]
      %v825 = vld [vmem:[%s1 + $0x24c] sm:$0xf]
      %v826 = vld [vmem:[%s1 + $0x250] sm:$0xf]
      %v827 = vld [vmem:[%s1 + $0x254] sm:$0xf]
      %v828 = vld [vmem:[%s1 + $0x258] sm:$0xf]
      %v829 = vld [vmem:[%s1 + $0x25c] sm:$0xf]
      %v830 = vld [vmem:[%s1 + $0x260] sm:$0xf]
      %v831 = vld [vmem:[%s1 + $0x264] sm:$0xf]
      %v832 = vld [vmem:[%s1 + $0x268] sm:$0xf]
      %v833 = vld [vmem:[%s1 + $0x26c] sm:$0xf]
      %v834 = vld [vmem:[%s1 + $0x270] sm:$0xf]
      %v835 = vld [vmem:[%s1 + $0x274] sm:$0xf]
      %v836 = vld [vmem:[%s1 + $0x278] sm:$0xf]
      %v837 = vld [vmem:[%s1 + $0x27c] sm:$0xf]
      %v838 = vld [vmem:[%s1 + $0x280] sm:$0xf]
      %v839 = vld [vmem:[%s1 + $0x284] sm:$0xf]
      %v840 = vld [vmem:[%s1 + $0x288] sm:$0xf]
      %v841 = vld [vmem:[%s1 + $0x28c] sm:$0xf]
      %v842 = vld [vmem:[%s1 + $0x290] sm:$0xf]
      %v843 = vld [vmem:[%s1 + $0x294] sm:$0xf]
      %v844 = vld [vmem:[%s1 + $0x298] sm:$0xf]
      %v845 = vld [vmem:[%s1 + $0x29c] sm:$0xf]
      %v846 = vld [vmem:[%s1 + $0x2a0] sm:$0xf]
      %v847 = vld [vmem:[%s1 + $0x2a4] sm:$0xf]
      %v848 = vld [vmem:[%s1 + $0x2a8] sm:$0xf]
      %v849 = vld [vmem:[%s1 + $0x2ac] sm:$0xf]
      %v850 = vld [vmem:[%s1 + $0x2b0] sm:$0xf]
      %v851 = vld [vmem:[%s1 + $0x2b4] sm:$0xf]
      %v852 = vld [vmem:[%s1 + $0x2b8] sm:$0xf]
      %v853 = vld [vmem:[%s1 + $0x2bc] sm:$0xf]
      %v854 = vld [vmem:[%s1 + $0x2c0] sm:$0xf]
      %v855 = vld [vmem:[%s1 + $0x2c4] sm:$0xf]
      %v856 = vld [vmem:[%s1 + $0x2c8] sm:$0xf]
      %v857 = vld [vmem:[%s1 + $0x2cc] sm:$0xf]
      %v858 = vld [vmem:[%s1 + $0x2d0] sm:$0xf]
      %v859 = vld [vmem:[%s1 + $0x2d4] sm:$0xf]
      %v860 = vld [vmem:[%s1 + $0x2d8] sm:$0xf]
      %v861 = vld [vmem:[%s1 + $0x2dc] sm:$0xf]
      %v862 = vld [vmem:[%s1 + $0x2e0] sm:$0xf]
      %v863 = vld [vmem:[%s1 + $0x2e4] sm:$0xf]
      %v864 = vld [vmem:[%s1 + $0x2e8] sm:$0xf]
      %v865 = vld [vmem:[%s1 + $0x2ec] sm:$0xf]
      %v866 = vld [vmem:[%s1 + $0x2f0] sm:$0xf]
      %v867 = vld [vmem:[%s1 + $0x2f4] sm:$0xf]
      %v868 = vld [vmem:[%s1 + $0x2f8] sm:$0xf]
      %v869 = vld [vmem:[%s1 + $0x2fc] sm:$0xf]
      %v870 = vld [vmem:[%s1 + $0x300] sm:$0xf]
      %v871 = vld [vmem:[%s1 + $0x304] sm:$0xf]
      %v872 = vld [vmem:[%s1 + $0x308] sm:$0xf]
      %v873 = vld [vmem:[%s1 + $0x30c] sm:$0xf]
      %v874 = vld [vmem:[%s1 + $0x310] sm:$0xf]
      %v875 = vld [vmem:[%s1 + $0x314] sm:$0xf]
      %v876 = vld [vmem:[%s1 + $0x318] sm:$0xf]
      %v877 = vld [vmem:[%s1 + $0x31c] sm:$0xf]
      %v878 = vld [vmem:[%s1 + $0x320] sm:$0xf]
      %v879 = vld [vmem:[%s1 + $0x324] sm:$0xf]
      %v880 = vld [vmem:[%s1 + $0x328] sm:$0xf]
      %v881 = vld [vmem:[%s1 + $0x32c] sm:$0xf]
      %v882 = vld [vmem:[%s1 + $0x330] sm:$0xf]
      %v883 = vld [vmem:[%s1 + $0x334] sm:$0xf]
      %v884 = vld [vmem:[%s1 + $0x338] sm:$0xf]
      %v885 = vld [vmem:[%s1 + $0x33c] sm:$0xf]
      %v886 = vld [vmem:[%s1 + $0x340] sm:$0xf]
      %v887 = vld [vmem:[%s1 + $0x344] sm:$0xf]
      %v888 = vld [vmem:[%s1 + $0x348] sm:$0x1]
      %v889 = vld [vmem:[%s2] sm:$0x1]
      %v891 = vperm.slane %v889, 0
      %v1104 = vunpack.c.l.b16 %v678
      %v1105 = vunpack.c.l.b16 %v679
      %v1106 = vunpack.c.l.b16 %v680
      %v1107 = vunpack.c.l.b16 %v681
      %v1108 = vunpack.c.l.b16 %v682
      %v1109 = vunpack.c.l.b16 %v683
      %v1110 = vunpack.c.l.b16 %v684
      %v1111 = vunpack.c.l.b16 %v685
      %v1112 = vunpack.c.l.b16 %v686
      %v1113 = vunpack.c.l.b16 %v687
      %v1114 = vunpack.c.l.b16 %v688
      %v1115 = vunpack.c.l.b16 %v689
      %v1116 = vunpack.c.l.b16 %v690
      %v1117 = vunpack.c.l.b16 %v691
      %v1118 = vunpack.c.l.b16 %v692
      %v1119 = vunpack.c.l.b16 %v693
      %v1120 = vunpack.c.l.b16 %v694
      %v1121 = vunpack.c.l.b16 %v695
      %v1122 = vunpack.c.l.b16 %v696
      %v1123 = vunpack.c.l.b16 %v697
      %v1124 = vunpack.c.l.b16 %v698
      %v1125 = vunpack.c.l.b16 %v699
      %v1126 = vunpack.c.l.b16 %v700
      %v1127 = vunpack.c.l.b16 %v701
      %v1128 = vunpack.c.l.b16 %v702
      %v1129 = vunpack.c.l.b16 %v703
      %v1130 = vunpack.c.l.b16 %v704
      %v1131 = vunpack.c.l.b16 %v705
      %v1132 = vunpack.c.l.b16 %v706
      %v1133 = vunpack.c.l.b16 %v707
      %v1134 = vunpack.c.l.b16 %v708
      %v1135 = vunpack.c.l.b16 %v709
      %v1136 = vunpack.c.l.b16 %v710
      %v1137 = vunpack.c.l.b16 %v711
      %v1138 = vunpack.c.l.b16 %v712
      %v1139 = vunpack.c.l.b16 %v713
      %v1140 = vunpack.c.l.b16 %v714
      %v1141 = vunpack.c.l.b16 %v715
      %v1142 = vunpack.c.l.b16 %v716
      %v1143 = vunpack.c.l.b16 %v717
      %v1144 = vunpack.c.l.b16 %v718
      %v1145 = vunpack.c.l.b16 %v719
      %v1146 = vunpack.c.l.b16 %v720
      %v1147 = vunpack.c.l.b16 %v721
      %v1148 = vunpack.c.l.b16 %v722
      %v1149 = vunpack.c.l.b16 %v723
      %v1150 = vunpack.c.l.b16 %v724
      %v1151 = vunpack.c.l.b16 %v725
      %v1152 = vunpack.c.l.b16 %v726
      %v1153 = vunpack.c.l.b16 %v727
      %v1154 = vunpack.c.l.b16 %v728
      %v1155 = vunpack.c.l.b16 %v729
      %v1156 = vunpack.c.l.b16 %v730
      %v1157 = vunpack.c.l.b16 %v731
      %v1158 = vunpack.c.l.b16 %v732
      %v1159 = vunpack.c.l.b16 %v733
      %v1160 = vunpack.c.l.b16 %v734
      %v1161 = vunpack.c.l.b16 %v735
      %v1162 = vunpack.c.l.b16 %v736
      %v1163 = vunpack.c.l.b16 %v737
      %v1164 = vunpack.c.l.b16 %v738
      %v1165 = vunpack.c.l.b16 %v739
      %v1166 = vunpack.c.l.b16 %v740
      %v1167 = vunpack.c.l.b16 %v741
      %v1168 = vunpack.c.l.b16 %v742
      %v1169 = vunpack.c.l.b16 %v743
      %v1170 = vunpack.c.l.b16 %v744
      %v1171 = vunpack.c.l.b16 %v745
      %v1172 = vunpack.c.l.b16 %v746
      %v1173 = vunpack.c.l.b16 %v747
      %v1174 = vunpack.c.l.b16 %v748
      %v1175 = vunpack.c.l.b16 %v749
      %v1176 = vunpack.c.l.b16 %v750
      %v1177 = vunpack.c.l.b16 %v751
      %v1178 = vunpack.c.l.b16 %v752
      %v1179 = vunpack.c.l.b16 %v753
      %v1180 = vunpack.c.l.b16 %v754
      %v1181 = vunpack.c.l.b16 %v755
      %v1182 = vunpack.c.l.b16 %v756
      %v1183 = vunpack.c.l.b16 %v757
      %v1184 = vunpack.c.l.b16 %v758
      %v1185 = vunpack.c.l.b16 %v759
      %v1186 = vunpack.c.l.b16 %v760
      %v1187 = vunpack.c.l.b16 %v761
      %v1188 = vunpack.c.l.b16 %v762
      %v1189 = vunpack.c.l.b16 %v763
      %v1190 = vunpack.c.l.b16 %v764
      %v1191 = vunpack.c.l.b16 %v765
      %v1192 = vunpack.c.l.b16 %v766
      %v1193 = vunpack.c.l.b16 %v767
      %v1194 = vunpack.c.l.b16 %v768
      %v1195 = vunpack.c.l.b16 %v769
      %v1196 = vunpack.c.l.b16 %v770
      %v1197 = vunpack.c.l.b16 %v771
      %v1198 = vunpack.c.l.b16 %v772
      %v1199 = vunpack.c.l.b16 %v773
      %v1200 = vunpack.c.l.b16 %v774
      %v1201 = vunpack.c.l.b16 %v775
      %v1202 = vunpack.c.l.b16 %v776
      %v1203 = vunpack.c.l.b16 %v777
      %v1204 = vunpack.c.l.b16 %v778
      %v1205 = vunpack.c.l.b16 %v779
      %v1206 = vunpack.c.l.b16 %v780
      %v1207 = vunpack.c.l.b16 %v781
      %v1208 = vunpack.c.l.b16 %v782
      %v1209 = vunpack.c.l.b16 %v783
      %v1210 = vunpack.c.l.b16 %v784
      %v1211 = vunpack.c.l.b16 %v785
      %v1212 = vunpack.c.l.b16 %v786
      %v1213 = vunpack.c.l.b16 %v787
      %v1214 = vunpack.c.l.b16 %v788
      %v1215 = vunpack.c.l.b16 %v789
      %v1216 = vunpack.c.l.b16 %v790
      %v1217 = vunpack.c.l.b16 %v791
      %v1218 = vunpack.c.l.b16 %v792
      %v1219 = vunpack.c.l.b16 %v793
      %v1220 = vunpack.c.l.b16 %v794
      %v1221 = vunpack.c.l.b16 %v795
      %v1222 = vunpack.c.l.b16 %v796
      %v1223 = vunpack.c.l.b16 %v797
      %v1224 = vunpack.c.l.b16 %v798
      %v1225 = vunpack.c.l.b16 %v799
      %v1226 = vunpack.c.l.b16 %v800
      %v1227 = vunpack.c.l.b16 %v801
      %v1228 = vunpack.c.l.b16 %v802
      %v1229 = vunpack.c.l.b16 %v803
      %v1230 = vunpack.c.l.b16 %v804
      %v1231 = vunpack.c.l.b16 %v805
      %v1232 = vunpack.c.l.b16 %v806
      %v1233 = vunpack.c.l.b16 %v807
      %v1234 = vunpack.c.l.b16 %v808
      %v1235 = vunpack.c.l.b16 %v809
      %v1236 = vunpack.c.l.b16 %v810
      %v1237 = vunpack.c.l.b16 %v811
      %v1238 = vunpack.c.l.b16 %v812
      %v1239 = vunpack.c.l.b16 %v813
      %v1240 = vunpack.c.l.b16 %v814
      %v1241 = vunpack.c.l.b16 %v815
      %v1242 = vunpack.c.l.b16 %v816
      %v1243 = vunpack.c.l.b16 %v817
      %v1244 = vunpack.c.l.b16 %v818
      %v1245 = vunpack.c.l.b16 %v819
      %v1246 = vunpack.c.l.b16 %v820
      %v1247 = vunpack.c.l.b16 %v821
      %v1248 = vunpack.c.l.b16 %v822
      %v1249 = vunpack.c.l.b16 %v823
      %v1250 = vunpack.c.l.b16 %v824
      %v1251 = vunpack.c.l.b16 %v825
      %v1252 = vunpack.c.l.b16 %v826
      %v1253 = vunpack.c.l.b16 %v827
      %v1254 = vunpack.c.l.b16 %v828
      %v1255 = vunpack.c.l.b16 %v829
      %v1256 = vunpack.c.l.b16 %v830
      %v1257 = vunpack.c.l.b16 %v831
      %v1258 = vunpack.c.l.b16 %v832
      %v1259 = vunpack.c.l.b16 %v833
      %v1260 = vunpack.c.l.b16 %v834
      %v1261 = vunpack.c.l.b16 %v835
      %v1262 = vunpack.c.l.b16 %v836
      %v1263 = vunpack.c.l.b16 %v837
      %v1264 = vunpack.c.l.b16 %v838
      %v1265 = vunpack.c.l.b16 %v839
      %v1266 = vunpack.c.l.b16 %v840
      %v1267 = vunpack.c.l.b16 %v841
      %v1268 = vunpack.c.l.b16 %v842
      %v1269 = vunpack.c.l.b16 %v843
      %v1270 = vunpack.c.l.b16 %v844
      %v1271 = vunpack.c.l.b16 %v845
      %v1272 = vunpack.c.l.b16 %v846
      %v1273 = vunpack.c.l.b16 %v847
      %v1274 = vunpack.c.l.b16 %v848
      %v1275 = vunpack.c.l.b16 %v849
      %v1276 = vunpack.c.l.b16 %v850
      %v1277 = vunpack.c.l.b16 %v851
      %v1278 = vunpack.c.l.b16 %v852
      %v1279 = vunpack.c.l.b16 %v853
      %v1280 = vunpack.c.l.b16 %v854
      %v1281 = vunpack.c.l.b16 %v855
      %v1282 = vunpack.c.l.b16 %v856
      %v1283 = vunpack.c.l.b16 %v857
      %v1284 = vunpack.c.l.b16 %v858
      %v1285 = vunpack.c.l.b16 %v859
      %v1286 = vunpack.c.l.b16 %v860
      %v1287 = vunpack.c.l.b16 %v861
      %v1288 = vunpack.c.l.b16 %v862
      %v1289 = vunpack.c.l.b16 %v863
      %v1290 = vunpack.c.l.b16 %v864
      %v1291 = vunpack.c.l.b16 %v865
      %v1292 = vunpack.c.l.b16 %v866
      %v1293 = vunpack.c.l.b16 %v867
      %v1294 = vunpack.c.l.b16 %v868
      %v1295 = vunpack.c.l.b16 %v869
      %v1296 = vunpack.c.l.b16 %v870
      %v1297 = vunpack.c.l.b16 %v871
      %v1298 = vunpack.c.l.b16 %v872
      %v1299 = vunpack.c.l.b16 %v873
      %v1300 = vunpack.c.l.b16 %v874
      %v1301 = vunpack.c.l.b16 %v875
      %v1302 = vunpack.c.l.b16 %v876
      %v1303 = vunpack.c.l.b16 %v877
      %v1304 = vunpack.c.l.b16 %v878
      %v1305 = vunpack.c.l.b16 %v879
      %v1306 = vunpack.c.l.b16 %v880
      %v1307 = vunpack.c.l.b16 %v881
      %v1308 = vunpack.c.l.b16 %v882
      %v1309 = vunpack.c.l.b16 %v883
      %v1310 = vunpack.c.l.b16 %v884
      %v1311 = vunpack.c.l.b16 %v885
      %v1312 = vunpack.c.l.b16 %v886
      %v1313 = vunpack.c.l.b16 %v887
      %v1314 = vunpack.c.l.b16 %v888
      %v1315 = vpack.c.b16 %v1105, %v1104
      %v1316 = vpack.c.b16 %v1107, %v1106
      %v1317 = vpack.c.b16 %v1109, %v1108
      %v1318 = vpack.c.b16 %v1111, %v1110
      %v1319 = vpack.c.b16 %v1113, %v1112
      %v1320 = vpack.c.b16 %v1115, %v1114
      %v1321 = vpack.c.b16 %v1117, %v1116
      %v1322 = vpack.c.b16 %v1119, %v1118
      %v1323 = vpack.c.b16 %v1121, %v1120
      %v1324 = vpack.c.b16 %v1123, %v1122
      %v1325 = vpack.c.b16 %v1125, %v1124
      %v1326 = vpack.c.b16 %v1127, %v1126
      %v1327 = vpack.c.b16 %v1129, %v1128
      %v1328 = vpack.c.b16 %v1131, %v1130
      %v1329 = vpack.c.b16 %v1133, %v1132
      %v1330 = vpack.c.b16 %v1135, %v1134
      %v1331 = vpack.c.b16 %v1137, %v1136
      %v1332 = vpack.c.b16 %v1139, %v1138
      %v1333 = vpack.c.b16 %v1141, %v1140
      %v1334 = vpack.c.b16 %v1143, %v1142
      %v1335 = vpack.c.b16 %v1145, %v1144
      %v1336 = vpack.c.b16 %v1147, %v1146
      %v1337 = vpack.c.b16 %v1149, %v1148
      %v1338 = vpack.c.b16 %v1151, %v1150
      %v1339 = vpack.c.b16 %v1153, %v1152
      %v1340 = vpack.c.b16 %v1155, %v1154
      %v1341 = vpack.c.b16 %v1157, %v1156
      %v1342 = vpack.c.b16 %v1159, %v1158
      %v1343 = vpack.c.b16 %v1161, %v1160
      %v1344 = vpack.c.b16 %v1163, %v1162
      %v1345 = vpack.c.b16 %v1165, %v1164
      %v1346 = vpack.c.b16 %v1167, %v1166
      %v1347 = vpack.c.b16 %v1169, %v1168
      %v1348 = vpack.c.b16 %v1171, %v1170
      %v1349 = vpack.c.b16 %v1173, %v1172
      %v1350 = vpack.c.b16 %v1175, %v1174
      %v1351 = vpack.c.b16 %v1177, %v1176
      %v1352 = vpack.c.b16 %v1179, %v1178
      %v1353 = vpack.c.b16 %v1181, %v1180
      %v1354 = vpack.c.b16 %v1183, %v1182
      %v1355 = vpack.c.b16 %v1185, %v1184
      %v1356 = vpack.c.b16 %v1187, %v1186
      %v1357 = vpack.c.b16 %v1189, %v1188
      %v1358 = vpack.c.b16 %v1191, %v1190
      %v1359 = vpack.c.b16 %v1193, %v1192
      %v1360 = vpack.c.b16 %v1195, %v1194
      %v1361 = vpack.c.b16 %v1197, %v1196
      %v1362 = vpack.c.b16 %v1199, %v1198
      %v1363 = vpack.c.b16 %v1201, %v1200
      %v1364 = vpack.c.b16 %v1203, %v1202
      %v1365 = vpack.c.b16 %v1205, %v1204
      %v1366 = vpack.c.b16 %v1207, %v1206
      %v1367 = vpack.c.b16 %v1209, %v1208
      %v1368 = vpack.c.b16 %v1211, %v1210
      %v1369 = vpack.c.b16 %v1213, %v1212
      %v1370 = vpack.c.b16 %v1215, %v1214
      %v1371 = vpack.c.b16 %v1217, %v1216
      %v1372 = vpack.c.b16 %v1219, %v1218
      %v1373 = vpack.c.b16 %v1221, %v1220
      %v1374 = vpack.c.b16 %v1223, %v1222
      %v1375 = vpack.c.b16 %v1225, %v1224
      %v1376 = vpack.c.b16 %v1227, %v1226
      %v1377 = vpack.c.b16 %v1229, %v1228
      %v1378 = vpack.c.b16 %v1231, %v1230
      %v1379 = vpack.c.b16 %v1233, %v1232
      %v1380 = vpack.c.b16 %v1235, %v1234
      %v1381 = vpack.c.b16 %v1237, %v1236
      %v1382 = vpack.c.b16 %v1239, %v1238
      %v1383 = vpack.c.b16 %v1241, %v1240
      %v1384 = vpack.c.b16 %v1243, %v1242
      %v1385 = vpack.c.b16 %v1245, %v1244
      %v1386 = vpack.c.b16 %v1247, %v1246
      %v1387 = vpack.c.b16 %v1249, %v1248
      %v1388 = vpack.c.b16 %v1251, %v1250
      %v1389 = vpack.c.b16 %v1253, %v1252
      %v1390 = vpack.c.b16 %v1255, %v1254
      %v1391 = vpack.c.b16 %v1257, %v1256
      %v1392 = vpack.c.b16 %v1259, %v1258
      %v1393 = vpack.c.b16 %v1261, %v1260
      %v1394 = vpack.c.b16 %v1263, %v1262
      %v1395 = vpack.c.b16 %v1265, %v1264
      %v1396 = vpack.c.b16 %v1267, %v1266
      %v1397 = vpack.c.b16 %v1269, %v1268
      %v1398 = vpack.c.b16 %v1271, %v1270
      %v1399 = vpack.c.b16 %v1273, %v1272
      %v1400 = vpack.c.b16 %v1275, %v1274
      %v1401 = vpack.c.b16 %v1277, %v1276
      %v1402 = vpack.c.b16 %v1279, %v1278
      %v1403 = vpack.c.b16 %v1281, %v1280
      %v1404 = vpack.c.b16 %v1283, %v1282
      %v1405 = vpack.c.b16 %v1285, %v1284
      %v1406 = vpack.c.b16 %v1287, %v1286
      %v1407 = vpack.c.b16 %v1289, %v1288
      %v1408 = vpack.c.b16 %v1291, %v1290
      %v1409 = vpack.c.b16 %v1293, %v1292
      %v1410 = vpack.c.b16 %v1295, %v1294
      %v1411 = vpack.c.b16 %v1297, %v1296
      %v1412 = vpack.c.b16 %v1299, %v1298
      %v1413 = vpack.c.b16 %v1301, %v1300
      %v1414 = vpack.c.b16 %v1303, %v1302
      %v1415 = vpack.c.b16 %v1305, %v1304
      %v1416 = vpack.c.b16 %v1307, %v1306
      %v1417 = vpack.c.b16 %v1309, %v1308
      %v1418 = vpack.c.b16 %v1311, %v1310
      %v1419 = vpack.c.b16 %v1313, %v1312
      %v1420 = vpack.c.b16 %v1314, %v1314
      %vm1526 = vcmask 146432
      %v1528 = vsel %vm1526, %v579, 0
      %v1531 = vsel %vm1526, %v593, 0
      %v1534 = vsel %vm1526, %v607, 0
      %v1537 = vsel %vm1526, %v621, 0
      %v1540 = vsel %vm1526, %v635, 0
      %v1543 = vsel %vm1526, %v649, 0
      %v1546 = vsel %vm1526, %v663, 0
      %v1549 = vsel %vm1526, %v677, 0
      %vm1551 = vcmask 1040384
      %v1553 = vsel %vm1551, %v1420, 0
      %1555 = vmatpush.bf16.msra.mxu0 %v1322
      %1556 = vmatpush.bf16.msra.mxu0 %v1321
      %1557 = vmatpush.bf16.msra.mxu0 %v1320
      %1558 = vmatpush.bf16.msra.mxu0 %v1319
      %1559 = vmatpush.bf16.msra.mxu0 %v1318
      %1560 = vmatpush.bf16.msra.mxu0 %v1317
      %1561 = vmatpush.bf16.msra.mxu0 %v1316
      %1562 = vmatpush.bf16.msra.mxu0 %v1315
      %1563 = vmatmul.bf16.gmra.mxu0 %v566
      %v1564 = vpop.f32.mrf.mxu0
      %v1565 = vadd.f32 %v891, %v1564
      %v1566 = vpop.f32.mrf.mxu0
      %v1567 = vadd.f32 %v891, %v1566
      %1568 = vmatmul.bf16.gmra.mxu0 %v580
      %v1569 = vpop.f32.mrf.mxu0
      %v1570 = vadd.f32 %v891, %v1569
      %v1571 = vpop.f32.mrf.mxu0
      %v1572 = vadd.f32 %v891, %v1571
      %1573 = vmatmul.bf16.gmra.mxu0 %v594
      %v1574 = vpop.f32.mrf.mxu0
      %v1575 = vadd.f32 %v891, %v1574
      %v1576 = vpop.f32.mrf.mxu0
      %v1577 = vadd.f32 %v891, %v1576
      %1578 = vmatmul.bf16.gmra.mxu0 %v608
      %v1579 = vpop.f32.mrf.mxu0
      %v1580 = vadd.f32 %v891, %v1579
      %v1581 = vpop.f32.mrf.mxu0
      %v1582 = vadd.f32 %v891, %v1581
      %1583 = vmatmul.bf16.gmra.mxu0 %v622
      %v1584 = vpop.f32.mrf.mxu0
      %v1585 = vadd.f32 %v891, %v1584
      %v1586 = vpop.f32.mrf.mxu0
      %v1587 = vadd.f32 %v891, %v1586
      %1588 = vmatmul.bf16.gmra.mxu0 %v636
      %v1589 = vpop.f32.mrf.mxu0
      %v1590 = vadd.f32 %v891, %v1589
      %v1591 = vpop.f32.mrf.mxu0
      %v1592 = vadd.f32 %v891, %v1591
      %1593 = vmatmul.bf16.gmra.mxu0 %v650
      %v1594 = vpop.f32.mrf.mxu0
      %v1595 = vadd.f32 %v891, %v1594
      %v1596 = vpop.f32.mrf.mxu0
      %v1597 = vadd.f32 %v891, %v1596
      %1598 = vmatmul.bf16.gmra.mxu0 %v664
      %v1599 = vpop.f32.mrf.mxu0
      %v1600 = vadd.f32 %v891, %v1599
      %v1601 = vpop.f32.mrf.mxu0
      %v1602 = vadd.f32 %v891, %v1601
      %1603 = vdwg.mxu0
      %1604 = vmatpush.bf16.msra.mxu0 %v1330
      %1605 = vmatpush.bf16.msra.mxu0 %v1329
      %1606 = vmatpush.bf16.msra.mxu0 %v1328
      %1607 = vmatpush.bf16.msra.mxu0 %v1327
      %1608 = vmatpush.bf16.msra.mxu0 %v1326
      %1609 = vmatpush.bf16.msra.mxu0 %v1325
      %1610 = vmatpush.bf16.msra.mxu0 %v1324
      %1611 = vmatpush.bf16.msra.mxu0 %v1323
      %1612 = vmatmul.bf16.gmra.mxu0 %v567
      %v1613 = vpop.f32.mrf.mxu0
      %v1614 = vadd.f32 %v1565, %v1613
      %v1615 = vpop.f32.mrf.mxu0
      %v1616 = vadd.f32 %v1567, %v1615
      %1617 = vmatmul.bf16.gmra.mxu0 %v581
      %v1618 = vpop.f32.mrf.mxu0
      %v1619 = vadd.f32 %v1570, %v1618
      %v1620 = vpop.f32.mrf.mxu0
      %v1621 = vadd.f32 %v1572, %v1620
      %1622 = vmatmul.bf16.gmra.mxu0 %v595
      %v1623 = vpop.f32.mrf.mxu0
      %v1624 = vadd.f32 %v1575, %v1623
      %v1625 = vpop.f32.mrf.mxu0
      %v1626 = vadd.f32 %v1577, %v1625
      %1627 = vmatmul.bf16.gmra.mxu0 %v609
      %v1628 = vpop.f32.mrf.mxu0
      %v1629 = vadd.f32 %v1580, %v1628
      %v1630 = vpop.f32.mrf.mxu0
      %v1631 = vadd.f32 %v1582, %v1630
      %1632 = vmatmul.bf16.gmra.mxu0 %v623
      %v1633 = vpop.f32.mrf.mxu0
      %v1634 = vadd.f32 %v1585, %v1633
      %v1635 = vpop.f32.mrf.mxu0
      %v1636 = vadd.f32 %v1587, %v1635
      %1637 = vmatmul.bf16.gmra.mxu0 %v637
      %v1638 = vpop.f32.mrf.mxu0
      %v1639 = vadd.f32 %v1590, %v1638
      %v1640 = vpop.f32.mrf.mxu0
      %v1641 = vadd.f32 %v1592, %v1640
      %1642 = vmatmul.bf16.gmra.mxu0 %v651
      %v1643 = vpop.f32.mrf.mxu0
      %v1644 = vadd.f32 %v1595, %v1643
      %v1645 = vpop.f32.mrf.mxu0
      %v1646 = vadd.f32 %v1597, %v1645
      %1647 = vmatmul.bf16.gmra.mxu0 %v665
      %v1648 = vpop.f32.mrf.mxu0
      %v1649 = vadd.f32 %v1600, %v1648
      %v1650 = vpop.f32.mrf.mxu0
      %v1651 = vadd.f32 %v1602, %v1650
      %1652 = vdwg.mxu0
      %1653 = vmatpush.bf16.msra.mxu0 %v1338
      %1654 = vmatpush.bf16.msra.mxu0 %v1337
      %1655 = vmatpush.bf16.msra.mxu0 %v1336
      %1656 = vmatpush.bf16.msra.mxu0 %v1335
      %1657 = vmatpush.bf16.msra.mxu0 %v1334
      %1658 = vmatpush.bf16.msra.mxu0 %v1333
      %1659 = vmatpush.bf16.msra.mxu0 %v1332
      %1660 = vmatpush.bf16.msra.mxu0 %v1331
      %1661 = vmatmul.bf16.gmra.mxu0 %v568
      %v1662 = vpop.f32.mrf.mxu0
      %v1663 = vadd.f32 %v1614, %v1662
      %v1664 = vpop.f32.mrf.mxu0
      %v1665 = vadd.f32 %v1616, %v1664
      %1666 = vmatmul.bf16.gmra.mxu0 %v582
      %v1667 = vpop.f32.mrf.mxu0
      %v1668 = vadd.f32 %v1619, %v1667
      %v1669 = vpop.f32.mrf.mxu0
      %v1670 = vadd.f32 %v1621, %v1669
      %1671 = vmatmul.bf16.gmra.mxu0 %v596
      %v1672 = vpop.f32.mrf.mxu0
      %v1673 = vadd.f32 %v1624, %v1672
      %v1674 = vpop.f32.mrf.mxu0
      %v1675 = vadd.f32 %v1626, %v1674
      %1676 = vmatmul.bf16.gmra.mxu0 %v610
      %v1677 = vpop.f32.mrf.mxu0
      %v1678 = vadd.f32 %v1629, %v1677
      %v1679 = vpop.f32.mrf.mxu0
      %v1680 = vadd.f32 %v1631, %v1679
      %1681 = vmatmul.bf16.gmra.mxu0 %v624
      %v1682 = vpop.f32.mrf.mxu0
      %v1683 = vadd.f32 %v1634, %v1682
      %v1684 = vpop.f32.mrf.mxu0
      %v1685 = vadd.f32 %v1636, %v1684
      %1686 = vmatmul.bf16.gmra.mxu0 %v638
      %v1687 = vpop.f32.mrf.mxu0
      %v1688 = vadd.f32 %v1639, %v1687
      %v1689 = vpop.f32.mrf.mxu0
      %v1690 = vadd.f32 %v1641, %v1689
      %1691 = vmatmul.bf16.gmra.mxu0 %v652
      %v1692 = vpop.f32.mrf.mxu0
      %v1693 = vadd.f32 %v1644, %v1692
      %v1694 = vpop.f32.mrf.mxu0
      %v1695 = vadd.f32 %v1646, %v1694
      %1696 = vmatmul.bf16.gmra.mxu0 %v666
      %v1697 = vpop.f32.mrf.mxu0
      %v1698 = vadd.f32 %v1649, %v1697
      %v1699 = vpop.f32.mrf.mxu0
      %v1700 = vadd.f32 %v1651, %v1699
      %1701 = vdwg.mxu0
      %1702 = vmatpush.bf16.msra.mxu0 %v1346
      %1703 = vmatpush.bf16.msra.mxu0 %v1345
      %1704 = vmatpush.bf16.msra.mxu0 %v1344
      %1705 = vmatpush.bf16.msra.mxu0 %v1343
      %1706 = vmatpush.bf16.msra.mxu0 %v1342
      %1707 = vmatpush.bf16.msra.mxu0 %v1341
      %1708 = vmatpush.bf16.msra.mxu0 %v1340
      %1709 = vmatpush.bf16.msra.mxu0 %v1339
      %1710 = vmatmul.bf16.gmra.mxu0 %v569
      %v1711 = vpop.f32.mrf.mxu0
      %v1712 = vadd.f32 %v1663, %v1711
      %v1713 = vpop.f32.mrf.mxu0
      %v1714 = vadd.f32 %v1665, %v1713
      %1715 = vmatmul.bf16.gmra.mxu0 %v583
      %v1716 = vpop.f32.mrf.mxu0
      %v1717 = vadd.f32 %v1668, %v1716
      %v1718 = vpop.f32.mrf.mxu0
      %v1719 = vadd.f32 %v1670, %v1718
      %1720 = vmatmul.bf16.gmra.mxu0 %v597
      %v1721 = vpop.f32.mrf.mxu0
      %v1722 = vadd.f32 %v1673, %v1721
      %v1723 = vpop.f32.mrf.mxu0
      %v1724 = vadd.f32 %v1675, %v1723
      %1725 = vmatmul.bf16.gmra.mxu0 %v611
      %v1726 = vpop.f32.mrf.mxu0
      %v1727 = vadd.f32 %v1678, %v1726
      %v1728 = vpop.f32.mrf.mxu0
      %v1729 = vadd.f32 %v1680, %v1728
      %1730 = vmatmul.bf16.gmra.mxu0 %v625
      %v1731 = vpop.f32.mrf.mxu0
      %v1732 = vadd.f32 %v1683, %v1731
      %v1733 = vpop.f32.mrf.mxu0
      %v1734 = vadd.f32 %v1685, %v1733
      %1735 = vmatmul.bf16.gmra.mxu0 %v639
      %v1736 = vpop.f32.mrf.mxu0
      %v1737 = vadd.f32 %v1688, %v1736
      %v1738 = vpop.f32.mrf.mxu0
      %v1739 = vadd.f32 %v1690, %v1738
      %1740 = vmatmul.bf16.gmra.mxu0 %v653
      %v1741 = vpop.f32.mrf.mxu0
      %v1742 = vadd.f32 %v1693, %v1741
      %v1743 = vpop.f32.mrf.mxu0
      %v1744 = vadd.f32 %v1695, %v1743
      %1745 = vmatmul.bf16.gmra.mxu0 %v667
      %v1746 = vpop.f32.mrf.mxu0
      %v1747 = vadd.f32 %v1698, %v1746
      %v1748 = vpop.f32.mrf.mxu0
      %v1749 = vadd.f32 %v1700, %v1748
      %1750 = vdwg.mxu0
      %1751 = vmatpush.bf16.msra.mxu0 %v1354
      %1752 = vmatpush.bf16.msra.mxu0 %v1353
      %1753 = vmatpush.bf16.msra.mxu0 %v1352
      %1754 = vmatpush.bf16.msra.mxu0 %v1351
      %1755 = vmatpush.bf16.msra.mxu0 %v1350
      %1756 = vmatpush.bf16.msra.mxu0 %v1349
      %1757 = vmatpush.bf16.msra.mxu0 %v1348
      %1758 = vmatpush.bf16.msra.mxu0 %v1347
      %1759 = vmatmul.bf16.gmra.mxu0 %v570
      %v1760 = vpop.f32.mrf.mxu0
      %v1761 = vadd.f32 %v1712, %v1760
      %v1762 = vpop.f32.mrf.mxu0
      %v1763 = vadd.f32 %v1714, %v1762
      %1764 = vmatmul.bf16.gmra.mxu0 %v584
      %v1765 = vpop.f32.mrf.mxu0
      %v1766 = vadd.f32 %v1717, %v1765
      %v1767 = vpop.f32.mrf.mxu0
      %v1768 = vadd.f32 %v1719, %v1767
      %1769 = vmatmul.bf16.gmra.mxu0 %v598
      %v1770 = vpop.f32.mrf.mxu0
      %v1771 = vadd.f32 %v1722, %v1770
      %v1772 = vpop.f32.mrf.mxu0
      %v1773 = vadd.f32 %v1724, %v1772
      %1774 = vmatmul.bf16.gmra.mxu0 %v612
      %v1775 = vpop.f32.mrf.mxu0
      %v1776 = vadd.f32 %v1727, %v1775
      %v1777 = vpop.f32.mrf.mxu0
      %v1778 = vadd.f32 %v1729, %v1777
      %1779 = vmatmul.bf16.gmra.mxu0 %v626
      %v1780 = vpop.f32.mrf.mxu0
      %v1781 = vadd.f32 %v1732, %v1780
      %v1782 = vpop.f32.mrf.mxu0
      %v1783 = vadd.f32 %v1734, %v1782
      %1784 = vmatmul.bf16.gmra.mxu0 %v640
      %v1785 = vpop.f32.mrf.mxu0
      %v1786 = vadd.f32 %v1737, %v1785
      %v1787 = vpop.f32.mrf.mxu0
      %v1788 = vadd.f32 %v1739, %v1787
      %1789 = vmatmul.bf16.gmra.mxu0 %v654
      %v1790 = vpop.f32.mrf.mxu0
      %v1791 = vadd.f32 %v1742, %v1790
      %v1792 = vpop.f32.mrf.mxu0
      %v1793 = vadd.f32 %v1744, %v1792
      %1794 = vmatmul.bf16.gmra.mxu0 %v668
      %v1795 = vpop.f32.mrf.mxu0
      %v1796 = vadd.f32 %v1747, %v1795
      %v1797 = vpop.f32.mrf.mxu0
      %v1798 = vadd.f32 %v1749, %v1797
      %1799 = vdwg.mxu0
      %1800 = vmatpush.bf16.msra.mxu0 %v1362
      %1801 = vmatpush.bf16.msra.mxu0 %v1361
      %1802 = vmatpush.bf16.msra.mxu0 %v1360
      %1803 = vmatpush.bf16.msra.mxu0 %v1359
      %1804 = vmatpush.bf16.msra.mxu0 %v1358
      %1805 = vmatpush.bf16.msra.mxu0 %v1357
      %1806 = vmatpush.bf16.msra.mxu0 %v1356
      %1807 = vmatpush.bf16.msra.mxu0 %v1355
      %1808 = vmatmul.bf16.gmra.mxu0 %v571
      %v1809 = vpop.f32.mrf.mxu0
      %v1810 = vadd.f32 %v1761, %v1809
      %v1811 = vpop.f32.mrf.mxu0
      %v1812 = vadd.f32 %v1763, %v1811
      %1813 = vmatmul.bf16.gmra.mxu0 %v585
      %v1814 = vpop.f32.mrf.mxu0
      %v1815 = vadd.f32 %v1766, %v1814
      %v1816 = vpop.f32.mrf.mxu0
      %v1817 = vadd.f32 %v1768, %v1816
      %1818 = vmatmul.bf16.gmra.mxu0 %v599
      %v1819 = vpop.f32.mrf.mxu0
      %v1820 = vadd.f32 %v1771, %v1819
      %v1821 = vpop.f32.mrf.mxu0
      %v1822 = vadd.f32 %v1773, %v1821
      %1823 = vmatmul.bf16.gmra.mxu0 %v613
      %v1824 = vpop.f32.mrf.mxu0
      %v1825 = vadd.f32 %v1776, %v1824
      %v1826 = vpop.f32.mrf.mxu0
      %v1827 = vadd.f32 %v1778, %v1826
      %1828 = vmatmul.bf16.gmra.mxu0 %v627
      %v1829 = vpop.f32.mrf.mxu0
      %v1830 = vadd.f32 %v1781, %v1829
      %v1831 = vpop.f32.mrf.mxu0
      %v1832 = vadd.f32 %v1783, %v1831
      %1833 = vmatmul.bf16.gmra.mxu0 %v641
      %v1834 = vpop.f32.mrf.mxu0
      %v1835 = vadd.f32 %v1786, %v1834
      %v1836 = vpop.f32.mrf.mxu0
      %v1837 = vadd.f32 %v1788, %v1836
      %1838 = vmatmul.bf16.gmra.mxu0 %v655
      %v1839 = vpop.f32.mrf.mxu0
      %v1840 = vadd.f32 %v1791, %v1839
      %v1841 = vpop.f32.mrf.mxu0
      %v1842 = vadd.f32 %v1793, %v1841
      %1843 = vmatmul.bf16.gmra.mxu0 %v669
      %v1844 = vpop.f32.mrf.mxu0
      %v1845 = vadd.f32 %v1796, %v1844
      %v1846 = vpop.f32.mrf.mxu0
      %v1847 = vadd.f32 %v1798, %v1846
      %1848 = vdwg.mxu0
      %1849 = vmatpush.bf16.msra.mxu0 %v1370
      %1850 = vmatpush.bf16.msra.mxu0 %v1369
      %1851 = vmatpush.bf16.msra.mxu0 %v1368
      %1852 = vmatpush.bf16.msra.mxu0 %v1367
      %1853 = vmatpush.bf16.msra.mxu0 %v1366
      %1854 = vmatpush.bf16.msra.mxu0 %v1365
      %1855 = vmatpush.bf16.msra.mxu0 %v1364
      %1856 = vmatpush.bf16.msra.mxu0 %v1363
      %1857 = vmatmul.bf16.gmra.mxu0 %v572
      %v1858 = vpop.f32.mrf.mxu0
      %v1859 = vadd.f32 %v1810, %v1858
      %v1860 = vpop.f32.mrf.mxu0
      %v1861 = vadd.f32 %v1812, %v1860
      %1862 = vmatmul.bf16.gmra.mxu0 %v586
      %v1863 = vpop.f32.mrf.mxu0
      %v1864 = vadd.f32 %v1815, %v1863
      %v1865 = vpop.f32.mrf.mxu0
      %v1866 = vadd.f32 %v1817, %v1865
      %1867 = vmatmul.bf16.gmra.mxu0 %v600
      %v1868 = vpop.f32.mrf.mxu0
      %v1869 = vadd.f32 %v1820, %v1868
      %v1870 = vpop.f32.mrf.mxu0
      %v1871 = vadd.f32 %v1822, %v1870
      %1872 = vmatmul.bf16.gmra.mxu0 %v614
      %v1873 = vpop.f32.mrf.mxu0
      %v1874 = vadd.f32 %v1825, %v1873
      %v1875 = vpop.f32.mrf.mxu0
      %v1876 = vadd.f32 %v1827, %v1875
      %1877 = vmatmul.bf16.gmra.mxu0 %v628
      %v1878 = vpop.f32.mrf.mxu0
      %v1879 = vadd.f32 %v1830, %v1878
      %v1880 = vpop.f32.mrf.mxu0
      %v1881 = vadd.f32 %v1832, %v1880
      %1882 = vmatmul.bf16.gmra.mxu0 %v642
      %v1883 = vpop.f32.mrf.mxu0
      %v1884 = vadd.f32 %v1835, %v1883
      %v1885 = vpop.f32.mrf.mxu0
      %v1886 = vadd.f32 %v1837, %v1885
      %1887 = vmatmul.bf16.gmra.mxu0 %v656
      %v1888 = vpop.f32.mrf.mxu0
      %v1889 = vadd.f32 %v1840, %v1888
      %v1890 = vpop.f32.mrf.mxu0
      %v1891 = vadd.f32 %v1842, %v1890
      %1892 = vmatmul.bf16.gmra.mxu0 %v670
      %v1893 = vpop.f32.mrf.mxu0
      %v1894 = vadd.f32 %v1845, %v1893
      %v1895 = vpop.f32.mrf.mxu0
      %v1896 = vadd.f32 %v1847, %v1895
      %1897 = vdwg.mxu0
      %1898 = vmatpush.bf16.msra.mxu0 %v1378
      %1899 = vmatpush.bf16.msra.mxu0 %v1377
      %1900 = vmatpush.bf16.msra.mxu0 %v1376
      %1901 = vmatpush.bf16.msra.mxu0 %v1375
      %1902 = vmatpush.bf16.msra.mxu0 %v1374
      %1903 = vmatpush.bf16.msra.mxu0 %v1373
      %1904 = vmatpush.bf16.msra.mxu0 %v1372
      %1905 = vmatpush.bf16.msra.mxu0 %v1371
      %1906 = vmatmul.bf16.gmra.mxu0 %v573
      %v1907 = vpop.f32.mrf.mxu0
      %v1908 = vadd.f32 %v1859, %v1907
      %v1909 = vpop.f32.mrf.mxu0
      %v1910 = vadd.f32 %v1861, %v1909
      %1911 = vmatmul.bf16.gmra.mxu0 %v587
      %v1912 = vpop.f32.mrf.mxu0
      %v1913 = vadd.f32 %v1864, %v1912
      %v1914 = vpop.f32.mrf.mxu0
      %v1915 = vadd.f32 %v1866, %v1914
      %1916 = vmatmul.bf16.gmra.mxu0 %v601
      %v1917 = vpop.f32.mrf.mxu0
      %v1918 = vadd.f32 %v1869, %v1917
      %v1919 = vpop.f32.mrf.mxu0
      %v1920 = vadd.f32 %v1871, %v1919
      %1921 = vmatmul.bf16.gmra.mxu0 %v615
      %v1922 = vpop.f32.mrf.mxu0
      %v1923 = vadd.f32 %v1874, %v1922
      %v1924 = vpop.f32.mrf.mxu0
      %v1925 = vadd.f32 %v1876, %v1924
      %1926 = vmatmul.bf16.gmra.mxu0 %v629
      %v1927 = vpop.f32.mrf.mxu0
      %v1928 = vadd.f32 %v1879, %v1927
      %v1929 = vpop.f32.mrf.mxu0
      %v1930 = vadd.f32 %v1881, %v1929
      %1931 = vmatmul.bf16.gmra.mxu0 %v643
      %v1932 = vpop.f32.mrf.mxu0
      %v1933 = vadd.f32 %v1884, %v1932
      %v1934 = vpop.f32.mrf.mxu0
      %v1935 = vadd.f32 %v1886, %v1934
      %1936 = vmatmul.bf16.gmra.mxu0 %v657
      %v1937 = vpop.f32.mrf.mxu0
      %v1938 = vadd.f32 %v1889, %v1937
      %v1939 = vpop.f32.mrf.mxu0
      %v1940 = vadd.f32 %v1891, %v1939
      %1941 = vmatmul.bf16.gmra.mxu0 %v671
      %v1942 = vpop.f32.mrf.mxu0
      %v1943 = vadd.f32 %v1894, %v1942
      %v1944 = vpop.f32.mrf.mxu0
      %v1945 = vadd.f32 %v1896, %v1944
      %1946 = vdwg.mxu0
      %1947 = vmatpush.bf16.msra.mxu0 %v1386
      %1948 = vmatpush.bf16.msra.mxu0 %v1385
      %1949 = vmatpush.bf16.msra.mxu0 %v1384
      %1950 = vmatpush.bf16.msra.mxu0 %v1383
      %1951 = vmatpush.bf16.msra.mxu0 %v1382
      %1952 = vmatpush.bf16.msra.mxu0 %v1381
      %1953 = vmatpush.bf16.msra.mxu0 %v1380
      %1954 = vmatpush.bf16.msra.mxu0 %v1379
      %1955 = vmatmul.bf16.gmra.mxu0 %v574
      %v1956 = vpop.f32.mrf.mxu0
      %v1957 = vadd.f32 %v1908, %v1956
      %v1958 = vpop.f32.mrf.mxu0
      %v1959 = vadd.f32 %v1910, %v1958
      %1960 = vmatmul.bf16.gmra.mxu0 %v588
      %v1961 = vpop.f32.mrf.mxu0
      %v1962 = vadd.f32 %v1913, %v1961
      %v1963 = vpop.f32.mrf.mxu0
      %v1964 = vadd.f32 %v1915, %v1963
      %1965 = vmatmul.bf16.gmra.mxu0 %v602
      %v1966 = vpop.f32.mrf.mxu0
      %v1967 = vadd.f32 %v1918, %v1966
      %v1968 = vpop.f32.mrf.mxu0
      %v1969 = vadd.f32 %v1920, %v1968
      %1970 = vmatmul.bf16.gmra.mxu0 %v616
      %v1971 = vpop.f32.mrf.mxu0
      %v1972 = vadd.f32 %v1923, %v1971
      %v1973 = vpop.f32.mrf.mxu0
      %v1974 = vadd.f32 %v1925, %v1973
      %1975 = vmatmul.bf16.gmra.mxu0 %v630
      %v1976 = vpop.f32.mrf.mxu0
      %v1977 = vadd.f32 %v1928, %v1976
      %v1978 = vpop.f32.mrf.mxu0
      %v1979 = vadd.f32 %v1930, %v1978
      %1980 = vmatmul.bf16.gmra.mxu0 %v644
      %v1981 = vpop.f32.mrf.mxu0
      %v1982 = vadd.f32 %v1933, %v1981
      %v1983 = vpop.f32.mrf.mxu0
      %v1984 = vadd.f32 %v1935, %v1983
      %1985 = vmatmul.bf16.gmra.mxu0 %v658
      %v1986 = vpop.f32.mrf.mxu0
      %v1987 = vadd.f32 %v1938, %v1986
      %v1988 = vpop.f32.mrf.mxu0
      %v1989 = vadd.f32 %v1940, %v1988
      %1990 = vmatmul.bf16.gmra.mxu0 %v672
      %v1991 = vpop.f32.mrf.mxu0
      %v1992 = vadd.f32 %v1943, %v1991
      %v1993 = vpop.f32.mrf.mxu0
      %v1994 = vadd.f32 %v1945, %v1993
      %1995 = vdwg.mxu0
      %1996 = vmatpush.bf16.msra.mxu0 %v1394
      %1997 = vmatpush.bf16.msra.mxu0 %v1393
      %1998 = vmatpush.bf16.msra.mxu0 %v1392
      %1999 = vmatpush.bf16.msra.mxu0 %v1391
      %2000 = vmatpush.bf16.msra.mxu0 %v1390
      %2001 = vmatpush.bf16.msra.mxu0 %v1389
      %2002 = vmatpush.bf16.msra.mxu0 %v1388
      %2003 = vmatpush.bf16.msra.mxu0 %v1387
      %2004 = vmatmul.bf16.gmra.mxu0 %v575
      %v2005 = vpop.f32.mrf.mxu0
      %v2006 = vadd.f32 %v1957, %v2005
      %v2007 = vpop.f32.mrf.mxu0
      %v2008 = vadd.f32 %v1959, %v2007
      %2009 = vmatmul.bf16.gmra.mxu0 %v589
      %v2010 = vpop.f32.mrf.mxu0
      %v2011 = vadd.f32 %v1962, %v2010
      %v2012 = vpop.f32.mrf.mxu0
      %v2013 = vadd.f32 %v1964, %v2012
      %2014 = vmatmul.bf16.gmra.mxu0 %v603
      %v2015 = vpop.f32.mrf.mxu0
      %v2016 = vadd.f32 %v1967, %v2015
      %v2017 = vpop.f32.mrf.mxu0
      %v2018 = vadd.f32 %v1969, %v2017
      %2019 = vmatmul.bf16.gmra.mxu0 %v617
      %v2020 = vpop.f32.mrf.mxu0
      %v2021 = vadd.f32 %v1972, %v2020
      %v2022 = vpop.f32.mrf.mxu0
      %v2023 = vadd.f32 %v1974, %v2022
      %2024 = vmatmul.bf16.gmra.mxu0 %v631
      %v2025 = vpop.f32.mrf.mxu0
      %v2026 = vadd.f32 %v1977, %v2025
      %v2027 = vpop.f32.mrf.mxu0
      %v2028 = vadd.f32 %v1979, %v2027
      %2029 = vmatmul.bf16.gmra.mxu0 %v645
      %v2030 = vpop.f32.mrf.mxu0
      %v2031 = vadd.f32 %v1982, %v2030
      %v2032 = vpop.f32.mrf.mxu0
      %v2033 = vadd.f32 %v1984, %v2032
      %2034 = vmatmul.bf16.gmra.mxu0 %v659
      %v2035 = vpop.f32.mrf.mxu0
      %v2036 = vadd.f32 %v1987, %v2035
      %v2037 = vpop.f32.mrf.mxu0
      %v2038 = vadd.f32 %v1989, %v2037
      %2039 = vmatmul.bf16.gmra.mxu0 %v673
      %v2040 = vpop.f32.mrf.mxu0
      %v2041 = vadd.f32 %v1992, %v2040
      %v2042 = vpop.f32.mrf.mxu0
      %v2043 = vadd.f32 %v1994, %v2042
      %2044 = vdwg.mxu0
      %2045 = vmatpush.bf16.msra.mxu0 %v1402
      %2046 = vmatpush.bf16.msra.mxu0 %v1401
      %2047 = vmatpush.bf16.msra.mxu0 %v1400
      %2048 = vmatpush.bf16.msra.mxu0 %v1399
      %2049 = vmatpush.bf16.msra.mxu0 %v1398
      %2050 = vmatpush.bf16.msra.mxu0 %v1397
      %2051 = vmatpush.bf16.msra.mxu0 %v1396
      %2052 = vmatpush.bf16.msra.mxu0 %v1395
      %2053 = vmatmul.bf16.gmra.mxu0 %v576
      %v2054 = vpop.f32.mrf.mxu0
      %v2055 = vadd.f32 %v2006, %v2054
      %v2056 = vpop.f32.mrf.mxu0
      %v2057 = vadd.f32 %v2008, %v2056
      %2058 = vmatmul.bf16.gmra.mxu0 %v590
      %v2059 = vpop.f32.mrf.mxu0
      %v2060 = vadd.f32 %v2011, %v2059
      %v2061 = vpop.f32.mrf.mxu0
      %v2062 = vadd.f32 %v2013, %v2061
      %2063 = vmatmul.bf16.gmra.mxu0 %v604
      %v2064 = vpop.f32.mrf.mxu0
      %v2065 = vadd.f32 %v2016, %v2064
      %v2066 = vpop.f32.mrf.mxu0
      %v2067 = vadd.f32 %v2018, %v2066
      %2068 = vmatmul.bf16.gmra.mxu0 %v618
      %v2069 = vpop.f32.mrf.mxu0
      %v2070 = vadd.f32 %v2021, %v2069
      %v2071 = vpop.f32.mrf.mxu0
      %v2072 = vadd.f32 %v2023, %v2071
      %2073 = vmatmul.bf16.gmra.mxu0 %v632
      %v2074 = vpop.f32.mrf.mxu0
      %v2075 = vadd.f32 %v2026, %v2074
      %v2076 = vpop.f32.mrf.mxu0
      %v2077 = vadd.f32 %v2028, %v2076
      %2078 = vmatmul.bf16.gmra.mxu0 %v646
      %v2079 = vpop.f32.mrf.mxu0
      %v2080 = vadd.f32 %v2031, %v2079
      %v2081 = vpop.f32.mrf.mxu0
      %v2082 = vadd.f32 %v2033, %v2081
      %2083 = vmatmul.bf16.gmra.mxu0 %v660
      %v2084 = vpop.f32.mrf.mxu0
      %v2085 = vadd.f32 %v2036, %v2084
      %v2086 = vpop.f32.mrf.mxu0
      %v2087 = vadd.f32 %v2038, %v2086
      %2088 = vmatmul.bf16.gmra.mxu0 %v674
      %v2089 = vpop.f32.mrf.mxu0
      %v2090 = vadd.f32 %v2041, %v2089
      %v2091 = vpop.f32.mrf.mxu0
      %v2092 = vadd.f32 %v2043, %v2091
      %2093 = vdwg.mxu0
      %2094 = vmatpush.bf16.msra.mxu0 %v1410
      %2095 = vmatpush.bf16.msra.mxu0 %v1409
      %2096 = vmatpush.bf16.msra.mxu0 %v1408
      %2097 = vmatpush.bf16.msra.mxu0 %v1407
      %2098 = vmatpush.bf16.msra.mxu0 %v1406
      %2099 = vmatpush.bf16.msra.mxu0 %v1405
      %2100 = vmatpush.bf16.msra.mxu0 %v1404
      %2101 = vmatpush.bf16.msra.mxu0 %v1403
      %2102 = vmatmul.bf16.gmra.mxu0 %v577
      %v2103 = vpop.f32.mrf.mxu0
      %v2104 = vadd.f32 %v2055, %v2103
      %v2105 = vpop.f32.mrf.mxu0
      %v2106 = vadd.f32 %v2057, %v2105
      %2107 = vmatmul.bf16.gmra.mxu0 %v591
      %v2108 = vpop.f32.mrf.mxu0
      %v2109 = vadd.f32 %v2060, %v2108
      %v2110 = vpop.f32.mrf.mxu0
      %v2111 = vadd.f32 %v2062, %v2110
      %2112 = vmatmul.bf16.gmra.mxu0 %v605
      %v2113 = vpop.f32.mrf.mxu0
      %v2114 = vadd.f32 %v2065, %v2113
      %v2115 = vpop.f32.mrf.mxu0
      %v2116 = vadd.f32 %v2067, %v2115
      %2117 = vmatmul.bf16.gmra.mxu0 %v619
      %v2118 = vpop.f32.mrf.mxu0
      %v2119 = vadd.f32 %v2070, %v2118
      %v2120 = vpop.f32.mrf.mxu0
      %v2121 = vadd.f32 %v2072, %v2120
      %2122 = vmatmul.bf16.gmra.mxu0 %v633
      %v2123 = vpop.f32.mrf.mxu0
      %v2124 = vadd.f32 %v2075, %v2123
      %v2125 = vpop.f32.mrf.mxu0
      %v2126 = vadd.f32 %v2077, %v2125
      %2127 = vmatmul.bf16.gmra.mxu0 %v647
      %v2128 = vpop.f32.mrf.mxu0
      %v2129 = vadd.f32 %v2080, %v2128
      %v2130 = vpop.f32.mrf.mxu0
      %v2131 = vadd.f32 %v2082, %v2130
      %2132 = vmatmul.bf16.gmra.mxu0 %v661
      %v2133 = vpop.f32.mrf.mxu0
      %v2134 = vadd.f32 %v2085, %v2133
      %v2135 = vpop.f32.mrf.mxu0
      %v2136 = vadd.f32 %v2087, %v2135
      %2137 = vmatmul.bf16.gmra.mxu0 %v675
      %v2138 = vpop.f32.mrf.mxu0
      %v2139 = vadd.f32 %v2090, %v2138
      %v2140 = vpop.f32.mrf.mxu0
      %v2141 = vadd.f32 %v2092, %v2140
      %2142 = vdwg.mxu0
      %2143 = vmatpush.bf16.msra.mxu0 %v1418
      %2144 = vmatpush.bf16.msra.mxu0 %v1417
      %2145 = vmatpush.bf16.msra.mxu0 %v1416
      %2146 = vmatpush.bf16.msra.mxu0 %v1415
      %2147 = vmatpush.bf16.msra.mxu0 %v1414
      %2148 = vmatpush.bf16.msra.mxu0 %v1413
      %2149 = vmatpush.bf16.msra.mxu0 %v1412
      %2150 = vmatpush.bf16.msra.mxu0 %v1411
      %2151 = vmatmul.bf16.gmra.mxu0 %v578
      %v2152 = vpop.f32.mrf.mxu0
      %v2153 = vadd.f32 %v2104, %v2152
      %v2154 = vpop.f32.mrf.mxu0
      %v2155 = vadd.f32 %v2106, %v2154
      %2156 = vmatmul.bf16.gmra.mxu0 %v592
      %v2157 = vpop.f32.mrf.mxu0
      %v2158 = vadd.f32 %v2109, %v2157
      %v2159 = vpop.f32.mrf.mxu0
      %v2160 = vadd.f32 %v2111, %v2159
      %2161 = vmatmul.bf16.gmra.mxu0 %v606
      %v2162 = vpop.f32.mrf.mxu0
      %v2163 = vadd.f32 %v2114, %v2162
      %v2164 = vpop.f32.mrf.mxu0
      %v2165 = vadd.f32 %v2116, %v2164
      %2166 = vmatmul.bf16.gmra.mxu0 %v620
      %v2167 = vpop.f32.mrf.mxu0
      %v2168 = vadd.f32 %v2119, %v2167
      %v2169 = vpop.f32.mrf.mxu0
      %v2170 = vadd.f32 %v2121, %v2169
      %2171 = vmatmul.bf16.gmra.mxu0 %v634
      %v2172 = vpop.f32.mrf.mxu0
      %v2173 = vadd.f32 %v2124, %v2172
      %v2174 = vpop.f32.mrf.mxu0
      %v2175 = vadd.f32 %v2126, %v2174
      %2176 = vmatmul.bf16.gmra.mxu0 %v648
      %v2177 = vpop.f32.mrf.mxu0
      %v2178 = vadd.f32 %v2129, %v2177
      %v2179 = vpop.f32.mrf.mxu0
      %v2180 = vadd.f32 %v2131, %v2179
      %2181 = vmatmul.bf16.gmra.mxu0 %v662
      %v2182 = vpop.f32.mrf.mxu0
      %v2183 = vadd.f32 %v2134, %v2182
      %v2184 = vpop.f32.mrf.mxu0
      %v2185 = vadd.f32 %v2136, %v2184
      %2186 = vmatmul.bf16.gmra.mxu0 %v676
      %v2187 = vpop.f32.mrf.mxu0
      %v2188 = vadd.f32 %v2139, %v2187
      %v2189 = vpop.f32.mrf.mxu0
      %v2190 = vadd.f32 %v2141, %v2189
      %2191 = vdwg.mxu0
      %2192 = vmatpush.bf16.msra.mxu0 0
      %2193 = vmatpush.bf16.msra.mxu0 0
      %2194 = vmatpush.bf16.msra.mxu0 0
      %2195 = vmatpush.bf16.msra.mxu0 0
      %2196 = vmatpush.bf16.msra.mxu0 0
      %2197 = vmatpush.bf16.msra.mxu0 0
      %2198 = vmatpush.bf16.msra.mxu0 %v1553
      %2199 = vmatpush.bf16.msra.mxu0 %v1419
      %2200 = vmatmul.bf16.gmra.mxu0 %v1528
      %v2201 = vpop.f32.mrf.mxu0
      %v2202 = vadd.f32 %v2153, %v2201
      %v2203 = vpop.f32.mrf.mxu0
      %v2204 = vadd.f32 %v2155, %v2203
      %2205 = vmatmul.bf16.gmra.mxu0 %v1531
      %v2206 = vpop.f32.mrf.mxu0
      %v2207 = vadd.f32 %v2158, %v2206
      %v2208 = vpop.f32.mrf.mxu0
      %v2209 = vadd.f32 %v2160, %v2208
      %2210 = vmatmul.bf16.gmra.mxu0 %v1534
      %v2211 = vpop.f32.mrf.mxu0
      %v2212 = vadd.f32 %v2163, %v2211
      %v2213 = vpop.f32.mrf.mxu0
      %v2214 = vadd.f32 %v2165, %v2213
      %2215 = vmatmul.bf16.gmra.mxu0 %v1537
      %v2216 = vpop.f32.mrf.mxu0
      %v2217 = vadd.f32 %v2168, %v2216
      %v2218 = vpop.f32.mrf.mxu0
      %v2219 = vadd.f32 %v2170, %v2218
      %2220 = vmatmul.bf16.gmra.mxu0 %v1540
      %v2221 = vpop.f32.mrf.mxu0
      %v2222 = vadd.f32 %v2173, %v2221
      %v2223 = vpop.f32.mrf.mxu0
      %v2224 = vadd.f32 %v2175, %v2223
      %2225 = vmatmul.bf16.gmra.mxu0 %v1543
      %v2226 = vpop.f32.mrf.mxu0
      %v2227 = vadd.f32 %v2178, %v2226
      %v2228 = vpop.f32.mrf.mxu0
      %v2229 = vadd.f32 %v2180, %v2228
      %2230 = vmatmul.bf16.gmra.mxu0 %v1546
      %v2231 = vpop.f32.mrf.mxu0
      %v2232 = vadd.f32 %v2183, %v2231
      %v2233 = vpop.f32.mrf.mxu0
      %v2234 = vadd.f32 %v2185, %v2233
      %2235 = vmatmul.bf16.gmra.mxu0 %v1549
      %v2236 = vpop.f32.mrf.mxu0
      %v2237 = vadd.f32 %v2188, %v2236
      %v2238 = vpop.f32.mrf.mxu0
      %v2239 = vadd.f32 %v2190, %v2238
      %2240 = vdwg.mxu0
      %v2241 = vxor.u32 %v2202, 2147483648
      %v2242 = vxor.u32 %v2204, 2147483648
      %v2243 = vxor.u32 %v2207, 2147483648
      %v2244 = vxor.u32 %v2209, 2147483648
      %v2245 = vxor.u32 %v2212, 2147483648
      %v2246 = vxor.u32 %v2214, 2147483648
      %v2247 = vxor.u32 %v2217, 2147483648
      %v2248 = vxor.u32 %v2219, 2147483648
      %v2249 = vxor.u32 %v2222, 2147483648
      %v2250 = vxor.u32 %v2224, 2147483648
      %v2251 = vxor.u32 %v2227, 2147483648
      %v2252 = vxor.u32 %v2229, 2147483648
      %v2253 = vxor.u32 %v2232, 2147483648
      %v2254 = vxor.u32 %v2234, 2147483648
      %v2255 = vxor.u32 %v2237, 2147483648
      %v2256 = vxor.u32 %v2239, 2147483648
      %v2257 = vmul.f32 %v2241, 1.442695
      %v2258 = vpow.pop %v2257
      %v2259 = vmul.f32 %v2242, 1.442695
      %v2260 = vpow.pop %v2259
      %v2261 = vmul.f32 %v2243, 1.442695
      %v2262 = vpow.pop %v2261
      %v2263 = vmul.f32 %v2244, 1.442695
      %v2264 = vpow.pop %v2263
      %v2265 = vmul.f32 %v2245, 1.442695
      %v2266 = vpow.pop %v2265
      %v2267 = vmul.f32 %v2246, 1.442695
      %v2268 = vpow.pop %v2267
      %v2269 = vmul.f32 %v2247, 1.442695
      %v2270 = vpow.pop %v2269
      %v2271 = vmul.f32 %v2248, 1.442695
      %v2272 = vpow.pop %v2271
      %v2273 = vmul.f32 %v2249, 1.442695
      %v2274 = vpow.pop %v2273
      %v2275 = vmul.f32 %v2250, 1.442695
      %v2276 = vpow.pop %v2275
      %v2277 = vmul.f32 %v2251, 1.442695
      %v2278 = vpow.pop %v2277
      %v2279 = vmul.f32 %v2252, 1.442695
      %v2280 = vpow.pop %v2279
      %v2281 = vmul.f32 %v2253, 1.442695
      %v2282 = vpow.pop %v2281
      %v2283 = vmul.f32 %v2254, 1.442695
      %v2284 = vpow.pop %v2283
      %v2285 = vmul.f32 %v2255, 1.442695
      %v2286 = vpow.pop %v2285
      %v2287 = vmul.f32 %v2256, 1.442695
      %v2288 = vpow.pop %v2287
      %v2289 = vadd.f32 %v2258, 1.0
      %v2290 = vadd.f32 %v2260, 1.0
      %v2291 = vadd.f32 %v2262, 1.0
      %v2292 = vadd.f32 %v2264, 1.0
      %v2293 = vadd.f32 %v2266, 1.0
      %v2294 = vadd.f32 %v2268, 1.0
      %v2295 = vadd.f32 %v2270, 1.0
      %v2296 = vadd.f32 %v2272, 1.0
      %v2297 = vadd.f32 %v2274, 1.0
      %v2298 = vadd.f32 %v2276, 1.0
      %v2299 = vadd.f32 %v2278, 1.0
      %v2300 = vadd.f32 %v2280, 1.0
      %v2301 = vadd.f32 %v2282, 1.0
      %v2302 = vadd.f32 %v2284, 1.0
      %v2303 = vadd.f32 %v2286, 1.0
      %v2304 = vadd.f32 %v2288, 1.0
      %v2305 = vrcp.pop %v2289
      %v2306 = vmul.f32 %v2289, %v2305
      %v2307 = vsub.f32 1.0, %v2306
      %v2308 = vmul.f32 %v2305, %v2307
      %v2309 = vadd.f32 %v2305, %v2308
      %vm2310 = vweird.f32 %v2289
      %vm2311 = vweird.f32 %v2305
      %vm2312 = vmor %vm2310, %vm2311
      %v2313 = vsel %vm2312, %v2305, %v2309
      %v2314 = vand.u32 2147483647, %v2289
      %vm2315 = vcmp.eq.f32.partialorder %v2314, 8.507059e+37
      %v2316 = vand.u32 %v2289, 2147483648
      %v2317 = vor.u32 1.1754944e-38, %v2316
      %v2318 = vsel %vm2315, %v2317, %v2313
      %v2319 = vmul.f32 1.0, %v2318
      %v2320 = vrcp.pop %v2290
      %v2321 = vmul.f32 %v2290, %v2320
      %v2322 = vsub.f32 1.0, %v2321
      %v2323 = vmul.f32 %v2320, %v2322
      %v2324 = vadd.f32 %v2320, %v2323
      %vm2325 = vweird.f32 %v2290
      %vm2326 = vweird.f32 %v2320
      %vm2327 = vmor %vm2325, %vm2326
      %v2328 = vsel %vm2327, %v2320, %v2324
      %v2329 = vand.u32 2147483647, %v2290
      %vm2330 = vcmp.eq.f32.partialorder %v2329, 8.507059e+37
      %v2331 = vand.u32 %v2290, 2147483648
      %v2332 = vor.u32 1.1754944e-38, %v2331
      %v2333 = vsel %vm2330, %v2332, %v2328
      %v2334 = vmul.f32 1.0, %v2333
      %v2335 = vrcp.pop %v2291
      %v2336 = vmul.f32 %v2291, %v2335
      %v2337 = vsub.f32 1.0, %v2336
      %v2338 = vmul.f32 %v2335, %v2337
      %v2339 = vadd.f32 %v2335, %v2338
      %vm2340 = vweird.f32 %v2291
      %vm2341 = vweird.f32 %v2335
      %vm2342 = vmor %vm2340, %vm2341
      %v2343 = vsel %vm2342, %v2335, %v2339
      %v2344 = vand.u32 2147483647, %v2291
      %vm2345 = vcmp.eq.f32.partialorder %v2344, 8.507059e+37
      %v2346 = vand.u32 %v2291, 2147483648
      %v2347 = vor.u32 1.1754944e-38, %v2346
      %v2348 = vsel %vm2345, %v2347, %v2343
      %v2349 = vmul.f32 1.0, %v2348
      %v2350 = vrcp.pop %v2292
      %v2351 = vmul.f32 %v2292, %v2350
      %v2352 = vsub.f32 1.0, %v2351
      %v2353 = vmul.f32 %v2350, %v2352
      %v2354 = vadd.f32 %v2350, %v2353
      %vm2355 = vweird.f32 %v2292
      %vm2356 = vweird.f32 %v2350
      %vm2357 = vmor %vm2355, %vm2356
      %v2358 = vsel %vm2357, %v2350, %v2354
      %v2359 = vand.u32 2147483647, %v2292
      %vm2360 = vcmp.eq.f32.partialorder %v2359, 8.507059e+37
      %v2361 = vand.u32 %v2292, 2147483648
      %v2362 = vor.u32 1.1754944e-38, %v2361
      %v2363 = vsel %vm2360, %v2362, %v2358
      %v2364 = vmul.f32 1.0, %v2363
      %v2365 = vrcp.pop %v2293
      %v2366 = vmul.f32 %v2293, %v2365
      %v2367 = vsub.f32 1.0, %v2366
      %v2368 = vmul.f32 %v2365, %v2367
      %v2369 = vadd.f32 %v2365, %v2368
      %vm2370 = vweird.f32 %v2293
      %vm2371 = vweird.f32 %v2365
      %vm2372 = vmor %vm2370, %vm2371
      %v2373 = vsel %vm2372, %v2365, %v2369
      %v2374 = vand.u32 2147483647, %v2293
      %vm2375 = vcmp.eq.f32.partialorder %v2374, 8.507059e+37
      %v2376 = vand.u32 %v2293, 2147483648
      %v2377 = vor.u32 1.1754944e-38, %v2376
      %v2378 = vsel %vm2375, %v2377, %v2373
      %v2379 = vmul.f32 1.0, %v2378
      %v2380 = vrcp.pop %v2294
      %v2381 = vmul.f32 %v2294, %v2380
      %v2382 = vsub.f32 1.0, %v2381
      %v2383 = vmul.f32 %v2380, %v2382
      %v2384 = vadd.f32 %v2380, %v2383
      %vm2385 = vweird.f32 %v2294
      %vm2386 = vweird.f32 %v2380
      %vm2387 = vmor %vm2385, %vm2386
      %v2388 = vsel %vm2387, %v2380, %v2384
      %v2389 = vand.u32 2147483647, %v2294
      %vm2390 = vcmp.eq.f32.partialorder %v2389, 8.507059e+37
      %v2391 = vand.u32 %v2294, 2147483648
      %v2392 = vor.u32 1.1754944e-38, %v2391
      %v2393 = vsel %vm2390, %v2392, %v2388
      %v2394 = vmul.f32 1.0, %v2393
      %v2395 = vrcp.pop %v2295
      %v2396 = vmul.f32 %v2295, %v2395
      %v2397 = vsub.f32 1.0, %v2396
      %v2398 = vmul.f32 %v2395, %v2397
      %v2399 = vadd.f32 %v2395, %v2398
      %vm2400 = vweird.f32 %v2295
      %vm2401 = vweird.f32 %v2395
      %vm2402 = vmor %vm2400, %vm2401
      %v2403 = vsel %vm2402, %v2395, %v2399
      %v2404 = vand.u32 2147483647, %v2295
      %vm2405 = vcmp.eq.f32.partialorder %v2404, 8.507059e+37
      %v2406 = vand.u32 %v2295, 2147483648
      %v2407 = vor.u32 1.1754944e-38, %v2406
      %v2408 = vsel %vm2405, %v2407, %v2403
      %v2409 = vmul.f32 1.0, %v2408
      %v2410 = vrcp.pop %v2296
      %v2411 = vmul.f32 %v2296, %v2410
      %v2412 = vsub.f32 1.0, %v2411
      %v2413 = vmul.f32 %v2410, %v2412
      %v2414 = vadd.f32 %v2410, %v2413
      %vm2415 = vweird.f32 %v2296
      %vm2416 = vweird.f32 %v2410
      %vm2417 = vmor %vm2415, %vm2416
      %v2418 = vsel %vm2417, %v2410, %v2414
      %v2419 = vand.u32 2147483647, %v2296
      %vm2420 = vcmp.eq.f32.partialorder %v2419, 8.507059e+37
      %v2421 = vand.u32 %v2296, 2147483648
      %v2422 = vor.u32 1.1754944e-38, %v2421
      %v2423 = vsel %vm2420, %v2422, %v2418
      %v2424 = vmul.f32 1.0, %v2423
      %v2425 = vrcp.pop %v2297
      %v2426 = vmul.f32 %v2297, %v2425
      %v2427 = vsub.f32 1.0, %v2426
      %v2428 = vmul.f32 %v2425, %v2427
      %v2429 = vadd.f32 %v2425, %v2428
      %vm2430 = vweird.f32 %v2297
      %vm2431 = vweird.f32 %v2425
      %vm2432 = vmor %vm2430, %vm2431
      %v2433 = vsel %vm2432, %v2425, %v2429
      %v2434 = vand.u32 2147483647, %v2297
      %vm2435 = vcmp.eq.f32.partialorder %v2434, 8.507059e+37
      %v2436 = vand.u32 %v2297, 2147483648
      %v2437 = vor.u32 1.1754944e-38, %v2436
      %v2438 = vsel %vm2435, %v2437, %v2433
      %v2439 = vmul.f32 1.0, %v2438
      %v2440 = vrcp.pop %v2298
      %v2441 = vmul.f32 %v2298, %v2440
      %v2442 = vsub.f32 1.0, %v2441
      %v2443 = vmul.f32 %v2440, %v2442
      %v2444 = vadd.f32 %v2440, %v2443
      %vm2445 = vweird.f32 %v2298
      %vm2446 = vweird.f32 %v2440
      %vm2447 = vmor %vm2445, %vm2446
      %v2448 = vsel %vm2447, %v2440, %v2444
      %v2449 = vand.u32 2147483647, %v2298
      %vm2450 = vcmp.eq.f32.partialorder %v2449, 8.507059e+37
      %v2451 = vand.u32 %v2298, 2147483648
      %v2452 = vor.u32 1.1754944e-38, %v2451
      %v2453 = vsel %vm2450, %v2452, %v2448
      %v2454 = vmul.f32 1.0, %v2453
      %v2455 = vrcp.pop %v2299
      %v2456 = vmul.f32 %v2299, %v2455
      %v2457 = vsub.f32 1.0, %v2456
      %v2458 = vmul.f32 %v2455, %v2457
      %v2459 = vadd.f32 %v2455, %v2458
      %vm2460 = vweird.f32 %v2299
      %vm2461 = vweird.f32 %v2455
      %vm2462 = vmor %vm2460, %vm2461
      %v2463 = vsel %vm2462, %v2455, %v2459
      %v2464 = vand.u32 2147483647, %v2299
      %vm2465 = vcmp.eq.f32.partialorder %v2464, 8.507059e+37
      %v2466 = vand.u32 %v2299, 2147483648
      %v2467 = vor.u32 1.1754944e-38, %v2466
      %v2468 = vsel %vm2465, %v2467, %v2463
      %v2469 = vmul.f32 1.0, %v2468
      %v2470 = vrcp.pop %v2300
      %v2471 = vmul.f32 %v2300, %v2470
      %v2472 = vsub.f32 1.0, %v2471
      %v2473 = vmul.f32 %v2470, %v2472
      %v2474 = vadd.f32 %v2470, %v2473
      %vm2475 = vweird.f32 %v2300
      %vm2476 = vweird.f32 %v2470
      %vm2477 = vmor %vm2475, %vm2476
      %v2478 = vsel %vm2477, %v2470, %v2474
      %v2479 = vand.u32 2147483647, %v2300
      %vm2480 = vcmp.eq.f32.partialorder %v2479, 8.507059e+37
      %v2481 = vand.u32 %v2300, 2147483648
      %v2482 = vor.u32 1.1754944e-38, %v2481
      %v2483 = vsel %vm2480, %v2482, %v2478
      %v2484 = vmul.f32 1.0, %v2483
      %v2485 = vrcp.pop %v2301
      %v2486 = vmul.f32 %v2301, %v2485
      %v2487 = vsub.f32 1.0, %v2486
      %v2488 = vmul.f32 %v2485, %v2487
      %v2489 = vadd.f32 %v2485, %v2488
      %vm2490 = vweird.f32 %v2301
      %vm2491 = vweird.f32 %v2485
      %vm2492 = vmor %vm2490, %vm2491
      %v2493 = vsel %vm2492, %v2485, %v2489
      %v2494 = vand.u32 2147483647, %v2301
      %vm2495 = vcmp.eq.f32.partialorder %v2494, 8.507059e+37
      %v2496 = vand.u32 %v2301, 2147483648
      %v2497 = vor.u32 1.1754944e-38, %v2496
      %v2498 = vsel %vm2495, %v2497, %v2493
      %v2499 = vmul.f32 1.0, %v2498
      %v2500 = vrcp.pop %v2302
      %v2501 = vmul.f32 %v2302, %v2500
      %v2502 = vsub.f32 1.0, %v2501
      %v2503 = vmul.f32 %v2500, %v2502
      %v2504 = vadd.f32 %v2500, %v2503
      %vm2505 = vweird.f32 %v2302
      %vm2506 = vweird.f32 %v2500
      %vm2507 = vmor %vm2505, %vm2506
      %v2508 = vsel %vm2507, %v2500, %v2504
      %v2509 = vand.u32 2147483647, %v2302
      %vm2510 = vcmp.eq.f32.partialorder %v2509, 8.507059e+37
      %v2511 = vand.u32 %v2302, 2147483648
      %v2512 = vor.u32 1.1754944e-38, %v2511
      %v2513 = vsel %vm2510, %v2512, %v2508
      %v2514 = vmul.f32 1.0, %v2513
      %v2515 = vrcp.pop %v2303
      %v2516 = vmul.f32 %v2303, %v2515
      %v2517 = vsub.f32 1.0, %v2516
      %v2518 = vmul.f32 %v2515, %v2517
      %v2519 = vadd.f32 %v2515, %v2518
      %vm2520 = vweird.f32 %v2303
      %vm2521 = vweird.f32 %v2515
      %vm2522 = vmor %vm2520, %vm2521
      %v2523 = vsel %vm2522, %v2515, %v2519
      %v2524 = vand.u32 2147483647, %v2303
      %vm2525 = vcmp.eq.f32.partialorder %v2524, 8.507059e+37
      %v2526 = vand.u32 %v2303, 2147483648
      %v2527 = vor.u32 1.1754944e-38, %v2526
      %v2528 = vsel %vm2525, %v2527, %v2523
      %v2529 = vmul.f32 1.0, %v2528
      %v2530 = vrcp.pop %v2304
      %v2531 = vmul.f32 %v2304, %v2530
      %v2532 = vsub.f32 1.0, %v2531
      %v2533 = vmul.f32 %v2530, %v2532
      %v2534 = vadd.f32 %v2530, %v2533
      %vm2535 = vweird.f32 %v2304
      %vm2536 = vweird.f32 %v2530
      %vm2537 = vmor %vm2535, %vm2536
      %v2538 = vsel %vm2537, %v2530, %v2534
      %v2539 = vand.u32 2147483647, %v2304
      %vm2540 = vcmp.eq.f32.partialorder %v2539, 8.507059e+37
      %v2541 = vand.u32 %v2304, 2147483648
      %v2542 = vor.u32 1.1754944e-38, %v2541
      %v2543 = vsel %vm2540, %v2542, %v2538
      %v2544 = vmul.f32 1.0, %v2543
      %v2545 = vld [vmem:[%s3] sm:$0xff]
      %v2546 = vld [vmem:[%s3 + $0x8] sm:$0xff]
      %v2547 = vld [vmem:[%s3 + $0x10] sm:$0xf]
      %v2548 = vld [vmem:[%s4] sm:$0x1]
      %v2550 = vperm.slane %v2548, 0
      %vm2552 = vcmask 162816
      %v2554 = vsel %vm2552, %v2319, 0
      %v2557 = vsel %vm2552, %v2334, 0
      %v2560 = vsel %vm2552, %v2349, 0
      %v2563 = vsel %vm2552, %v2364, 0
      %v2566 = vsel %vm2552, %v2379, 0
      %v2569 = vsel %vm2552, %v2394, 0
      %v2572 = vsel %vm2552, %v2409, 0
      %v2575 = vsel %vm2552, %v2424, 0
      %v2578 = vsel %vm2552, %v2439, 0
      %v2581 = vsel %vm2552, %v2454, 0
      %v2584 = vsel %vm2552, %v2469, 0
      %v2587 = vsel %vm2552, %v2484, 0
      %v2590 = vsel %vm2552, %v2499, 0
      %v2593 = vsel %vm2552, %v2514, 0
      %v2596 = vsel %vm2552, %v2529, 0
      %v2599 = vsel %vm2552, %v2544, 0
      %vm2601 = vcmask 1043456
      %v2603 = vsel %vm2601, %v2547, 0
      %2605 = vmatpush.msra.mxu0 0.0
      %2606 = vmatpush.msra.mxu0 0.0
      %2607 = vmatpush.msra.mxu0 0.0
      %2608 = vmatpush.msra.mxu0 0.0
      %2609 = vmatpush.msra.mxu0 0.0
      %2610 = vmatpush.msra.mxu0 0.0
      %2611 = vmatpush.msra.mxu0 0.0
      %2612 = vmatpush.msra.mxu0 0.0
      %2613 = vmatpush.msra.mxu0 0.0
      %2614 = vmatpush.msra.mxu0 0.0
      %2615 = vmatpush.msra.mxu0 0.0
      %2616 = vmatpush.msra.mxu0 0.0
      %2617 = vmatpush.msra.mxu0 0.0
      %2618 = vmatpush.msra.mxu0 %v2603
      %2619 = vmatpush.msra.mxu0 %v2546
      %2620 = vmatpush.msra.mxu0 %v2545
      %2621 = vmatmul.f32.gmra.mxu0 %v2554
      %v2622 = vpop.f32.mrf.mxu0
      %v2623 = vadd.f32 %v2550, %v2622
      %2624 = vmatmul.f32.gmra.mxu0 %v2557
      %v2625 = vpop.f32.mrf.mxu0
      %v2626 = vadd.f32 %v2550, %v2625
      %2627 = vmatmul.f32.gmra.mxu0 %v2560
      %v2628 = vpop.f32.mrf.mxu0
      %v2629 = vadd.f32 %v2550, %v2628
      %2630 = vmatmul.f32.gmra.mxu0 %v2563
      %v2631 = vpop.f32.mrf.mxu0
      %v2632 = vadd.f32 %v2550, %v2631
      %2633 = vmatmul.f32.gmra.mxu0 %v2566
      %v2634 = vpop.f32.mrf.mxu0
      %v2635 = vadd.f32 %v2550, %v2634
      %2636 = vmatmul.f32.gmra.mxu0 %v2569
      %v2637 = vpop.f32.mrf.mxu0
      %v2638 = vadd.f32 %v2550, %v2637
      %2639 = vmatmul.f32.gmra.mxu0 %v2572
      %v2640 = vpop.f32.mrf.mxu0
      %v2641 = vadd.f32 %v2550, %v2640
      %2642 = vmatmul.f32.gmra.mxu0 %v2575
      %v2643 = vpop.f32.mrf.mxu0
      %v2644 = vadd.f32 %v2550, %v2643
      %2645 = vmatmul.f32.gmra.mxu0 %v2578
      %v2646 = vpop.f32.mrf.mxu0
      %v2647 = vadd.f32 %v2550, %v2646
      %2648 = vmatmul.f32.gmra.mxu0 %v2581
      %v2649 = vpop.f32.mrf.mxu0
      %v2650 = vadd.f32 %v2550, %v2649
      %2651 = vmatmul.f32.gmra.mxu0 %v2584
      %v2652 = vpop.f32.mrf.mxu0
      %v2653 = vadd.f32 %v2550, %v2652
      %2654 = vmatmul.f32.gmra.mxu0 %v2587
      %v2655 = vpop.f32.mrf.mxu0
      %v2656 = vadd.f32 %v2550, %v2655
      %2657 = vmatmul.f32.gmra.mxu0 %v2590
      %v2658 = vpop.f32.mrf.mxu0
      %v2659 = vadd.f32 %v2550, %v2658
      %2660 = vmatmul.f32.gmra.mxu0 %v2593
      %v2661 = vpop.f32.mrf.mxu0
      %v2662 = vadd.f32 %v2550, %v2661
      %2663 = vmatmul.f32.gmra.mxu0 %v2596
      %v2664 = vpop.f32.mrf.mxu0
      %v2665 = vadd.f32 %v2550, %v2664
      %2666 = vmatmul.f32.gmra.mxu0 %v2599
      %v2667 = vpop.f32.mrf.mxu0
      %v2668 = vadd.f32 %v2550, %v2667
      %2669 = vdwg.mxu0
      %v2670 = vxor.u32 %v2623, 2147483648
      %v2671 = vxor.u32 %v2626, 2147483648
      %v2672 = vxor.u32 %v2629, 2147483648
      %v2673 = vxor.u32 %v2632, 2147483648
      %v2674 = vxor.u32 %v2635, 2147483648
      %v2675 = vxor.u32 %v2638, 2147483648
      %v2676 = vxor.u32 %v2641, 2147483648
      %v2677 = vxor.u32 %v2644, 2147483648
      %v2678 = vxor.u32 %v2647, 2147483648
      %v2679 = vxor.u32 %v2650, 2147483648
      %v2680 = vxor.u32 %v2653, 2147483648
      %v2681 = vxor.u32 %v2656, 2147483648
      %v2682 = vxor.u32 %v2659, 2147483648
      %v2683 = vxor.u32 %v2662, 2147483648
      %v2684 = vxor.u32 %v2665, 2147483648
      %v2685 = vxor.u32 %v2668, 2147483648
      %v2686 = vmul.f32 %v2670, 1.442695
      %v2687 = vpow.pop %v2686
      %v2688 = vmul.f32 %v2671, 1.442695
      %v2689 = vpow.pop %v2688
      %v2690 = vmul.f32 %v2672, 1.442695
      %v2691 = vpow.pop %v2690
      %v2692 = vmul.f32 %v2673, 1.442695
      %v2693 = vpow.pop %v2692
      %v2694 = vmul.f32 %v2674, 1.442695
      %v2695 = vpow.pop %v2694
      %v2696 = vmul.f32 %v2675, 1.442695
      %v2697 = vpow.pop %v2696
      %v2698 = vmul.f32 %v2676, 1.442695
      %v2699 = vpow.pop %v2698
      %v2700 = vmul.f32 %v2677, 1.442695
      %v2701 = vpow.pop %v2700
      %v2702 = vmul.f32 %v2678, 1.442695
      %v2703 = vpow.pop %v2702
      %v2704 = vmul.f32 %v2679, 1.442695
      %v2705 = vpow.pop %v2704
      %v2706 = vmul.f32 %v2680, 1.442695
      %v2707 = vpow.pop %v2706
      %v2708 = vmul.f32 %v2681, 1.442695
      %v2709 = vpow.pop %v2708
      %v2710 = vmul.f32 %v2682, 1.442695
      %v2711 = vpow.pop %v2710
      %v2712 = vmul.f32 %v2683, 1.442695
      %v2713 = vpow.pop %v2712
      %v2714 = vmul.f32 %v2684, 1.442695
      %v2715 = vpow.pop %v2714
      %v2716 = vmul.f32 %v2685, 1.442695
      %v2717 = vpow.pop %v2716
      %v2718 = vadd.f32 %v2687, 1.0
      %v2719 = vadd.f32 %v2689, 1.0
      %v2720 = vadd.f32 %v2691, 1.0
      %v2721 = vadd.f32 %v2693, 1.0
      %v2722 = vadd.f32 %v2695, 1.0
      %v2723 = vadd.f32 %v2697, 1.0
      %v2724 = vadd.f32 %v2699, 1.0
      %v2725 = vadd.f32 %v2701, 1.0
      %v2726 = vadd.f32 %v2703, 1.0
      %v2727 = vadd.f32 %v2705, 1.0
      %v2728 = vadd.f32 %v2707, 1.0
      %v2729 = vadd.f32 %v2709, 1.0
      %v2730 = vadd.f32 %v2711, 1.0
      %v2731 = vadd.f32 %v2713, 1.0
      %v2732 = vadd.f32 %v2715, 1.0
      %v2733 = vadd.f32 %v2717, 1.0
      %v2734 = vrcp.pop %v2718
      %v2735 = vmul.f32 %v2718, %v2734
      %v2736 = vsub.f32 1.0, %v2735
      %v2737 = vmul.f32 %v2734, %v2736
      %v2738 = vadd.f32 %v2734, %v2737
      %vm2739 = vweird.f32 %v2718
      %vm2740 = vweird.f32 %v2734
      %vm2741 = vmor %vm2739, %vm2740
      %v2742 = vsel %vm2741, %v2734, %v2738
      %v2743 = vand.u32 2147483647, %v2718
      %vm2744 = vcmp.eq.f32.partialorder %v2743, 8.507059e+37
      %v2745 = vand.u32 %v2718, 2147483648
      %v2746 = vor.u32 1.1754944e-38, %v2745
      %v2747 = vsel %vm2744, %v2746, %v2742
      %v2748 = vmul.f32 1.0, %v2747
      %v2749 = vrcp.pop %v2719
      %v2750 = vmul.f32 %v2719, %v2749
      %v2751 = vsub.f32 1.0, %v2750
      %v2752 = vmul.f32 %v2749, %v2751
      %v2753 = vadd.f32 %v2749, %v2752
      %vm2754 = vweird.f32 %v2719
      %vm2755 = vweird.f32 %v2749
      %vm2756 = vmor %vm2754, %vm2755
      %v2757 = vsel %vm2756, %v2749, %v2753
      %v2758 = vand.u32 2147483647, %v2719
      %vm2759 = vcmp.eq.f32.partialorder %v2758, 8.507059e+37
      %v2760 = vand.u32 %v2719, 2147483648
      %v2761 = vor.u32 1.1754944e-38, %v2760
      %v2762 = vsel %vm2759, %v2761, %v2757
      %v2763 = vmul.f32 1.0, %v2762
      %v2764 = vrcp.pop %v2720
      %v2765 = vmul.f32 %v2720, %v2764
      %v2766 = vsub.f32 1.0, %v2765
      %v2767 = vmul.f32 %v2764, %v2766
      %v2768 = vadd.f32 %v2764, %v2767
      %vm2769 = vweird.f32 %v2720
      %vm2770 = vweird.f32 %v2764
      %vm2771 = vmor %vm2769, %vm2770
      %v2772 = vsel %vm2771, %v2764, %v2768
      %v2773 = vand.u32 2147483647, %v2720
      %vm2774 = vcmp.eq.f32.partialorder %v2773, 8.507059e+37
      %v2775 = vand.u32 %v2720, 2147483648
      %v2776 = vor.u32 1.1754944e-38, %v2775
      %v2777 = vsel %vm2774, %v2776, %v2772
      %v2778 = vmul.f32 1.0, %v2777
      %v2779 = vrcp.pop %v2721
      %v2780 = vmul.f32 %v2721, %v2779
      %v2781 = vsub.f32 1.0, %v2780
      %v2782 = vmul.f32 %v2779, %v2781
      %v2783 = vadd.f32 %v2779, %v2782
      %vm2784 = vweird.f32 %v2721
      %vm2785 = vweird.f32 %v2779
      %vm2786 = vmor %vm2784, %vm2785
      %v2787 = vsel %vm2786, %v2779, %v2783
      %v2788 = vand.u32 2147483647, %v2721
      %vm2789 = vcmp.eq.f32.partialorder %v2788, 8.507059e+37
      %v2790 = vand.u32 %v2721, 2147483648
      %v2791 = vor.u32 1.1754944e-38, %v2790
      %v2792 = vsel %vm2789, %v2791, %v2787
      %v2793 = vmul.f32 1.0, %v2792
      %v2794 = vrcp.pop %v2722
      %v2795 = vmul.f32 %v2722, %v2794
      %v2796 = vsub.f32 1.0, %v2795
      %v2797 = vmul.f32 %v2794, %v2796
      %v2798 = vadd.f32 %v2794, %v2797
      %vm2799 = vweird.f32 %v2722
      %vm2800 = vweird.f32 %v2794
      %vm2801 = vmor %vm2799, %vm2800
      %v2802 = vsel %vm2801, %v2794, %v2798
      %v2803 = vand.u32 2147483647, %v2722
      %vm2804 = vcmp.eq.f32.partialorder %v2803, 8.507059e+37
      %v2805 = vand.u32 %v2722, 2147483648
      %v2806 = vor.u32 1.1754944e-38, %v2805
      %v2807 = vsel %vm2804, %v2806, %v2802
      %v2808 = vmul.f32 1.0, %v2807
      %v2809 = vrcp.pop %v2723
      %v2810 = vmul.f32 %v2723, %v2809
      %v2811 = vsub.f32 1.0, %v2810
      %v2812 = vmul.f32 %v2809, %v2811
      %v2813 = vadd.f32 %v2809, %v2812
      %vm2814 = vweird.f32 %v2723
      %vm2815 = vweird.f32 %v2809
      %vm2816 = vmor %vm2814, %vm2815
      %v2817 = vsel %vm2816, %v2809, %v2813
      %v2818 = vand.u32 2147483647, %v2723
      %vm2819 = vcmp.eq.f32.partialorder %v2818, 8.507059e+37
      %v2820 = vand.u32 %v2723, 2147483648
      %v2821 = vor.u32 1.1754944e-38, %v2820
      %v2822 = vsel %vm2819, %v2821, %v2817
      %v2823 = vmul.f32 1.0, %v2822
      %v2824 = vrcp.pop %v2724
      %v2825 = vmul.f32 %v2724, %v2824
      %v2826 = vsub.f32 1.0, %v2825
      %v2827 = vmul.f32 %v2824, %v2826
      %v2828 = vadd.f32 %v2824, %v2827
      %vm2829 = vweird.f32 %v2724
      %vm2830 = vweird.f32 %v2824
      %vm2831 = vmor %vm2829, %vm2830
      %v2832 = vsel %vm2831, %v2824, %v2828
      %v2833 = vand.u32 2147483647, %v2724
      %vm2834 = vcmp.eq.f32.partialorder %v2833, 8.507059e+37
      %v2835 = vand.u32 %v2724, 2147483648
      %v2836 = vor.u32 1.1754944e-38, %v2835
      %v2837 = vsel %vm2834, %v2836, %v2832
      %v2838 = vmul.f32 1.0, %v2837
      %v2839 = vrcp.pop %v2725
      %v2840 = vmul.f32 %v2725, %v2839
      %v2841 = vsub.f32 1.0, %v2840
      %v2842 = vmul.f32 %v2839, %v2841
      %v2843 = vadd.f32 %v2839, %v2842
      %vm2844 = vweird.f32 %v2725
      %vm2845 = vweird.f32 %v2839
      %vm2846 = vmor %vm2844, %vm2845
      %v2847 = vsel %vm2846, %v2839, %v2843
      %v2848 = vand.u32 2147483647, %v2725
      %vm2849 = vcmp.eq.f32.partialorder %v2848, 8.507059e+37
      %v2850 = vand.u32 %v2725, 2147483648
      %v2851 = vor.u32 1.1754944e-38, %v2850
      %v2852 = vsel %vm2849, %v2851, %v2847
      %v2853 = vmul.f32 1.0, %v2852
      %v2854 = vrcp.pop %v2726
      %v2855 = vmul.f32 %v2726, %v2854
      %v2856 = vsub.f32 1.0, %v2855
      %v2857 = vmul.f32 %v2854, %v2856
      %v2858 = vadd.f32 %v2854, %v2857
      %vm2859 = vweird.f32 %v2726
      %vm2860 = vweird.f32 %v2854
      %vm2861 = vmor %vm2859, %vm2860
      %v2862 = vsel %vm2861, %v2854, %v2858
      %v2863 = vand.u32 2147483647, %v2726
      %vm2864 = vcmp.eq.f32.partialorder %v2863, 8.507059e+37
      %v2865 = vand.u32 %v2726, 2147483648
      %v2866 = vor.u32 1.1754944e-38, %v2865
      %v2867 = vsel %vm2864, %v2866, %v2862
      %v2868 = vmul.f32 1.0, %v2867
      %v2869 = vrcp.pop %v2727
      %v2870 = vmul.f32 %v2727, %v2869
      %v2871 = vsub.f32 1.0, %v2870
      %v2872 = vmul.f32 %v2869, %v2871
      %v2873 = vadd.f32 %v2869, %v2872
      %vm2874 = vweird.f32 %v2727
      %vm2875 = vweird.f32 %v2869
      %vm2876 = vmor %vm2874, %vm2875
      %v2877 = vsel %vm2876, %v2869, %v2873
      %v2878 = vand.u32 2147483647, %v2727
      %vm2879 = vcmp.eq.f32.partialorder %v2878, 8.507059e+37
      %v2880 = vand.u32 %v2727, 2147483648
      %v2881 = vor.u32 1.1754944e-38, %v2880
      %v2882 = vsel %vm2879, %v2881, %v2877
      %v2883 = vmul.f32 1.0, %v2882
      %v2884 = vrcp.pop %v2728
      %v2885 = vmul.f32 %v2728, %v2884
      %v2886 = vsub.f32 1.0, %v2885
      %v2887 = vmul.f32 %v2884, %v2886
      %v2888 = vadd.f32 %v2884, %v2887
      %vm2889 = vweird.f32 %v2728
      %vm2890 = vweird.f32 %v2884
      %vm2891 = vmor %vm2889, %vm2890
      %v2892 = vsel %vm2891, %v2884, %v2888
      %v2893 = vand.u32 2147483647, %v2728
      %vm2894 = vcmp.eq.f32.partialorder %v2893, 8.507059e+37
      %v2895 = vand.u32 %v2728, 2147483648
      %v2896 = vor.u32 1.1754944e-38, %v2895
      %v2897 = vsel %vm2894, %v2896, %v2892
      %v2898 = vmul.f32 1.0, %v2897
      %v2899 = vrcp.pop %v2729
      %v2900 = vmul.f32 %v2729, %v2899
      %v2901 = vsub.f32 1.0, %v2900
      %v2902 = vmul.f32 %v2899, %v2901
      %v2903 = vadd.f32 %v2899, %v2902
      %vm2904 = vweird.f32 %v2729
      %vm2905 = vweird.f32 %v2899
      %vm2906 = vmor %vm2904, %vm2905
      %v2907 = vsel %vm2906, %v2899, %v2903
      %v2908 = vand.u32 2147483647, %v2729
      %vm2909 = vcmp.eq.f32.partialorder %v2908, 8.507059e+37
      %v2910 = vand.u32 %v2729, 2147483648
      %v2911 = vor.u32 1.1754944e-38, %v2910
      %v2912 = vsel %vm2909, %v2911, %v2907
      %v2913 = vmul.f32 1.0, %v2912
      %v2914 = vrcp.pop %v2730
      %v2915 = vmul.f32 %v2730, %v2914
      %v2916 = vsub.f32 1.0, %v2915
      %v2917 = vmul.f32 %v2914, %v2916
      %v2918 = vadd.f32 %v2914, %v2917
      %vm2919 = vweird.f32 %v2730
      %vm2920 = vweird.f32 %v2914
      %vm2921 = vmor %vm2919, %vm2920
      %v2922 = vsel %vm2921, %v2914, %v2918
      %v2923 = vand.u32 2147483647, %v2730
      %vm2924 = vcmp.eq.f32.partialorder %v2923, 8.507059e+37
      %v2925 = vand.u32 %v2730, 2147483648
      %v2926 = vor.u32 1.1754944e-38, %v2925
      %v2927 = vsel %vm2924, %v2926, %v2922
      %v2928 = vmul.f32 1.0, %v2927
      %v2929 = vrcp.pop %v2731
      %v2930 = vmul.f32 %v2731, %v2929
      %v2931 = vsub.f32 1.0, %v2930
      %v2932 = vmul.f32 %v2929, %v2931
      %v2933 = vadd.f32 %v2929, %v2932
      %vm2934 = vweird.f32 %v2731
      %vm2935 = vweird.f32 %v2929
      %vm2936 = vmor %vm2934, %vm2935
      %v2937 = vsel %vm2936, %v2929, %v2933
      %v2938 = vand.u32 2147483647, %v2731
      %vm2939 = vcmp.eq.f32.partialorder %v2938, 8.507059e+37
      %v2940 = vand.u32 %v2731, 2147483648
      %v2941 = vor.u32 1.1754944e-38, %v2940
      %v2942 = vsel %vm2939, %v2941, %v2937
      %v2943 = vmul.f32 1.0, %v2942
      %v2944 = vrcp.pop %v2732
      %v2945 = vmul.f32 %v2732, %v2944
      %v2946 = vsub.f32 1.0, %v2945
      %v2947 = vmul.f32 %v2944, %v2946
      %v2948 = vadd.f32 %v2944, %v2947
      %vm2949 = vweird.f32 %v2732
      %vm2950 = vweird.f32 %v2944
      %vm2951 = vmor %vm2949, %vm2950
      %v2952 = vsel %vm2951, %v2944, %v2948
      %v2953 = vand.u32 2147483647, %v2732
      %vm2954 = vcmp.eq.f32.partialorder %v2953, 8.507059e+37
      %v2955 = vand.u32 %v2732, 2147483648
      %v2956 = vor.u32 1.1754944e-38, %v2955
      %v2957 = vsel %vm2954, %v2956, %v2952
      %v2958 = vmul.f32 1.0, %v2957
      %v2959 = vrcp.pop %v2733
      %v2960 = vmul.f32 %v2733, %v2959
      %v2961 = vsub.f32 1.0, %v2960
      %v2962 = vmul.f32 %v2959, %v2961
      %v2963 = vadd.f32 %v2959, %v2962
      %vm2964 = vweird.f32 %v2733
      %vm2965 = vweird.f32 %v2959
      %vm2966 = vmor %vm2964, %vm2965
      %v2967 = vsel %vm2966, %v2959, %v2963
      %v2968 = vand.u32 2147483647, %v2733
      %vm2969 = vcmp.eq.f32.partialorder %v2968, 8.507059e+37
      %v2970 = vand.u32 %v2733, 2147483648
      %v2971 = vor.u32 1.1754944e-38, %v2970
      %v2972 = vsel %vm2969, %v2971, %v2967
      %v2973 = vmul.f32 1.0, %v2972
      %v2974 = vld [vmem:[%s5] sm:$0xff]
      %v2975 = vld [vmem:[%s5 + $0x8] sm:$0x3]
      %v2976 = vld [vmem:[%s6] sm:$0x1]
      %v2978 = vperm.slane %v2976, 0
      %vm2980 = vcmask 80896
      %v2982 = vsel %vm2980, %v2748, 0
      %v2985 = vsel %vm2980, %v2763, 0
      %v2988 = vsel %vm2980, %v2778, 0
      %v2991 = vsel %vm2980, %v2793, 0
      %v2994 = vsel %vm2980, %v2808, 0
      %v2997 = vsel %vm2980, %v2823, 0
      %v3000 = vsel %vm2980, %v2838, 0
      %v3003 = vsel %vm2980, %v2853, 0
      %v3006 = vsel %vm2980, %v2868, 0
      %v3009 = vsel %vm2980, %v2883, 0
      %v3012 = vsel %vm2980, %v2898, 0
      %v3015 = vsel %vm2980, %v2913, 0
      %v3018 = vsel %vm2980, %v2928, 0
      %v3021 = vsel %vm2980, %v2943, 0
      %v3024 = vsel %vm2980, %v2958, 0
      %v3027 = vsel %vm2980, %v2973, 0
      %vm3029 = vcmask 1041408
      %v3031 = vsel %vm3029, %v2975, 0
      %3033 = vmatpush.msra.mxu0 0.0
      %3034 = vmatpush.msra.mxu0 0.0
      %3035 = vmatpush.msra.mxu0 0.0
      %3036 = vmatpush.msra.mxu0 0.0
      %3037 = vmatpush.msra.mxu0 0.0
      %3038 = vmatpush.msra.mxu0 0.0
      %3039 = vmatpush.msra.mxu0 0.0
      %3040 = vmatpush.msra.mxu0 0.0
      %3041 = vmatpush.msra.mxu0 0.0
      %3042 = vmatpush.msra.mxu0 0.0
      %3043 = vmatpush.msra.mxu0 0.0
      %3044 = vmatpush.msra.mxu0 0.0
      %3045 = vmatpush.msra.mxu0 0.0
      %3046 = vmatpush.msra.mxu0 0.0
      %3047 = vmatpush.msra.mxu0 %v3031
      %3048 = vmatpush.msra.mxu0 %v2974
      %3049 = vmatmul.f32.gmra.mxu0 %v2982
      %v3050 = vpop.f32.mrf.mxu0
      %v3051 = vadd.f32 %v2978, %v3050
      %3052 = vmatmul.f32.gmra.mxu0 %v2985
      %v3053 = vpop.f32.mrf.mxu0
      %v3054 = vadd.f32 %v2978, %v3053
      %3055 = vmatmul.f32.gmra.mxu0 %v2988
      %v3056 = vpop.f32.mrf.mxu0
      %v3057 = vadd.f32 %v2978, %v3056
      %3058 = vmatmul.f32.gmra.mxu0 %v2991
      %v3059 = vpop.f32.mrf.mxu0
      %v3060 = vadd.f32 %v2978, %v3059
      %3061 = vmatmul.f32.gmra.mxu0 %v2994
      %v3062 = vpop.f32.mrf.mxu0
      %v3063 = vadd.f32 %v2978, %v3062
      %3064 = vmatmul.f32.gmra.mxu0 %v2997
      %v3065 = vpop.f32.mrf.mxu0
      %v3066 = vadd.f32 %v2978, %v3065
      %3067 = vmatmul.f32.gmra.mxu0 %v3000
      %v3068 = vpop.f32.mrf.mxu0
      %v3069 = vadd.f32 %v2978, %v3068
      %3070 = vmatmul.f32.gmra.mxu0 %v3003
      %v3071 = vpop.f32.mrf.mxu0
      %v3072 = vadd.f32 %v2978, %v3071
      %3073 = vmatmul.f32.gmra.mxu0 %v3006
      %v3074 = vpop.f32.mrf.mxu0
      %v3075 = vadd.f32 %v2978, %v3074
      %3076 = vmatmul.f32.gmra.mxu0 %v3009
      %v3077 = vpop.f32.mrf.mxu0
      %v3078 = vadd.f32 %v2978, %v3077
      %3079 = vmatmul.f32.gmra.mxu0 %v3012
      %v3080 = vpop.f32.mrf.mxu0
      %v3081 = vadd.f32 %v2978, %v3080
      %3082 = vmatmul.f32.gmra.mxu0 %v3015
      %v3083 = vpop.f32.mrf.mxu0
      %v3084 = vadd.f32 %v2978, %v3083
      %3085 = vmatmul.f32.gmra.mxu0 %v3018
      %v3086 = vpop.f32.mrf.mxu0
      %v3087 = vadd.f32 %v2978, %v3086
      %3088 = vmatmul.f32.gmra.mxu0 %v3021
      %v3089 = vpop.f32.mrf.mxu0
      %v3090 = vadd.f32 %v2978, %v3089
      %3091 = vmatmul.f32.gmra.mxu0 %v3024
      %v3092 = vpop.f32.mrf.mxu0
      %v3093 = vadd.f32 %v2978, %v3092
      %3094 = vmatmul.f32.gmra.mxu0 %v3027
      %v3095 = vpop.f32.mrf.mxu0
      %v3096 = vadd.f32 %v2978, %v3095
      %3097 = vdwg.mxu0
      %v3098 = vxor.u32 %v3051, 2147483648
      %v3099 = vxor.u32 %v3054, 2147483648
      %v3100 = vxor.u32 %v3057, 2147483648
      %v3101 = vxor.u32 %v3060, 2147483648
      %v3102 = vxor.u32 %v3063, 2147483648
      %v3103 = vxor.u32 %v3066, 2147483648
      %v3104 = vxor.u32 %v3069, 2147483648
      %v3105 = vxor.u32 %v3072, 2147483648
      %v3106 = vxor.u32 %v3075, 2147483648
      %v3107 = vxor.u32 %v3078, 2147483648
      %v3108 = vxor.u32 %v3081, 2147483648
      %v3109 = vxor.u32 %v3084, 2147483648
      %v3110 = vxor.u32 %v3087, 2147483648
      %v3111 = vxor.u32 %v3090, 2147483648
      %v3112 = vxor.u32 %v3093, 2147483648
      %v3113 = vxor.u32 %v3096, 2147483648
      %v3114 = vmul.f32 %v3098, 1.442695
      %v3115 = vpow.pop %v3114
      %v3116 = vmul.f32 %v3099, 1.442695
      %v3117 = vpow.pop %v3116
      %v3118 = vmul.f32 %v3100, 1.442695
      %v3119 = vpow.pop %v3118
      %v3120 = vmul.f32 %v3101, 1.442695
      %v3121 = vpow.pop %v3120
      %v3122 = vmul.f32 %v3102, 1.442695
      %v3123 = vpow.pop %v3122
      %v3124 = vmul.f32 %v3103, 1.442695
      %v3125 = vpow.pop %v3124
      %v3126 = vmul.f32 %v3104, 1.442695
      %v3127 = vpow.pop %v3126
      %v3128 = vmul.f32 %v3105, 1.442695
      %v3129 = vpow.pop %v3128
      %v3130 = vmul.f32 %v3106, 1.442695
      %v3131 = vpow.pop %v3130
      %v3132 = vmul.f32 %v3107, 1.442695
      %v3133 = vpow.pop %v3132
      %v3134 = vmul.f32 %v3108, 1.442695
      %v3135 = vpow.pop %v3134
      %v3136 = vmul.f32 %v3109, 1.442695
      %v3137 = vpow.pop %v3136
      %v3138 = vmul.f32 %v3110, 1.442695
      %v3139 = vpow.pop %v3138
      %v3140 = vmul.f32 %v3111, 1.442695
      %v3141 = vpow.pop %v3140
      %v3142 = vmul.f32 %v3112, 1.442695
      %v3143 = vpow.pop %v3142
      %v3144 = vmul.f32 %v3113, 1.442695
      %v3145 = vpow.pop %v3144
      %v3146 = vadd.f32 %v3115, 1.0
      %v3147 = vadd.f32 %v3117, 1.0
      %v3148 = vadd.f32 %v3119, 1.0
      %v3149 = vadd.f32 %v3121, 1.0
      %v3150 = vadd.f32 %v3123, 1.0
      %v3151 = vadd.f32 %v3125, 1.0
      %v3152 = vadd.f32 %v3127, 1.0
      %v3153 = vadd.f32 %v3129, 1.0
      %v3154 = vadd.f32 %v3131, 1.0
      %v3155 = vadd.f32 %v3133, 1.0
      %v3156 = vadd.f32 %v3135, 1.0
      %v3157 = vadd.f32 %v3137, 1.0
      %v3158 = vadd.f32 %v3139, 1.0
      %v3159 = vadd.f32 %v3141, 1.0
      %v3160 = vadd.f32 %v3143, 1.0
      %v3161 = vadd.f32 %v3145, 1.0
      %v3162 = vrcp.pop %v3146
      %v3163 = vmul.f32 %v3146, %v3162
      %v3164 = vsub.f32 1.0, %v3163
      %v3165 = vmul.f32 %v3162, %v3164
      %v3166 = vadd.f32 %v3162, %v3165
      %vm3167 = vweird.f32 %v3146
      %vm3168 = vweird.f32 %v3162
      %vm3169 = vmor %vm3167, %vm3168
      %v3170 = vsel %vm3169, %v3162, %v3166
      %v3171 = vand.u32 2147483647, %v3146
      %vm3172 = vcmp.eq.f32.partialorder %v3171, 8.507059e+37
      %v3173 = vand.u32 %v3146, 2147483648
      %v3174 = vor.u32 1.1754944e-38, %v3173
      %v3175 = vsel %vm3172, %v3174, %v3170
      %v3176 = vmul.f32 1.0, %v3175
      %v3177 = vrcp.pop %v3147
      %v3178 = vmul.f32 %v3147, %v3177
      %v3179 = vsub.f32 1.0, %v3178
      %v3180 = vmul.f32 %v3177, %v3179
      %v3181 = vadd.f32 %v3177, %v3180
      %vm3182 = vweird.f32 %v3147
      %vm3183 = vweird.f32 %v3177
      %vm3184 = vmor %vm3182, %vm3183
      %v3185 = vsel %vm3184, %v3177, %v3181
      %v3186 = vand.u32 2147483647, %v3147
      %vm3187 = vcmp.eq.f32.partialorder %v3186, 8.507059e+37
      %v3188 = vand.u32 %v3147, 2147483648
      %v3189 = vor.u32 1.1754944e-38, %v3188
      %v3190 = vsel %vm3187, %v3189, %v3185
      %v3191 = vmul.f32 1.0, %v3190
      %v3192 = vrcp.pop %v3148
      %v3193 = vmul.f32 %v3148, %v3192
      %v3194 = vsub.f32 1.0, %v3193
      %v3195 = vmul.f32 %v3192, %v3194
      %v3196 = vadd.f32 %v3192, %v3195
      %vm3197 = vweird.f32 %v3148
      %vm3198 = vweird.f32 %v3192
      %vm3199 = vmor %vm3197, %vm3198
      %v3200 = vsel %vm3199, %v3192, %v3196
      %v3201 = vand.u32 2147483647, %v3148
      %vm3202 = vcmp.eq.f32.partialorder %v3201, 8.507059e+37
      %v3203 = vand.u32 %v3148, 2147483648
      %v3204 = vor.u32 1.1754944e-38, %v3203
      %v3205 = vsel %vm3202, %v3204, %v3200
      %v3206 = vmul.f32 1.0, %v3205
      %v3207 = vrcp.pop %v3149
      %v3208 = vmul.f32 %v3149, %v3207
      %v3209 = vsub.f32 1.0, %v3208
      %v3210 = vmul.f32 %v3207, %v3209
      %v3211 = vadd.f32 %v3207, %v3210
      %vm3212 = vweird.f32 %v3149
      %vm3213 = vweird.f32 %v3207
      %vm3214 = vmor %vm3212, %vm3213
      %v3215 = vsel %vm3214, %v3207, %v3211
      %v3216 = vand.u32 2147483647, %v3149
      %vm3217 = vcmp.eq.f32.partialorder %v3216, 8.507059e+37
      %v3218 = vand.u32 %v3149, 2147483648
      %v3219 = vor.u32 1.1754944e-38, %v3218
      %v3220 = vsel %vm3217, %v3219, %v3215
      %v3221 = vmul.f32 1.0, %v3220
      %v3222 = vrcp.pop %v3150
      %v3223 = vmul.f32 %v3150, %v3222
      %v3224 = vsub.f32 1.0, %v3223
      %v3225 = vmul.f32 %v3222, %v3224
      %v3226 = vadd.f32 %v3222, %v3225
      %vm3227 = vweird.f32 %v3150
      %vm3228 = vweird.f32 %v3222
      %vm3229 = vmor %vm3227, %vm3228
      %v3230 = vsel %vm3229, %v3222, %v3226
      %v3231 = vand.u32 2147483647, %v3150
      %vm3232 = vcmp.eq.f32.partialorder %v3231, 8.507059e+37
      %v3233 = vand.u32 %v3150, 2147483648
      %v3234 = vor.u32 1.1754944e-38, %v3233
      %v3235 = vsel %vm3232, %v3234, %v3230
      %v3236 = vmul.f32 1.0, %v3235
      %v3237 = vrcp.pop %v3151
      %v3238 = vmul.f32 %v3151, %v3237
      %v3239 = vsub.f32 1.0, %v3238
      %v3240 = vmul.f32 %v3237, %v3239
      %v3241 = vadd.f32 %v3237, %v3240
      %vm3242 = vweird.f32 %v3151
      %vm3243 = vweird.f32 %v3237
      %vm3244 = vmor %vm3242, %vm3243
      %v3245 = vsel %vm3244, %v3237, %v3241
      %v3246 = vand.u32 2147483647, %v3151
      %vm3247 = vcmp.eq.f32.partialorder %v3246, 8.507059e+37
      %v3248 = vand.u32 %v3151, 2147483648
      %v3249 = vor.u32 1.1754944e-38, %v3248
      %v3250 = vsel %vm3247, %v3249, %v3245
      %v3251 = vmul.f32 1.0, %v3250
      %v3252 = vrcp.pop %v3152
      %v3253 = vmul.f32 %v3152, %v3252
      %v3254 = vsub.f32 1.0, %v3253
      %v3255 = vmul.f32 %v3252, %v3254
      %v3256 = vadd.f32 %v3252, %v3255
      %vm3257 = vweird.f32 %v3152
      %vm3258 = vweird.f32 %v3252
      %vm3259 = vmor %vm3257, %vm3258
      %v3260 = vsel %vm3259, %v3252, %v3256
      %v3261 = vand.u32 2147483647, %v3152
      %vm3262 = vcmp.eq.f32.partialorder %v3261, 8.507059e+37
      %v3263 = vand.u32 %v3152, 2147483648
      %v3264 = vor.u32 1.1754944e-38, %v3263
      %v3265 = vsel %vm3262, %v3264, %v3260
      %v3266 = vmul.f32 1.0, %v3265
      %v3267 = vrcp.pop %v3153
      %v3268 = vmul.f32 %v3153, %v3267
      %v3269 = vsub.f32 1.0, %v3268
      %v3270 = vmul.f32 %v3267, %v3269
      %v3271 = vadd.f32 %v3267, %v3270
      %vm3272 = vweird.f32 %v3153
      %vm3273 = vweird.f32 %v3267
      %vm3274 = vmor %vm3272, %vm3273
      %v3275 = vsel %vm3274, %v3267, %v3271
      %v3276 = vand.u32 2147483647, %v3153
      %vm3277 = vcmp.eq.f32.partialorder %v3276, 8.507059e+37
      %v3278 = vand.u32 %v3153, 2147483648
      %v3279 = vor.u32 1.1754944e-38, %v3278
      %v3280 = vsel %vm3277, %v3279, %v3275
      %v3281 = vmul.f32 1.0, %v3280
      %v3282 = vrcp.pop %v3154
      %v3283 = vmul.f32 %v3154, %v3282
      %v3284 = vsub.f32 1.0, %v3283
      %v3285 = vmul.f32 %v3282, %v3284
      %v3286 = vadd.f32 %v3282, %v3285
      %vm3287 = vweird.f32 %v3154
      %vm3288 = vweird.f32 %v3282
      %vm3289 = vmor %vm3287, %vm3288
      %v3290 = vsel %vm3289, %v3282, %v3286
      %v3291 = vand.u32 2147483647, %v3154
      %vm3292 = vcmp.eq.f32.partialorder %v3291, 8.507059e+37
      %v3293 = vand.u32 %v3154, 2147483648
      %v3294 = vor.u32 1.1754944e-38, %v3293
      %v3295 = vsel %vm3292, %v3294, %v3290
      %v3296 = vmul.f32 1.0, %v3295
      %v3297 = vrcp.pop %v3155
      %v3298 = vmul.f32 %v3155, %v3297
      %v3299 = vsub.f32 1.0, %v3298
      %v3300 = vmul.f32 %v3297, %v3299
      %v3301 = vadd.f32 %v3297, %v3300
      %vm3302 = vweird.f32 %v3155
      %vm3303 = vweird.f32 %v3297
      %vm3304 = vmor %vm3302, %vm3303
      %v3305 = vsel %vm3304, %v3297, %v3301
      %v3306 = vand.u32 2147483647, %v3155
      %vm3307 = vcmp.eq.f32.partialorder %v3306, 8.507059e+37
      %v3308 = vand.u32 %v3155, 2147483648
      %v3309 = vor.u32 1.1754944e-38, %v3308
      %v3310 = vsel %vm3307, %v3309, %v3305
      %v3311 = vmul.f32 1.0, %v3310
      %v3312 = vrcp.pop %v3156
      %v3313 = vmul.f32 %v3156, %v3312
      %v3314 = vsub.f32 1.0, %v3313
      %v3315 = vmul.f32 %v3312, %v3314
      %v3316 = vadd.f32 %v3312, %v3315
      %vm3317 = vweird.f32 %v3156
      %vm3318 = vweird.f32 %v3312
      %vm3319 = vmor %vm3317, %vm3318
      %v3320 = vsel %vm3319, %v3312, %v3316
      %v3321 = vand.u32 2147483647, %v3156
      %vm3322 = vcmp.eq.f32.partialorder %v3321, 8.507059e+37
      %v3323 = vand.u32 %v3156, 2147483648
      %v3324 = vor.u32 1.1754944e-38, %v3323
      %v3325 = vsel %vm3322, %v3324, %v3320
      %v3326 = vmul.f32 1.0, %v3325
      %v3327 = vrcp.pop %v3157
      %v3328 = vmul.f32 %v3157, %v3327
      %v3329 = vsub.f32 1.0, %v3328
      %v3330 = vmul.f32 %v3327, %v3329
      %v3331 = vadd.f32 %v3327, %v3330
      %vm3332 = vweird.f32 %v3157
      %vm3333 = vweird.f32 %v3327
      %vm3334 = vmor %vm3332, %vm3333
      %v3335 = vsel %vm3334, %v3327, %v3331
      %v3336 = vand.u32 2147483647, %v3157
      %vm3337 = vcmp.eq.f32.partialorder %v3336, 8.507059e+37
      %v3338 = vand.u32 %v3157, 2147483648
      %v3339 = vor.u32 1.1754944e-38, %v3338
      %v3340 = vsel %vm3337, %v3339, %v3335
      %v3341 = vmul.f32 1.0, %v3340
      %v3342 = vrcp.pop %v3158
      %v3343 = vmul.f32 %v3158, %v3342
      %v3344 = vsub.f32 1.0, %v3343
      %v3345 = vmul.f32 %v3342, %v3344
      %v3346 = vadd.f32 %v3342, %v3345
      %vm3347 = vweird.f32 %v3158
      %vm3348 = vweird.f32 %v3342
      %vm3349 = vmor %vm3347, %vm3348
      %v3350 = vsel %vm3349, %v3342, %v3346
      %v3351 = vand.u32 2147483647, %v3158
      %vm3352 = vcmp.eq.f32.partialorder %v3351, 8.507059e+37
      %v3353 = vand.u32 %v3158, 2147483648
      %v3354 = vor.u32 1.1754944e-38, %v3353
      %v3355 = vsel %vm3352, %v3354, %v3350
      %v3356 = vmul.f32 1.0, %v3355
      %v3357 = vrcp.pop %v3159
      %v3358 = vmul.f32 %v3159, %v3357
      %v3359 = vsub.f32 1.0, %v3358
      %v3360 = vmul.f32 %v3357, %v3359
      %v3361 = vadd.f32 %v3357, %v3360
      %vm3362 = vweird.f32 %v3159
      %vm3363 = vweird.f32 %v3357
      %vm3364 = vmor %vm3362, %vm3363
      %v3365 = vsel %vm3364, %v3357, %v3361
      %v3366 = vand.u32 2147483647, %v3159
      %vm3367 = vcmp.eq.f32.partialorder %v3366, 8.507059e+37
      %v3368 = vand.u32 %v3159, 2147483648
      %v3369 = vor.u32 1.1754944e-38, %v3368
      %v3370 = vsel %vm3367, %v3369, %v3365
      %v3371 = vmul.f32 1.0, %v3370
      %v3372 = vrcp.pop %v3160
      %v3373 = vmul.f32 %v3160, %v3372
      %v3374 = vsub.f32 1.0, %v3373
      %v3375 = vmul.f32 %v3372, %v3374
      %v3376 = vadd.f32 %v3372, %v3375
      %vm3377 = vweird.f32 %v3160
      %vm3378 = vweird.f32 %v3372
      %vm3379 = vmor %vm3377, %vm3378
      %v3380 = vsel %vm3379, %v3372, %v3376
      %v3381 = vand.u32 2147483647, %v3160
      %vm3382 = vcmp.eq.f32.partialorder %v3381, 8.507059e+37
      %v3383 = vand.u32 %v3160, 2147483648
      %v3384 = vor.u32 1.1754944e-38, %v3383
      %v3385 = vsel %vm3382, %v3384, %v3380
      %v3386 = vmul.f32 1.0, %v3385
      %v3387 = vrcp.pop %v3161
      %v3388 = vmul.f32 %v3161, %v3387
      %v3389 = vsub.f32 1.0, %v3388
      %v3390 = vmul.f32 %v3387, %v3389
      %v3391 = vadd.f32 %v3387, %v3390
      %vm3392 = vweird.f32 %v3161
      %vm3393 = vweird.f32 %v3387
      %vm3394 = vmor %vm3392, %vm3393
      %v3395 = vsel %vm3394, %v3387, %v3391
      %v3396 = vand.u32 2147483647, %v3161
      %vm3397 = vcmp.eq.f32.partialorder %v3396, 8.507059e+37
      %v3398 = vand.u32 %v3161, 2147483648
      %v3399 = vor.u32 1.1754944e-38, %v3398
      %v3400 = vsel %vm3397, %v3399, %v3395
      %v3401 = vmul.f32 1.0, %v3400
      %v3402 = vpack.c.bf16 %v3191, %v3176
      %v3403 = vpack.c.bf16 %v3221, %v3206
      %v3404 = vpack.c.bf16 %v3251, %v3236
      %v3405 = vpack.c.bf16 %v3281, %v3266
      %v3406 = vpack.c.bf16 %v3311, %v3296
      %v3407 = vpack.c.bf16 %v3341, %v3326
      %v3408 = vpack.c.bf16 %v3371, %v3356
      %v3409 = vpack.c.bf16 %v3401, %v3386
      %v3410 = vld [vmem:[%s7] sm:$0xff]
      %v3411 = vld [vmem:[%s7 + $0x8] sm:$0xff]
      %v3412 = vld [vmem:[%s7 + $0x10] sm:$0xff]
      %v3413 = vld [vmem:[%s7 + $0x18] sm:$0xff]
      %v3414 = vld [vmem:[%s7 + $0x20] sm:$0xff]
      %v3415 = vld [vmem:[%s7 + $0x28] sm:$0xff]
      %v3416 = vld [vmem:[%s7 + $0x30] sm:$0xff]
      %v3417 = vld [vmem:[%s7 + $0x38] sm:$0xff]
      %v3418 = vld [vmem:[%s7 + $0x40] sm:$0xff]
      %v3419 = vld [vmem:[%s7 + $0x48] sm:$0xff]
      %v3420 = vld [vmem:[%s7 + $0x50] sm:$0xff]
      %v3421 = vld [vmem:[%s7 + $0x58] sm:$0xff]
      %v3422 = vld [vmem:[%s7 + $0x60] sm:$0xff]
      %v3423 = vld [vmem:[%s7 + $0x68] sm:$0xff]
      %v3424 = vld [vmem:[%s7 + $0x70] sm:$0x33]
      %v3425 = vld [vmem:[%s7 + $0x78] sm:$0x33]
      %v3426 = vld [vmem:[%s7 + $0x80] sm:$0x33]
      %v3427 = vld [vmem:[%s7 + $0x88] sm:$0x33]
      %v3428 = vld [vmem:[%s7 + $0x90] sm:$0x33]
      %v3429 = vld [vmem:[%s7 + $0x98] sm:$0x33]
      %v3430 = vld [vmem:[%s7 + $0xa0] sm:$0x33]
      %v3431 = vld [vmem:[%s8] sm:$0xff]
      %v3432 = vld [vmem:[%s8 + $0x8] sm:$0x3f]
      %v3435 = vperm.slane %v3431, 0
      %v3436 = vperm.slane %v3431, 1
      %v3437 = vperm.slane %v3431, 2
      %v3438 = vperm.slane %v3431, 3
      %v3439 = vperm.slane %v3431, 4
      %v3440 = vperm.slane %v3431, 5
      %v3441 = vperm.slane %v3431, 6
      %v3442 = vperm.slane %v3431, 7
      %v3443 = vperm.slane %v3432, 0
      %v3444 = vperm.slane %v3432, 1
      %v3445 = vperm.slane %v3432, 2
      %v3446 = vperm.slane %v3432, 3
      %v3447 = vperm.slane %v3432, 4
      %v3448 = vperm.slane %v3432, 5
      %v3484 = vunpack.c.l.b16 %v3410
      %v3485 = vunpack.c.h.b16 %v3410
      %v3486 = vunpack.c.l.b16 %v3411
      %v3487 = vunpack.c.h.b16 %v3411
      %v3488 = vunpack.c.l.b16 %v3412
      %v3489 = vunpack.c.h.b16 %v3412
      %v3490 = vunpack.c.l.b16 %v3413
      %v3491 = vunpack.c.h.b16 %v3413
      %v3492 = vunpack.c.l.b16 %v3414
      %v3493 = vunpack.c.h.b16 %v3414
      %v3494 = vunpack.c.l.b16 %v3415
      %v3495 = vunpack.c.h.b16 %v3415
      %v3496 = vunpack.c.l.b16 %v3416
      %v3497 = vunpack.c.h.b16 %v3416
      %v3498 = vunpack.c.l.b16 %v3417
      %v3499 = vunpack.c.h.b16 %v3417
      %v3500 = vunpack.c.l.b16 %v3418
      %v3501 = vunpack.c.h.b16 %v3418
      %v3502 = vunpack.c.l.b16 %v3419
      %v3503 = vunpack.c.h.b16 %v3419
      %v3504 = vunpack.c.l.b16 %v3420
      %v3505 = vunpack.c.h.b16 %v3420
      %v3506 = vunpack.c.l.b16 %v3421
      %v3507 = vunpack.c.h.b16 %v3421
      %v3508 = vunpack.c.l.b16 %v3422
      %v3509 = vunpack.c.h.b16 %v3422
      %v3510 = vunpack.c.l.b16 %v3423
      %v3511 = vunpack.c.h.b16 %v3423
      %v3512 = vunpack.c.l.b16 %v3424
      %v3513 = vunpack.c.h.b16 %v3424
      %v3514 = vunpack.c.l.b16 %v3425
      %v3515 = vunpack.c.h.b16 %v3425
      %v3516 = vunpack.c.l.b16 %v3426
      %v3517 = vunpack.c.h.b16 %v3426
      %v3518 = vunpack.c.l.b16 %v3427
      %v3519 = vunpack.c.h.b16 %v3427
      %v3520 = vunpack.c.l.b16 %v3428
      %v3521 = vunpack.c.h.b16 %v3428
      %v3522 = vunpack.c.l.b16 %v3429
      %v3523 = vunpack.c.h.b16 %v3429
      %v3524 = vunpack.c.l.b16 %v3430
      %v3525 = vunpack.c.h.b16 %v3430
      %v3526 = vpack.c.b16 %v3498, %v3484
      %v3527 = vpack.c.b16 %v3499, %v3485
      %v3528 = vpack.c.b16 %v3500, %v3486
      %v3529 = vpack.c.b16 %v3501, %v3487
      %v3530 = vpack.c.b16 %v3502, %v3488
      %v3531 = vpack.c.b16 %v3503, %v3489
      %v3532 = vpack.c.b16 %v3504, %v3490
      %v3533 = vpack.c.b16 %v3505, %v3491
      %v3534 = vpack.c.b16 %v3506, %v3492
      %v3535 = vpack.c.b16 %v3507, %v3493
      %v3536 = vpack.c.b16 %v3508, %v3494
      %v3537 = vpack.c.b16 %v3509, %v3495
      %v3538 = vpack.c.b16 %v3510, %v3496
      %v3539 = vpack.c.b16 %v3511, %v3497
      %v3540 = vpack.c.b16 %v3512, %v3512
      %v3541 = vpack.c.b16 %v3513, %v3513
      %v3542 = vpack.c.b16 %v3514, %v3514
      %v3543 = vpack.c.b16 %v3515, %v3515
      %v3544 = vpack.c.b16 %v3516, %v3516
      %v3545 = vpack.c.b16 %v3517, %v3517
      %v3546 = vpack.c.b16 %v3518, %v3518
      %v3547 = vpack.c.b16 %v3519, %v3519
      %v3548 = vpack.c.b16 %v3520, %v3520
      %v3549 = vpack.c.b16 %v3521, %v3521
      %v3550 = vpack.c.b16 %v3522, %v3522
      %v3551 = vpack.c.b16 %v3523, %v3523
      %v3552 = vpack.c.b16 %v3524, %v3524
      %v3553 = vpack.c.b16 %v3525, %v3525
      %v3569 = vsel %vm2552, %v3402, 0
      %v3572 = vsel %vm2552, %v3403, 0
      %v3575 = vsel %vm2552, %v3404, 0
      %v3578 = vsel %vm2552, %v3405, 0
      %v3581 = vsel %vm2552, %v3406, 0
      %v3584 = vsel %vm2552, %v3407, 0
      %v3587 = vsel %vm2552, %v3408, 0
      %v3590 = vsel %vm2552, %v3409, 0
      %v3593 = vsel %vm3029, %v3540, 0
      %v3596 = vsel %vm3029, %v3541, 0
      %v3599 = vsel %vm3029, %v3542, 0
      %v3602 = vsel %vm3029, %v3543, 0
      %v3605 = vsel %vm3029, %v3544, 0
      %v3608 = vsel %vm3029, %v3545, 0
      %v3611 = vsel %vm3029, %v3546, 0
      %v3614 = vsel %vm3029, %v3547, 0
      %v3617 = vsel %vm3029, %v3548, 0
      %v3620 = vsel %vm3029, %v3549, 0
      %v3623 = vsel %vm3029, %v3550, 0
      %v3626 = vsel %vm3029, %v3551, 0
      %v3629 = vsel %vm3029, %v3552, 0
      %v3632 = vsel %vm3029, %v3553, 0
      %3634 = vmatpush.bf16.msra.mxu0 0
      %3635 = vmatpush.bf16.msra.mxu0 0
      %3636 = vmatpush.bf16.msra.mxu0 0
      %3637 = vmatpush.bf16.msra.mxu0 0
      %3638 = vmatpush.bf16.msra.mxu0 0
      %3639 = vmatpush.bf16.msra.mxu0 0
      %3640 = vmatpush.bf16.msra.mxu0 %v3593
      %3641 = vmatpush.bf16.msra.mxu0 %v3526
      %3642 = vmatmul.bf16.gmra.mxu0 %v3569
      %v3643 = vpop.f32.mrf.mxu0
      %v3644 = vadd.f32 %v3435, %v3643
      %v3645 = vpop.f32.mrf.mxu0
      %v3646 = vadd.f32 %v3435, %v3645
      %3647 = vmatmul.bf16.gmra.mxu0 %v3572
      %v3648 = vpop.f32.mrf.mxu0
      %v3649 = vadd.f32 %v3435, %v3648
      %v3650 = vpop.f32.mrf.mxu0
      %v3651 = vadd.f32 %v3435, %v3650
      %3652 = vmatmul.bf16.gmra.mxu0 %v3575
      %v3653 = vpop.f32.mrf.mxu0
      %v3654 = vadd.f32 %v3435, %v3653
      %v3655 = vpop.f32.mrf.mxu0
      %v3656 = vadd.f32 %v3435, %v3655
      %3657 = vmatmul.bf16.gmra.mxu0 %v3578
      %v3658 = vpop.f32.mrf.mxu0
      %v3659 = vadd.f32 %v3435, %v3658
      %v3660 = vpop.f32.mrf.mxu0
      %v3661 = vadd.f32 %v3435, %v3660
      %3662 = vmatmul.bf16.gmra.mxu0 %v3581
      %v3663 = vpop.f32.mrf.mxu0
      %v3664 = vadd.f32 %v3435, %v3663
      %v3665 = vpop.f32.mrf.mxu0
      %v3666 = vadd.f32 %v3435, %v3665
      %3667 = vmatmul.bf16.gmra.mxu0 %v3584
      %v3668 = vpop.f32.mrf.mxu0
      %v3669 = vadd.f32 %v3435, %v3668
      %v3670 = vpop.f32.mrf.mxu0
      %v3671 = vadd.f32 %v3435, %v3670
      %3672 = vmatmul.bf16.gmra.mxu0 %v3587
      %v3673 = vpop.f32.mrf.mxu0
      %v3674 = vadd.f32 %v3435, %v3673
      %v3675 = vpop.f32.mrf.mxu0
      %v3676 = vadd.f32 %v3435, %v3675
      %3677 = vmatmul.bf16.gmra.mxu0 %v3590
      %v3678 = vpop.f32.mrf.mxu0
      %v3679 = vadd.f32 %v3435, %v3678
      %v3680 = vpop.f32.mrf.mxu0
      %v3681 = vadd.f32 %v3435, %v3680
      %3682 = vdwg.mxu0
      %3683 = vmatpush.bf16.msra.mxu0 0
      %3684 = vmatpush.bf16.msra.mxu0 0
      %3685 = vmatpush.bf16.msra.mxu0 0
      %3686 = vmatpush.bf16.msra.mxu0 0
      %3687 = vmatpush.bf16.msra.mxu0 0
      %3688 = vmatpush.bf16.msra.mxu0 0
      %3689 = vmatpush.bf16.msra.mxu0 %v3596
      %3690 = vmatpush.bf16.msra.mxu0 %v3527
      %3691 = vmatmul.bf16.gmra.mxu0 %v3569
      %v3692 = vpop.f32.mrf.mxu0
      %v3693 = vadd.f32 %v3436, %v3692
      %v3694 = vpop.f32.mrf.mxu0
      %v3695 = vadd.f32 %v3436, %v3694
      %3696 = vmatmul.bf16.gmra.mxu0 %v3572
      %v3697 = vpop.f32.mrf.mxu0
      %v3698 = vadd.f32 %v3436, %v3697
      %v3699 = vpop.f32.mrf.mxu0
      %v3700 = vadd.f32 %v3436, %v3699
      %3701 = vmatmul.bf16.gmra.mxu0 %v3575
      %v3702 = vpop.f32.mrf.mxu0
      %v3703 = vadd.f32 %v3436, %v3702
      %v3704 = vpop.f32.mrf.mxu0
      %v3705 = vadd.f32 %v3436, %v3704
      %3706 = vmatmul.bf16.gmra.mxu0 %v3578
      %v3707 = vpop.f32.mrf.mxu0
      %v3708 = vadd.f32 %v3436, %v3707
      %v3709 = vpop.f32.mrf.mxu0
      %v3710 = vadd.f32 %v3436, %v3709
      %3711 = vmatmul.bf16.gmra.mxu0 %v3581
      %v3712 = vpop.f32.mrf.mxu0
      %v3713 = vadd.f32 %v3436, %v3712
      %v3714 = vpop.f32.mrf.mxu0
      %v3715 = vadd.f32 %v3436, %v3714
      %3716 = vmatmul.bf16.gmra.mxu0 %v3584
      %v3717 = vpop.f32.mrf.mxu0
      %v3718 = vadd.f32 %v3436, %v3717
      %v3719 = vpop.f32.mrf.mxu0
      %v3720 = vadd.f32 %v3436, %v3719
      %3721 = vmatmul.bf16.gmra.mxu0 %v3587
      %v3722 = vpop.f32.mrf.mxu0
      %v3723 = vadd.f32 %v3436, %v3722
      %v3724 = vpop.f32.mrf.mxu0
      %v3725 = vadd.f32 %v3436, %v3724
      %3726 = vmatmul.bf16.gmra.mxu0 %v3590
      %v3727 = vpop.f32.mrf.mxu0
      %v3728 = vadd.f32 %v3436, %v3727
      %v3729 = vpop.f32.mrf.mxu0
      %v3730 = vadd.f32 %v3436, %v3729
      %3731 = vdwg.mxu0
      %3732 = vmatpush.bf16.msra.mxu0 0
      %3733 = vmatpush.bf16.msra.mxu0 0
      %3734 = vmatpush.bf16.msra.mxu0 0
      %3735 = vmatpush.bf16.msra.mxu0 0
      %3736 = vmatpush.bf16.msra.mxu0 0
      %3737 = vmatpush.bf16.msra.mxu0 0
      %3738 = vmatpush.bf16.msra.mxu0 %v3599
      %3739 = vmatpush.bf16.msra.mxu0 %v3528
      %3740 = vmatmul.bf16.gmra.mxu0 %v3569
      %v3741 = vpop.f32.mrf.mxu0
      %v3742 = vadd.f32 %v3437, %v3741
      %v3743 = vpop.f32.mrf.mxu0
      %v3744 = vadd.f32 %v3437, %v3743
      %3745 = vmatmul.bf16.gmra.mxu0 %v3572
      %v3746 = vpop.f32.mrf.mxu0
      %v3747 = vadd.f32 %v3437, %v3746
      %v3748 = vpop.f32.mrf.mxu0
      %v3749 = vadd.f32 %v3437, %v3748
      %3750 = vmatmul.bf16.gmra.mxu0 %v3575
      %v3751 = vpop.f32.mrf.mxu0
      %v3752 = vadd.f32 %v3437, %v3751
      %v3753 = vpop.f32.mrf.mxu0
      %v3754 = vadd.f32 %v3437, %v3753
      %3755 = vmatmul.bf16.gmra.mxu0 %v3578
      %v3756 = vpop.f32.mrf.mxu0
      %v3757 = vadd.f32 %v3437, %v3756
      %v3758 = vpop.f32.mrf.mxu0
      %v3759 = vadd.f32 %v3437, %v3758
      %3760 = vmatmul.bf16.gmra.mxu0 %v3581
      %v3761 = vpop.f32.mrf.mxu0
      %v3762 = vadd.f32 %v3437, %v3761
      %v3763 = vpop.f32.mrf.mxu0
      %v3764 = vadd.f32 %v3437, %v3763
      %3765 = vmatmul.bf16.gmra.mxu0 %v3584
      %v3766 = vpop.f32.mrf.mxu0
      %v3767 = vadd.f32 %v3437, %v3766
      %v3768 = vpop.f32.mrf.mxu0
      %v3769 = vadd.f32 %v3437, %v3768
      %3770 = vmatmul.bf16.gmra.mxu0 %v3587
      %v3771 = vpop.f32.mrf.mxu0
      %v3772 = vadd.f32 %v3437, %v3771
      %v3773 = vpop.f32.mrf.mxu0
      %v3774 = vadd.f32 %v3437, %v3773
      %3775 = vmatmul.bf16.gmra.mxu0 %v3590
      %v3776 = vpop.f32.mrf.mxu0
      %v3777 = vadd.f32 %v3437, %v3776
      %v3778 = vpop.f32.mrf.mxu0
      %v3779 = vadd.f32 %v3437, %v3778
      %3780 = vdwg.mxu0
      %3781 = vmatpush.bf16.msra.mxu0 0
      %3782 = vmatpush.bf16.msra.mxu0 0
      %3783 = vmatpush.bf16.msra.mxu0 0
      %3784 = vmatpush.bf16.msra.mxu0 0
      %3785 = vmatpush.bf16.msra.mxu0 0
      %3786 = vmatpush.bf16.msra.mxu0 0
      %3787 = vmatpush.bf16.msra.mxu0 %v3602
      %3788 = vmatpush.bf16.msra.mxu0 %v3529
      %3789 = vmatmul.bf16.gmra.mxu0 %v3569
      %v3790 = vpop.f32.mrf.mxu0
      %v3791 = vadd.f32 %v3438, %v3790
      %v3792 = vpop.f32.mrf.mxu0
      %v3793 = vadd.f32 %v3438, %v3792
      %3794 = vmatmul.bf16.gmra.mxu0 %v3572
      %v3795 = vpop.f32.mrf.mxu0
      %v3796 = vadd.f32 %v3438, %v3795
      %v3797 = vpop.f32.mrf.mxu0
      %v3798 = vadd.f32 %v3438, %v3797
      %3799 = vmatmul.bf16.gmra.mxu0 %v3575
      %v3800 = vpop.f32.mrf.mxu0
      %v3801 = vadd.f32 %v3438, %v3800
      %v3802 = vpop.f32.mrf.mxu0
      %v3803 = vadd.f32 %v3438, %v3802
      %3804 = vmatmul.bf16.gmra.mxu0 %v3578
      %v3805 = vpop.f32.mrf.mxu0
      %v3806 = vadd.f32 %v3438, %v3805
      %v3807 = vpop.f32.mrf.mxu0
      %v3808 = vadd.f32 %v3438, %v3807
      %3809 = vmatmul.bf16.gmra.mxu0 %v3581
      %v3810 = vpop.f32.mrf.mxu0
      %v3811 = vadd.f32 %v3438, %v3810
      %v3812 = vpop.f32.mrf.mxu0
      %v3813 = vadd.f32 %v3438, %v3812
      %3814 = vmatmul.bf16.gmra.mxu0 %v3584
      %v3815 = vpop.f32.mrf.mxu0
      %v3816 = vadd.f32 %v3438, %v3815
      %v3817 = vpop.f32.mrf.mxu0
      %v3818 = vadd.f32 %v3438, %v3817
      %3819 = vmatmul.bf16.gmra.mxu0 %v3587
      %v3820 = vpop.f32.mrf.mxu0
      %v3821 = vadd.f32 %v3438, %v3820
      %v3822 = vpop.f32.mrf.mxu0
      %v3823 = vadd.f32 %v3438, %v3822
      %3824 = vmatmul.bf16.gmra.mxu0 %v3590
      %v3825 = vpop.f32.mrf.mxu0
      %v3826 = vadd.f32 %v3438, %v3825
      %v3827 = vpop.f32.mrf.mxu0
      %v3828 = vadd.f32 %v3438, %v3827
      %3829 = vdwg.mxu0
      %3830 = vmatpush.bf16.msra.mxu0 0
      %3831 = vmatpush.bf16.msra.mxu0 0
      %3832 = vmatpush.bf16.msra.mxu0 0
      %3833 = vmatpush.bf16.msra.mxu0 0
      %3834 = vmatpush.bf16.msra.mxu0 0
      %3835 = vmatpush.bf16.msra.mxu0 0
      %3836 = vmatpush.bf16.msra.mxu0 %v3605
      %3837 = vmatpush.bf16.msra.mxu0 %v3530
      %3838 = vmatmul.bf16.gmra.mxu0 %v3569
      %v3839 = vpop.f32.mrf.mxu0
      %v3840 = vadd.f32 %v3439, %v3839
      %v3841 = vpop.f32.mrf.mxu0
      %v3842 = vadd.f32 %v3439, %v3841
      %3843 = vmatmul.bf16.gmra.mxu0 %v3572
      %v3844 = vpop.f32.mrf.mxu0
      %v3845 = vadd.f32 %v3439, %v3844
      %v3846 = vpop.f32.mrf.mxu0
      %v3847 = vadd.f32 %v3439, %v3846
      %3848 = vmatmul.bf16.gmra.mxu0 %v3575
      %v3849 = vpop.f32.mrf.mxu0
      %v3850 = vadd.f32 %v3439, %v3849
      %v3851 = vpop.f32.mrf.mxu0
      %v3852 = vadd.f32 %v3439, %v3851
      %3853 = vmatmul.bf16.gmra.mxu0 %v3578
      %v3854 = vpop.f32.mrf.mxu0
      %v3855 = vadd.f32 %v3439, %v3854
      %v3856 = vpop.f32.mrf.mxu0
      %v3857 = vadd.f32 %v3439, %v3856
      %3858 = vmatmul.bf16.gmra.mxu0 %v3581
      %v3859 = vpop.f32.mrf.mxu0
      %v3860 = vadd.f32 %v3439, %v3859
      %v3861 = vpop.f32.mrf.mxu0
      %v3862 = vadd.f32 %v3439, %v3861
      %3863 = vmatmul.bf16.gmra.mxu0 %v3584
      %v3864 = vpop.f32.mrf.mxu0
      %v3865 = vadd.f32 %v3439, %v3864
      %v3866 = vpop.f32.mrf.mxu0
      %v3867 = vadd.f32 %v3439, %v3866
      %3868 = vmatmul.bf16.gmra.mxu0 %v3587
      %v3869 = vpop.f32.mrf.mxu0
      %v3870 = vadd.f32 %v3439, %v3869
      %v3871 = vpop.f32.mrf.mxu0
      %v3872 = vadd.f32 %v3439, %v3871
      %3873 = vmatmul.bf16.gmra.mxu0 %v3590
      %v3874 = vpop.f32.mrf.mxu0
      %v3875 = vadd.f32 %v3439, %v3874
      %v3876 = vpop.f32.mrf.mxu0
      %v3877 = vadd.f32 %v3439, %v3876
      %3878 = vdwg.mxu0
      %3879 = vmatpush.bf16.msra.mxu0 0
      %3880 = vmatpush.bf16.msra.mxu0 0
      %3881 = vmatpush.bf16.msra.mxu0 0
      %3882 = vmatpush.bf16.msra.mxu0 0
      %3883 = vmatpush.bf16.msra.mxu0 0
      %3884 = vmatpush.bf16.msra.mxu0 0
      %3885 = vmatpush.bf16.msra.mxu0 %v3608
      %3886 = vmatpush.bf16.msra.mxu0 %v3531
      %3887 = vmatmul.bf16.gmra.mxu0 %v3569
      %v3888 = vpop.f32.mrf.mxu0
      %v3889 = vadd.f32 %v3440, %v3888
      %v3890 = vpop.f32.mrf.mxu0
      %v3891 = vadd.f32 %v3440, %v3890
      %3892 = vmatmul.bf16.gmra.mxu0 %v3572
      %v3893 = vpop.f32.mrf.mxu0
      %v3894 = vadd.f32 %v3440, %v3893
      %v3895 = vpop.f32.mrf.mxu0
      %v3896 = vadd.f32 %v3440, %v3895
      %3897 = vmatmul.bf16.gmra.mxu0 %v3575
      %v3898 = vpop.f32.mrf.mxu0
      %v3899 = vadd.f32 %v3440, %v3898
      %v3900 = vpop.f32.mrf.mxu0
      %v3901 = vadd.f32 %v3440, %v3900
      %3902 = vmatmul.bf16.gmra.mxu0 %v3578
      %v3903 = vpop.f32.mrf.mxu0
      %v3904 = vadd.f32 %v3440, %v3903
      %v3905 = vpop.f32.mrf.mxu0
      %v3906 = vadd.f32 %v3440, %v3905
      %3907 = vmatmul.bf16.gmra.mxu0 %v3581
      %v3908 = vpop.f32.mrf.mxu0
      %v3909 = vadd.f32 %v3440, %v3908
      %v3910 = vpop.f32.mrf.mxu0
      %v3911 = vadd.f32 %v3440, %v3910
      %3912 = vmatmul.bf16.gmra.mxu0 %v3584
      %v3913 = vpop.f32.mrf.mxu0
      %v3914 = vadd.f32 %v3440, %v3913
      %v3915 = vpop.f32.mrf.mxu0
      %v3916 = vadd.f32 %v3440, %v3915
      %3917 = vmatmul.bf16.gmra.mxu0 %v3587
      %v3918 = vpop.f32.mrf.mxu0
      %v3919 = vadd.f32 %v3440, %v3918
      %v3920 = vpop.f32.mrf.mxu0
      %v3921 = vadd.f32 %v3440, %v3920
      %3922 = vmatmul.bf16.gmra.mxu0 %v3590
      %v3923 = vpop.f32.mrf.mxu0
      %v3924 = vadd.f32 %v3440, %v3923
      %v3925 = vpop.f32.mrf.mxu0
      %v3926 = vadd.f32 %v3440, %v3925
      %3927 = vdwg.mxu0
      %3928 = vmatpush.bf16.msra.mxu0 0
      %3929 = vmatpush.bf16.msra.mxu0 0
      %3930 = vmatpush.bf16.msra.mxu0 0
      %3931 = vmatpush.bf16.msra.mxu0 0
      %3932 = vmatpush.bf16.msra.mxu0 0
      %3933 = vmatpush.bf16.msra.mxu0 0
      %3934 = vmatpush.bf16.msra.mxu0 %v3611
      %3935 = vmatpush.bf16.msra.mxu0 %v3532
      %3936 = vmatmul.bf16.gmra.mxu0 %v3569
      %v3937 = vpop.f32.mrf.mxu0
      %v3938 = vadd.f32 %v3441, %v3937
      %v3939 = vpop.f32.mrf.mxu0
      %v3940 = vadd.f32 %v3441, %v3939
      %3941 = vmatmul.bf16.gmra.mxu0 %v3572
      %v3942 = vpop.f32.mrf.mxu0
      %v3943 = vadd.f32 %v3441, %v3942
      %v3944 = vpop.f32.mrf.mxu0
      %v3945 = vadd.f32 %v3441, %v3944
      %3946 = vmatmul.bf16.gmra.mxu0 %v3575
      %v3947 = vpop.f32.mrf.mxu0
      %v3948 = vadd.f32 %v3441, %v3947
      %v3949 = vpop.f32.mrf.mxu0
      %v3950 = vadd.f32 %v3441, %v3949
      %3951 = vmatmul.bf16.gmra.mxu0 %v3578
      %v3952 = vpop.f32.mrf.mxu0
      %v3953 = vadd.f32 %v3441, %v3952
      %v3954 = vpop.f32.mrf.mxu0
      %v3955 = vadd.f32 %v3441, %v3954
      %3956 = vmatmul.bf16.gmra.mxu0 %v3581
      %v3957 = vpop.f32.mrf.mxu0
      %v3958 = vadd.f32 %v3441, %v3957
      %v3959 = vpop.f32.mrf.mxu0
      %v3960 = vadd.f32 %v3441, %v3959
      %3961 = vmatmul.bf16.gmra.mxu0 %v3584
      %v3962 = vpop.f32.mrf.mxu0
      %v3963 = vadd.f32 %v3441, %v3962
      %v3964 = vpop.f32.mrf.mxu0
      %v3965 = vadd.f32 %v3441, %v3964
      %3966 = vmatmul.bf16.gmra.mxu0 %v3587
      %v3967 = vpop.f32.mrf.mxu0
      %v3968 = vadd.f32 %v3441, %v3967
      %v3969 = vpop.f32.mrf.mxu0
      %v3970 = vadd.f32 %v3441, %v3969
      %3971 = vmatmul.bf16.gmra.mxu0 %v3590
      %v3972 = vpop.f32.mrf.mxu0
      %v3973 = vadd.f32 %v3441, %v3972
      %v3974 = vpop.f32.mrf.mxu0
      %v3975 = vadd.f32 %v3441, %v3974
      %3976 = vdwg.mxu0
      %3977 = vmatpush.bf16.msra.mxu0 0
      %3978 = vmatpush.bf16.msra.mxu0 0
      %3979 = vmatpush.bf16.msra.mxu0 0
      %3980 = vmatpush.bf16.msra.mxu0 0
      %3981 = vmatpush.bf16.msra.mxu0 0
      %3982 = vmatpush.bf16.msra.mxu0 0
      %3983 = vmatpush.bf16.msra.mxu0 %v3614
      %3984 = vmatpush.bf16.msra.mxu0 %v3533
      %3985 = vmatmul.bf16.gmra.mxu0 %v3569
      %v3986 = vpop.f32.mrf.mxu0
      %v3987 = vadd.f32 %v3442, %v3986
      %v3988 = vpop.f32.mrf.mxu0
      %v3989 = vadd.f32 %v3442, %v3988
      %3990 = vmatmul.bf16.gmra.mxu0 %v3572
      %v3991 = vpop.f32.mrf.mxu0
      %v3992 = vadd.f32 %v3442, %v3991
      %v3993 = vpop.f32.mrf.mxu0
      %v3994 = vadd.f32 %v3442, %v3993
      %3995 = vmatmul.bf16.gmra.mxu0 %v3575
      %v3996 = vpop.f32.mrf.mxu0
      %v3997 = vadd.f32 %v3442, %v3996
      %v3998 = vpop.f32.mrf.mxu0
      %v3999 = vadd.f32 %v3442, %v3998
      %4000 = vmatmul.bf16.gmra.mxu0 %v3578
      %v4001 = vpop.f32.mrf.mxu0
      %v4002 = vadd.f32 %v3442, %v4001
      %v4003 = vpop.f32.mrf.mxu0
      %v4004 = vadd.f32 %v3442, %v4003
      %4005 = vmatmul.bf16.gmra.mxu0 %v3581
      %v4006 = vpop.f32.mrf.mxu0
      %v4007 = vadd.f32 %v3442, %v4006
      %v4008 = vpop.f32.mrf.mxu0
      %v4009 = vadd.f32 %v3442, %v4008
      %4010 = vmatmul.bf16.gmra.mxu0 %v3584
      %v4011 = vpop.f32.mrf.mxu0
      %v4012 = vadd.f32 %v3442, %v4011
      %v4013 = vpop.f32.mrf.mxu0
      %v4014 = vadd.f32 %v3442, %v4013
      %4015 = vmatmul.bf16.gmra.mxu0 %v3587
      %v4016 = vpop.f32.mrf.mxu0
      %v4017 = vadd.f32 %v3442, %v4016
      %v4018 = vpop.f32.mrf.mxu0
      %v4019 = vadd.f32 %v3442, %v4018
      %4020 = vmatmul.bf16.gmra.mxu0 %v3590
      %v4021 = vpop.f32.mrf.mxu0
      %v4022 = vadd.f32 %v3442, %v4021
      %v4023 = vpop.f32.mrf.mxu0
      %v4024 = vadd.f32 %v3442, %v4023
      %4025 = vdwg.mxu0
      %4026 = vmatpush.bf16.msra.mxu0 0
      %4027 = vmatpush.bf16.msra.mxu0 0
      %4028 = vmatpush.bf16.msra.mxu0 0
      %4029 = vmatpush.bf16.msra.mxu0 0
      %4030 = vmatpush.bf16.msra.mxu0 0
      %4031 = vmatpush.bf16.msra.mxu0 0
      %4032 = vmatpush.bf16.msra.mxu0 %v3617
      %4033 = vmatpush.bf16.msra.mxu0 %v3534
      %4034 = vmatmul.bf16.gmra.mxu0 %v3569
      %v4035 = vpop.f32.mrf.mxu0
      %v4036 = vadd.f32 %v3443, %v4035
      %v4037 = vpop.f32.mrf.mxu0
      %v4038 = vadd.f32 %v3443, %v4037
      %4039 = vmatmul.bf16.gmra.mxu0 %v3572
      %v4040 = vpop.f32.mrf.mxu0
      %v4041 = vadd.f32 %v3443, %v4040
      %v4042 = vpop.f32.mrf.mxu0
      %v4043 = vadd.f32 %v3443, %v4042
      %4044 = vmatmul.bf16.gmra.mxu0 %v3575
      %v4045 = vpop.f32.mrf.mxu0
      %v4046 = vadd.f32 %v3443, %v4045
      %v4047 = vpop.f32.mrf.mxu0
      %v4048 = vadd.f32 %v3443, %v4047
      %4049 = vmatmul.bf16.gmra.mxu0 %v3578
      %v4050 = vpop.f32.mrf.mxu0
      %v4051 = vadd.f32 %v3443, %v4050
      %v4052 = vpop.f32.mrf.mxu0
      %v4053 = vadd.f32 %v3443, %v4052
      %4054 = vmatmul.bf16.gmra.mxu0 %v3581
      %v4055 = vpop.f32.mrf.mxu0
      %v4056 = vadd.f32 %v3443, %v4055
      %v4057 = vpop.f32.mrf.mxu0
      %v4058 = vadd.f32 %v3443, %v4057
      %4059 = vmatmul.bf16.gmra.mxu0 %v3584
      %v4060 = vpop.f32.mrf.mxu0
      %v4061 = vadd.f32 %v3443, %v4060
      %v4062 = vpop.f32.mrf.mxu0
      %v4063 = vadd.f32 %v3443, %v4062
      %4064 = vmatmul.bf16.gmra.mxu0 %v3587
      %v4065 = vpop.f32.mrf.mxu0
      %v4066 = vadd.f32 %v3443, %v4065
      %v4067 = vpop.f32.mrf.mxu0
      %v4068 = vadd.f32 %v3443, %v4067
      %4069 = vmatmul.bf16.gmra.mxu0 %v3590
      %v4070 = vpop.f32.mrf.mxu0
      %v4071 = vadd.f32 %v3443, %v4070
      %v4072 = vpop.f32.mrf.mxu0
      %v4073 = vadd.f32 %v3443, %v4072
      %4074 = vdwg.mxu0
      %4075 = vmatpush.bf16.msra.mxu0 0
      %4076 = vmatpush.bf16.msra.mxu0 0
      %4077 = vmatpush.bf16.msra.mxu0 0
      %4078 = vmatpush.bf16.msra.mxu0 0
      %4079 = vmatpush.bf16.msra.mxu0 0
      %4080 = vmatpush.bf16.msra.mxu0 0
      %4081 = vmatpush.bf16.msra.mxu0 %v3620
      %4082 = vmatpush.bf16.msra.mxu0 %v3535
      %4083 = vmatmul.bf16.gmra.mxu0 %v3569
      %v4084 = vpop.f32.mrf.mxu0
      %v4085 = vadd.f32 %v3444, %v4084
      %v4086 = vpop.f32.mrf.mxu0
      %v4087 = vadd.f32 %v3444, %v4086
      %4088 = vmatmul.bf16.gmra.mxu0 %v3572
      %v4089 = vpop.f32.mrf.mxu0
      %v4090 = vadd.f32 %v3444, %v4089
      %v4091 = vpop.f32.mrf.mxu0
      %v4092 = vadd.f32 %v3444, %v4091
      %4093 = vmatmul.bf16.gmra.mxu0 %v3575
      %v4094 = vpop.f32.mrf.mxu0
      %v4095 = vadd.f32 %v3444, %v4094
      %v4096 = vpop.f32.mrf.mxu0
      %v4097 = vadd.f32 %v3444, %v4096
      %4098 = vmatmul.bf16.gmra.mxu0 %v3578
      %v4099 = vpop.f32.mrf.mxu0
      %v4100 = vadd.f32 %v3444, %v4099
      %v4101 = vpop.f32.mrf.mxu0
      %v4102 = vadd.f32 %v3444, %v4101
      %4103 = vmatmul.bf16.gmra.mxu0 %v3581
      %v4104 = vpop.f32.mrf.mxu0
      %v4105 = vadd.f32 %v3444, %v4104
      %v4106 = vpop.f32.mrf.mxu0
      %v4107 = vadd.f32 %v3444, %v4106
      %4108 = vmatmul.bf16.gmra.mxu0 %v3584
      %v4109 = vpop.f32.mrf.mxu0
      %v4110 = vadd.f32 %v3444, %v4109
      %v4111 = vpop.f32.mrf.mxu0
      %v4112 = vadd.f32 %v3444, %v4111
      %4113 = vmatmul.bf16.gmra.mxu0 %v3587
      %v4114 = vpop.f32.mrf.mxu0
      %v4115 = vadd.f32 %v3444, %v4114
      %v4116 = vpop.f32.mrf.mxu0
      %v4117 = vadd.f32 %v3444, %v4116
      %4118 = vmatmul.bf16.gmra.mxu0 %v3590
      %v4119 = vpop.f32.mrf.mxu0
      %v4120 = vadd.f32 %v3444, %v4119
      %v4121 = vpop.f32.mrf.mxu0
      %v4122 = vadd.f32 %v3444, %v4121
      %4123 = vdwg.mxu0
      %4124 = vmatpush.bf16.msra.mxu0 0
      %4125 = vmatpush.bf16.msra.mxu0 0
      %4126 = vmatpush.bf16.msra.mxu0 0
      %4127 = vmatpush.bf16.msra.mxu0 0
      %4128 = vmatpush.bf16.msra.mxu0 0
      %4129 = vmatpush.bf16.msra.mxu0 0
      %4130 = vmatpush.bf16.msra.mxu0 %v3623
      %4131 = vmatpush.bf16.msra.mxu0 %v3536
      %4132 = vmatmul.bf16.gmra.mxu0 %v3569
      %v4133 = vpop.f32.mrf.mxu0
      %v4134 = vadd.f32 %v3445, %v4133
      %v4135 = vpop.f32.mrf.mxu0
      %v4136 = vadd.f32 %v3445, %v4135
      %4137 = vmatmul.bf16.gmra.mxu0 %v3572
      %v4138 = vpop.f32.mrf.mxu0
      %v4139 = vadd.f32 %v3445, %v4138
      %v4140 = vpop.f32.mrf.mxu0
      %v4141 = vadd.f32 %v3445, %v4140
      %4142 = vmatmul.bf16.gmra.mxu0 %v3575
      %v4143 = vpop.f32.mrf.mxu0
      %v4144 = vadd.f32 %v3445, %v4143
      %v4145 = vpop.f32.mrf.mxu0
      %v4146 = vadd.f32 %v3445, %v4145
      %4147 = vmatmul.bf16.gmra.mxu0 %v3578
      %v4148 = vpop.f32.mrf.mxu0
      %v4149 = vadd.f32 %v3445, %v4148
      %v4150 = vpop.f32.mrf.mxu0
      %v4151 = vadd.f32 %v3445, %v4150
      %4152 = vmatmul.bf16.gmra.mxu0 %v3581
      %v4153 = vpop.f32.mrf.mxu0
      %v4154 = vadd.f32 %v3445, %v4153
      %v4155 = vpop.f32.mrf.mxu0
      %v4156 = vadd.f32 %v3445, %v4155
      %4157 = vmatmul.bf16.gmra.mxu0 %v3584
      %v4158 = vpop.f32.mrf.mxu0
      %v4159 = vadd.f32 %v3445, %v4158
      %v4160 = vpop.f32.mrf.mxu0
      %v4161 = vadd.f32 %v3445, %v4160
      %4162 = vmatmul.bf16.gmra.mxu0 %v3587
      %v4163 = vpop.f32.mrf.mxu0
      %v4164 = vadd.f32 %v3445, %v4163
      %v4165 = vpop.f32.mrf.mxu0
      %v4166 = vadd.f32 %v3445, %v4165
      %4167 = vmatmul.bf16.gmra.mxu0 %v3590
      %v4168 = vpop.f32.mrf.mxu0
      %v4169 = vadd.f32 %v3445, %v4168
      %v4170 = vpop.f32.mrf.mxu0
      %v4171 = vadd.f32 %v3445, %v4170
      %4172 = vdwg.mxu0
      %4173 = vmatpush.bf16.msra.mxu0 0
      %4174 = vmatpush.bf16.msra.mxu0 0
      %4175 = vmatpush.bf16.msra.mxu0 0
      %4176 = vmatpush.bf16.msra.mxu0 0
      %4177 = vmatpush.bf16.msra.mxu0 0
      %4178 = vmatpush.bf16.msra.mxu0 0
      %4179 = vmatpush.bf16.msra.mxu0 %v3626
      %4180 = vmatpush.bf16.msra.mxu0 %v3537
      %4181 = vmatmul.bf16.gmra.mxu0 %v3569
      %v4182 = vpop.f32.mrf.mxu0
      %v4183 = vadd.f32 %v3446, %v4182
      %v4184 = vpop.f32.mrf.mxu0
      %v4185 = vadd.f32 %v3446, %v4184
      %4186 = vmatmul.bf16.gmra.mxu0 %v3572
      %v4187 = vpop.f32.mrf.mxu0
      %v4188 = vadd.f32 %v3446, %v4187
      %v4189 = vpop.f32.mrf.mxu0
      %v4190 = vadd.f32 %v3446, %v4189
      %4191 = vmatmul.bf16.gmra.mxu0 %v3575
      %v4192 = vpop.f32.mrf.mxu0
      %v4193 = vadd.f32 %v3446, %v4192
      %v4194 = vpop.f32.mrf.mxu0
      %v4195 = vadd.f32 %v3446, %v4194
      %4196 = vmatmul.bf16.gmra.mxu0 %v3578
      %v4197 = vpop.f32.mrf.mxu0
      %v4198 = vadd.f32 %v3446, %v4197
      %v4199 = vpop.f32.mrf.mxu0
      %v4200 = vadd.f32 %v3446, %v4199
      %4201 = vmatmul.bf16.gmra.mxu0 %v3581
      %v4202 = vpop.f32.mrf.mxu0
      %v4203 = vadd.f32 %v3446, %v4202
      %v4204 = vpop.f32.mrf.mxu0
      %v4205 = vadd.f32 %v3446, %v4204
      %4206 = vmatmul.bf16.gmra.mxu0 %v3584
      %v4207 = vpop.f32.mrf.mxu0
      %v4208 = vadd.f32 %v3446, %v4207
      %v4209 = vpop.f32.mrf.mxu0
      %v4210 = vadd.f32 %v3446, %v4209
      %4211 = vmatmul.bf16.gmra.mxu0 %v3587
      %v4212 = vpop.f32.mrf.mxu0
      %v4213 = vadd.f32 %v3446, %v4212
      %v4214 = vpop.f32.mrf.mxu0
      %v4215 = vadd.f32 %v3446, %v4214
      %4216 = vmatmul.bf16.gmra.mxu0 %v3590
      %v4217 = vpop.f32.mrf.mxu0
      %v4218 = vadd.f32 %v3446, %v4217
      %v4219 = vpop.f32.mrf.mxu0
      %v4220 = vadd.f32 %v3446, %v4219
      %4221 = vdwg.mxu0
      %4222 = vmatpush.bf16.msra.mxu0 0
      %4223 = vmatpush.bf16.msra.mxu0 0
      %4224 = vmatpush.bf16.msra.mxu0 0
      %4225 = vmatpush.bf16.msra.mxu0 0
      %4226 = vmatpush.bf16.msra.mxu0 0
      %4227 = vmatpush.bf16.msra.mxu0 0
      %4228 = vmatpush.bf16.msra.mxu0 %v3629
      %4229 = vmatpush.bf16.msra.mxu0 %v3538
      %4230 = vmatmul.bf16.gmra.mxu0 %v3569
      %v4231 = vpop.f32.mrf.mxu0
      %v4232 = vadd.f32 %v3447, %v4231
      %v4233 = vpop.f32.mrf.mxu0
      %v4234 = vadd.f32 %v3447, %v4233
      %4235 = vmatmul.bf16.gmra.mxu0 %v3572
      %v4236 = vpop.f32.mrf.mxu0
      %v4237 = vadd.f32 %v3447, %v4236
      %v4238 = vpop.f32.mrf.mxu0
      %v4239 = vadd.f32 %v3447, %v4238
      %4240 = vmatmul.bf16.gmra.mxu0 %v3575
      %v4241 = vpop.f32.mrf.mxu0
      %v4242 = vadd.f32 %v3447, %v4241
      %v4243 = vpop.f32.mrf.mxu0
      %v4244 = vadd.f32 %v3447, %v4243
      %4245 = vmatmul.bf16.gmra.mxu0 %v3578
      %v4246 = vpop.f32.mrf.mxu0
      %v4247 = vadd.f32 %v3447, %v4246
      %v4248 = vpop.f32.mrf.mxu0
      %v4249 = vadd.f32 %v3447, %v4248
      %4250 = vmatmul.bf16.gmra.mxu0 %v3581
      %v4251 = vpop.f32.mrf.mxu0
      %v4252 = vadd.f32 %v3447, %v4251
      %v4253 = vpop.f32.mrf.mxu0
      %v4254 = vadd.f32 %v3447, %v4253
      %4255 = vmatmul.bf16.gmra.mxu0 %v3584
      %v4256 = vpop.f32.mrf.mxu0
      %v4257 = vadd.f32 %v3447, %v4256
      %v4258 = vpop.f32.mrf.mxu0
      %v4259 = vadd.f32 %v3447, %v4258
      %4260 = vmatmul.bf16.gmra.mxu0 %v3587
      %v4261 = vpop.f32.mrf.mxu0
      %v4262 = vadd.f32 %v3447, %v4261
      %v4263 = vpop.f32.mrf.mxu0
      %v4264 = vadd.f32 %v3447, %v4263
      %4265 = vmatmul.bf16.gmra.mxu0 %v3590
      %v4266 = vpop.f32.mrf.mxu0
      %v4267 = vadd.f32 %v3447, %v4266
      %v4268 = vpop.f32.mrf.mxu0
      %v4269 = vadd.f32 %v3447, %v4268
      %4270 = vdwg.mxu0
      %4271 = vmatpush.bf16.msra.mxu0 0
      %4272 = vmatpush.bf16.msra.mxu0 0
      %4273 = vmatpush.bf16.msra.mxu0 0
      %4274 = vmatpush.bf16.msra.mxu0 0
      %4275 = vmatpush.bf16.msra.mxu0 0
      %4276 = vmatpush.bf16.msra.mxu0 0
      %4277 = vmatpush.bf16.msra.mxu0 %v3632
      %4278 = vmatpush.bf16.msra.mxu0 %v3539
      %4279 = vmatmul.bf16.gmra.mxu0 %v3569
      %v4280 = vpop.f32.mrf.mxu0
      %v4281 = vadd.f32 %v3448, %v4280
      %v4282 = vpop.f32.mrf.mxu0
      %v4283 = vadd.f32 %v3448, %v4282
      %4284 = vmatmul.bf16.gmra.mxu0 %v3572
      %v4285 = vpop.f32.mrf.mxu0
      %v4286 = vadd.f32 %v3448, %v4285
      %v4287 = vpop.f32.mrf.mxu0
      %v4288 = vadd.f32 %v3448, %v4287
      %4289 = vmatmul.bf16.gmra.mxu0 %v3575
      %v4290 = vpop.f32.mrf.mxu0
      %v4291 = vadd.f32 %v3448, %v4290
      %v4292 = vpop.f32.mrf.mxu0
      %v4293 = vadd.f32 %v3448, %v4292
      %4294 = vmatmul.bf16.gmra.mxu0 %v3578
      %v4295 = vpop.f32.mrf.mxu0
      %v4296 = vadd.f32 %v3448, %v4295
      %v4297 = vpop.f32.mrf.mxu0
      %v4298 = vadd.f32 %v3448, %v4297
      %4299 = vmatmul.bf16.gmra.mxu0 %v3581
      %v4300 = vpop.f32.mrf.mxu0
      %v4301 = vadd.f32 %v3448, %v4300
      %v4302 = vpop.f32.mrf.mxu0
      %v4303 = vadd.f32 %v3448, %v4302
      %4304 = vmatmul.bf16.gmra.mxu0 %v3584
      %v4305 = vpop.f32.mrf.mxu0
      %v4306 = vadd.f32 %v3448, %v4305
      %v4307 = vpop.f32.mrf.mxu0
      %v4308 = vadd.f32 %v3448, %v4307
      %4309 = vmatmul.bf16.gmra.mxu0 %v3587
      %v4310 = vpop.f32.mrf.mxu0
      %v4311 = vadd.f32 %v3448, %v4310
      %v4312 = vpop.f32.mrf.mxu0
      %v4313 = vadd.f32 %v3448, %v4312
      %4314 = vmatmul.bf16.gmra.mxu0 %v3590
      %v4315 = vpop.f32.mrf.mxu0
      %v4316 = vadd.f32 %v3448, %v4315
      %v4317 = vpop.f32.mrf.mxu0
      %v4318 = vadd.f32 %v3448, %v4317
      %4319 = vdwg.mxu0
      %4320 = vst [vmem:[%s339] sm:$0xff] %v3644
      %4321 = vst [vmem:[%s339 + $0x8] sm:$0xff] %v3693
      %4322 = vst [vmem:[%s339 + $0x10] sm:$0xff] %v3742
      %4323 = vst [vmem:[%s339 + $0x18] sm:$0xff] %v3791
      %4324 = vst [vmem:[%s339 + $0x20] sm:$0xff] %v3840
      %4325 = vst [vmem:[%s339 + $0x28] sm:$0xff] %v3889
      %4326 = vst [vmem:[%s339 + $0x30] sm:$0xff] %v3938
      %4327 = vst [vmem:[%s339 + $0x38] sm:$0xff] %v3987
      %4328 = vst [vmem:[%s339 + $0x40] sm:$0xff] %v4036
      %4329 = vst [vmem:[%s339 + $0x48] sm:$0xff] %v4085
      %4330 = vst [vmem:[%s339 + $0x50] sm:$0xff] %v4134
      %4331 = vst [vmem:[%s339 + $0x58] sm:$0xff] %v4183
      %4332 = vst [vmem:[%s339 + $0x60] sm:$0xff] %v4232
      %4333 = vst.msk [vmem:[%s339 + $0x68] sm:$0xff] %vm1526, %v4281
      %4334 = vst [vmem:[%s339 + $0x70] sm:$0xff] %v3646
      %4335 = vst [vmem:[%s339 + $0x78] sm:$0xff] %v3695
      %4336 = vst [vmem:[%s339 + $0x80] sm:$0xff] %v3744
      %4337 = vst [vmem:[%s339 + $0x88] sm:$0xff] %v3793
      %4338 = vst [vmem:[%s339 + $0x90] sm:$0xff] %v3842
      %4339 = vst [vmem:[%s339 + $0x98] sm:$0xff] %v3891
      %4340 = vst [vmem:[%s339 + $0xa0] sm:$0xff] %v3940
      %4341 = vst [vmem:[%s339 + $0xa8] sm:$0xff] %v3989
      %4342 = vst [vmem:[%s339 + $0xb0] sm:$0xff] %v4038
      %4343 = vst [vmem:[%s339 + $0xb8] sm:$0xff] %v4087
      %4344 = vst [vmem:[%s339 + $0xc0] sm:$0xff] %v4136
      %4345 = vst [vmem:[%s339 + $0xc8] sm:$0xff] %v4185
      %4346 = vst [vmem:[%s339 + $0xd0] sm:$0xff] %v4234
      %4347 = vst.msk [vmem:[%s339 + $0xd8] sm:$0xff] %vm1526, %v4283
      %4348 = vst [vmem:[%s339 + $0xe0] sm:$0xff] %v3649
      %4349 = vst [vmem:[%s339 + $0xe8] sm:$0xff] %v3698
      %4350 = vst [vmem:[%s339 + $0xf0] sm:$0xff] %v3747
      %4351 = vst [vmem:[%s339 + $0xf8] sm:$0xff] %v3796
      %4352 = vst [vmem:[%s339 + $0x100] sm:$0xff] %v3845
      %4353 = vst [vmem:[%s339 + $0x108] sm:$0xff] %v3894
      %4354 = vst [vmem:[%s339 + $0x110] sm:$0xff] %v3943
      %4355 = vst [vmem:[%s339 + $0x118] sm:$0xff] %v3992
      %4356 = vst [vmem:[%s339 + $0x120] sm:$0xff] %v4041
      %4357 = vst [vmem:[%s339 + $0x128] sm:$0xff] %v4090
      %4358 = vst [vmem:[%s339 + $0x130] sm:$0xff] %v4139
      %4359 = vst [vmem:[%s339 + $0x138] sm:$0xff] %v4188
      %4360 = vst [vmem:[%s339 + $0x140] sm:$0xff] %v4237
      %4361 = vst.msk [vmem:[%s339 + $0x148] sm:$0xff] %vm1526, %v4286
      %4362 = vst [vmem:[%s339 + $0x150] sm:$0xff] %v3651
      %4363 = vst [vmem:[%s339 + $0x158] sm:$0xff] %v3700
      %4364 = vst [vmem:[%s339 + $0x160] sm:$0xff] %v3749
      %4365 = vst [vmem:[%s339 + $0x168] sm:$0xff] %v3798
      %4366 = vst [vmem:[%s339 + $0x170] sm:$0xff] %v3847
      %4367 = vst [vmem:[%s339 + $0x178] sm:$0xff] %v3896
      %4368 = vst [vmem:[%s339 + $0x180] sm:$0xff] %v3945
      %4369 = vst [vmem:[%s339 + $0x188] sm:$0xff] %v3994
      %4370 = vst [vmem:[%s339 + $0x190] sm:$0xff] %v4043
      %4371 = vst [vmem:[%s339 + $0x198] sm:$0xff] %v4092
      %4372 = vst [vmem:[%s339 + $0x1a0] sm:$0xff] %v4141
      %4373 = vst [vmem:[%s339 + $0x1a8] sm:$0xff] %v4190
      %4374 = vst [vmem:[%s339 + $0x1b0] sm:$0xff] %v4239
      %4375 = vst.msk [vmem:[%s339 + $0x1b8] sm:$0xff] %vm1526, %v4288
      %4376 = vst [vmem:[%s339 + $0x1c0] sm:$0xff] %v3654
      %4377 = vst [vmem:[%s339 + $0x1c8] sm:$0xff] %v3703
      %4378 = vst [vmem:[%s339 + $0x1d0] sm:$0xff] %v3752
      %4379 = vst [vmem:[%s339 + $0x1d8] sm:$0xff] %v3801
      %4380 = vst [vmem:[%s339 + $0x1e0] sm:$0xff] %v3850
      %4381 = vst [vmem:[%s339 + $0x1e8] sm:$0xff] %v3899
      %4382 = vst [vmem:[%s339 + $0x1f0] sm:$0xff] %v3948
      %4383 = vst [vmem:[%s339 + $0x1f8] sm:$0xff] %v3997
      %4384 = vst [vmem:[%s339 + $0x200] sm:$0xff] %v4046
      %4385 = vst [vmem:[%s339 + $0x208] sm:$0xff] %v4095
      %4386 = vst [vmem:[%s339 + $0x210] sm:$0xff] %v4144
      %4387 = vst [vmem:[%s339 + $0x218] sm:$0xff] %v4193
      %4388 = vst [vmem:[%s339 + $0x220] sm:$0xff] %v4242
      %4389 = vst.msk [vmem:[%s339 + $0x228] sm:$0xff] %vm1526, %v4291
      %4390 = vst [vmem:[%s339 + $0x230] sm:$0xff] %v3656
      %4391 = vst [vmem:[%s339 + $0x238] sm:$0xff] %v3705
      %4392 = vst [vmem:[%s339 + $0x240] sm:$0xff] %v3754
      %4393 = vst [vmem:[%s339 + $0x248] sm:$0xff] %v3803
      %4394 = vst [vmem:[%s339 + $0x250] sm:$0xff] %v3852
      %4395 = vst [vmem:[%s339 + $0x258] sm:$0xff] %v3901
      %4396 = vst [vmem:[%s339 + $0x260] sm:$0xff] %v3950
      %4397 = vst [vmem:[%s339 + $0x268] sm:$0xff] %v3999
      %4398 = vst [vmem:[%s339 + $0x270] sm:$0xff] %v4048
      %4399 = vst [vmem:[%s339 + $0x278] sm:$0xff] %v4097
      %4400 = vst [vmem:[%s339 + $0x280] sm:$0xff] %v4146
      %4401 = vst [vmem:[%s339 + $0x288] sm:$0xff] %v4195
      %4402 = vst [vmem:[%s339 + $0x290] sm:$0xff] %v4244
      %4403 = vst.msk [vmem:[%s339 + $0x298] sm:$0xff] %vm1526, %v4293
      %4404 = vst [vmem:[%s339 + $0x2a0] sm:$0xff] %v3659
      %4405 = vst [vmem:[%s339 + $0x2a8] sm:$0xff] %v3708
      %4406 = vst [vmem:[%s339 + $0x2b0] sm:$0xff] %v3757
      %4407 = vst [vmem:[%s339 + $0x2b8] sm:$0xff] %v3806
      %4408 = vst [vmem:[%s339 + $0x2c0] sm:$0xff] %v3855
      %4409 = vst [vmem:[%s339 + $0x2c8] sm:$0xff] %v3904
      %4410 = vst [vmem:[%s339 + $0x2d0] sm:$0xff] %v3953
      %4411 = vst [vmem:[%s339 + $0x2d8] sm:$0xff] %v4002
      %4412 = vst [vmem:[%s339 + $0x2e0] sm:$0xff] %v4051
      %4413 = vst [vmem:[%s339 + $0x2e8] sm:$0xff] %v4100
      %4414 = vst [vmem:[%s339 + $0x2f0] sm:$0xff] %v4149
      %4415 = vst [vmem:[%s339 + $0x2f8] sm:$0xff] %v4198
      %4416 = vst [vmem:[%s339 + $0x300] sm:$0xff] %v4247
      %4417 = vst.msk [vmem:[%s339 + $0x308] sm:$0xff] %vm1526, %v4296
      %4418 = vst [vmem:[%s339 + $0x310] sm:$0xff] %v3661
      %4419 = vst [vmem:[%s339 + $0x318] sm:$0xff] %v3710
      %4420 = vst [vmem:[%s339 + $0x320] sm:$0xff] %v3759
      %4421 = vst [vmem:[%s339 + $0x328] sm:$0xff] %v3808
      %4422 = vst [vmem:[%s339 + $0x330] sm:$0xff] %v3857
      %4423 = vst [vmem:[%s339 + $0x338] sm:$0xff] %v3906
      %4424 = vst [vmem:[%s339 + $0x340] sm:$0xff] %v3955
      %4425 = vst [vmem:[%s339 + $0x348] sm:$0xff] %v4004
      %4426 = vst [vmem:[%s339 + $0x350] sm:$0xff] %v4053
      %4427 = vst [vmem:[%s339 + $0x358] sm:$0xff] %v4102
      %4428 = vst [vmem:[%s339 + $0x360] sm:$0xff] %v4151
      %4429 = vst [vmem:[%s339 + $0x368] sm:$0xff] %v4200
      %4430 = vst [vmem:[%s339 + $0x370] sm:$0xff] %v4249
      %4431 = vst.msk [vmem:[%s339 + $0x378] sm:$0xff] %vm1526, %v4298
      %4432 = vst [vmem:[%s339 + $0x380] sm:$0xff] %v3664
      %4433 = vst [vmem:[%s339 + $0x388] sm:$0xff] %v3713
      %4434 = vst [vmem:[%s339 + $0x390] sm:$0xff] %v3762
      %4435 = vst [vmem:[%s339 + $0x398] sm:$0xff] %v3811
      %4436 = vst [vmem:[%s339 + $0x3a0] sm:$0xff] %v3860
      %4437 = vst [vmem:[%s339 + $0x3a8] sm:$0xff] %v3909
      %4438 = vst [vmem:[%s339 + $0x3b0] sm:$0xff] %v3958
      %4439 = vst [vmem:[%s339 + $0x3b8] sm:$0xff] %v4007
      %4440 = vst [vmem:[%s339 + $0x3c0] sm:$0xff] %v4056
      %4441 = vst [vmem:[%s339 + $0x3c8] sm:$0xff] %v4105
      %4442 = vst [vmem:[%s339 + $0x3d0] sm:$0xff] %v4154
      %4443 = vst [vmem:[%s339 + $0x3d8] sm:$0xff] %v4203
      %4444 = vst [vmem:[%s339 + $0x3e0] sm:$0xff] %v4252
      %4445 = vst.msk [vmem:[%s339 + $0x3e8] sm:$0xff] %vm1526, %v4301
      %4446 = vst [vmem:[%s339 + $0x3f0] sm:$0xff] %v3666
      %4447 = vst [vmem:[%s339 + $0x3f8] sm:$0xff] %v3715
      %4448 = vst [vmem:[%s339 + $0x400] sm:$0xff] %v3764
      %4449 = vst [vmem:[%s339 + $0x408] sm:$0xff] %v3813
      %4450 = vst [vmem:[%s339 + $0x410] sm:$0xff] %v3862
      %4451 = vst [vmem:[%s339 + $0x418] sm:$0xff] %v3911
      %4452 = vst [vmem:[%s339 + $0x420] sm:$0xff] %v3960
      %4453 = vst [vmem:[%s339 + $0x428] sm:$0xff] %v4009
      %4454 = vst [vmem:[%s339 + $0x430] sm:$0xff] %v4058
      %4455 = vst [vmem:[%s339 + $0x438] sm:$0xff] %v4107
      %4456 = vst [vmem:[%s339 + $0x440] sm:$0xff] %v4156
      %4457 = vst [vmem:[%s339 + $0x448] sm:$0xff] %v4205
      %4458 = vst [vmem:[%s339 + $0x450] sm:$0xff] %v4254
      %4459 = vst.msk [vmem:[%s339 + $0x458] sm:$0xff] %vm1526, %v4303
      %4460 = vst [vmem:[%s339 + $0x460] sm:$0xff] %v3669
      %4461 = vst [vmem:[%s339 + $0x468] sm:$0xff] %v3718
      %4462 = vst [vmem:[%s339 + $0x470] sm:$0xff] %v3767
      %4463 = vst [vmem:[%s339 + $0x478] sm:$0xff] %v3816
      %4464 = vst [vmem:[%s339 + $0x480] sm:$0xff] %v3865
      %4465 = vst [vmem:[%s339 + $0x488] sm:$0xff] %v3914
      %4466 = vst [vmem:[%s339 + $0x490] sm:$0xff] %v3963
      %4467 = vst [vmem:[%s339 + $0x498] sm:$0xff] %v4012
      %4468 = vst [vmem:[%s339 + $0x4a0] sm:$0xff] %v4061
      %4469 = vst [vmem:[%s339 + $0x4a8] sm:$0xff] %v4110
      %4470 = vst [vmem:[%s339 + $0x4b0] sm:$0xff] %v4159
      %4471 = vst [vmem:[%s339 + $0x4b8] sm:$0xff] %v4208
      %4472 = vst [vmem:[%s339 + $0x4c0] sm:$0xff] %v4257
      %4473 = vst.msk [vmem:[%s339 + $0x4c8] sm:$0xff] %vm1526, %v4306
      %4474 = vst [vmem:[%s339 + $0x4d0] sm:$0xff] %v3671
      %4475 = vst [vmem:[%s339 + $0x4d8] sm:$0xff] %v3720
      %4476 = vst [vmem:[%s339 + $0x4e0] sm:$0xff] %v3769
      %4477 = vst [vmem:[%s339 + $0x4e8] sm:$0xff] %v3818
      %4478 = vst [vmem:[%s339 + $0x4f0] sm:$0xff] %v3867
      %4479 = vst [vmem:[%s339 + $0x4f8] sm:$0xff] %v3916
      %4480 = vst [vmem:[%s339 + $0x500] sm:$0xff] %v3965
      %4481 = vst [vmem:[%s339 + $0x508] sm:$0xff] %v4014
      %4482 = vst [vmem:[%s339 + $0x510] sm:$0xff] %v4063
      %4483 = vst [vmem:[%s339 + $0x518] sm:$0xff] %v4112
      %4484 = vst [vmem:[%s339 + $0x520] sm:$0xff] %v4161
      %4485 = vst [vmem:[%s339 + $0x528] sm:$0xff] %v4210
      %4486 = vst [vmem:[%s339 + $0x530] sm:$0xff] %v4259
      %4487 = vst.msk [vmem:[%s339 + $0x538] sm:$0xff] %vm1526, %v4308
      %4488 = vst [vmem:[%s339 + $0x540] sm:$0xff] %v3674
      %4489 = vst [vmem:[%s339 + $0x548] sm:$0xff] %v3723
      %4490 = vst [vmem:[%s339 + $0x550] sm:$0xff] %v3772
      %4491 = vst [vmem:[%s339 + $0x558] sm:$0xff] %v3821
      %4492 = vst [vmem:[%s339 + $0x560] sm:$0xff] %v3870
      %4493 = vst [vmem:[%s339 + $0x568] sm:$0xff] %v3919
      %4494 = vst [vmem:[%s339 + $0x570] sm:$0xff] %v3968
      %4495 = vst [vmem:[%s339 + $0x578] sm:$0xff] %v4017
      %4496 = vst [vmem:[%s339 + $0x580] sm:$0xff] %v4066
      %4497 = vst [vmem:[%s339 + $0x588] sm:$0xff] %v4115
      %4498 = vst [vmem:[%s339 + $0x590] sm:$0xff] %v4164
      %4499 = vst [vmem:[%s339 + $0x598] sm:$0xff] %v4213
      %4500 = vst [vmem:[%s339 + $0x5a0] sm:$0xff] %v4262
      %4501 = vst.msk [vmem:[%s339 + $0x5a8] sm:$0xff] %vm1526, %v4311
      %4502 = vst [vmem:[%s339 + $0x5b0] sm:$0xff] %v3676
      %4503 = vst [vmem:[%s339 + $0x5b8] sm:$0xff] %v3725
      %4504 = vst [vmem:[%s339 + $0x5c0] sm:$0xff] %v3774
      %4505 = vst [vmem:[%s339 + $0x5c8] sm:$0xff] %v3823
      %4506 = vst [vmem:[%s339 + $0x5d0] sm:$0xff] %v3872
      %4507 = vst [vmem:[%s339 + $0x5d8] sm:$0xff] %v3921
      %4508 = vst [vmem:[%s339 + $0x5e0] sm:$0xff] %v3970
      %4509 = vst [vmem:[%s339 + $0x5e8] sm:$0xff] %v4019
      %4510 = vst [vmem:[%s339 + $0x5f0] sm:$0xff] %v4068
      %4511 = vst [vmem:[%s339 + $0x5f8] sm:$0xff] %v4117
      %4512 = vst [vmem:[%s339 + $0x600] sm:$0xff] %v4166
      %4513 = vst [vmem:[%s339 + $0x608] sm:$0xff] %v4215
      %4514 = vst [vmem:[%s339 + $0x610] sm:$0xff] %v4264
      %4515 = vst.msk [vmem:[%s339 + $0x618] sm:$0xff] %vm1526, %v4313
      %4516 = vst [vmem:[%s339 + $0x620] sm:$0xff] %v3679
      %4517 = vst [vmem:[%s339 + $0x628] sm:$0xff] %v3728
      %4518 = vst [vmem:[%s339 + $0x630] sm:$0xff] %v3777
      %4519 = vst [vmem:[%s339 + $0x638] sm:$0xff] %v3826
      %4520 = vst [vmem:[%s339 + $0x640] sm:$0xff] %v3875
      %4521 = vst [vmem:[%s339 + $0x648] sm:$0xff] %v3924
      %4522 = vst [vmem:[%s339 + $0x650] sm:$0xff] %v3973
      %4523 = vst [vmem:[%s339 + $0x658] sm:$0xff] %v4022
      %4524 = vst [vmem:[%s339 + $0x660] sm:$0xff] %v4071
      %4525 = vst [vmem:[%s339 + $0x668] sm:$0xff] %v4120
      %4526 = vst [vmem:[%s339 + $0x670] sm:$0xff] %v4169
      %4527 = vst [vmem:[%s339 + $0x678] sm:$0xff] %v4218
      %4528 = vst [vmem:[%s339 + $0x680] sm:$0xff] %v4267
      %4529 = vst.msk [vmem:[%s339 + $0x688] sm:$0xff] %vm1526, %v4316
      %4530 = vst [vmem:[%s339 + $0x690] sm:$0xff] %v3681
      %4531 = vst [vmem:[%s339 + $0x698] sm:$0xff] %v3730
      %4532 = vst [vmem:[%s339 + $0x6a0] sm:$0xff] %v3779
      %4533 = vst [vmem:[%s339 + $0x6a8] sm:$0xff] %v3828
      %4534 = vst [vmem:[%s339 + $0x6b0] sm:$0xff] %v3877
      %4535 = vst [vmem:[%s339 + $0x6b8] sm:$0xff] %v3926
      %4536 = vst [vmem:[%s339 + $0x6c0] sm:$0xff] %v3975
      %4537 = vst [vmem:[%s339 + $0x6c8] sm:$0xff] %v4024
      %4538 = vst [vmem:[%s339 + $0x6d0] sm:$0xff] %v4073
      %4539 = vst [vmem:[%s339 + $0x6d8] sm:$0xff] %v4122
      %4540 = vst [vmem:[%s339 + $0x6e0] sm:$0xff] %v4171
      %4541 = vst [vmem:[%s339 + $0x6e8] sm:$0xff] %v4220
      %4542 = vst [vmem:[%s339 + $0x6f0] sm:$0xff] %v4269
      %4543 = vst.msk [vmem:[%s339 + $0x6f8] sm:$0xff] %vm1526, %v4318
      %s4544 = smul.u32 16, %s20
      %p4545 = scmp.lt.s32.totalorder %s4544, 63
      %s4546 = scalar_select %p4545, %s4544, 63
      %s4547 = smul.addr %s4546, 14
      %s4548 = smul.addr %s4547, 8
      %s4549 = scalar_lea.vmem %s9, %s4548
      // Predicated region
      $region57: #{sae_forward.1} parent=55 // pred_check
        %p4550 = pneg %p232
      $region58: #{sae_forward.1} parent=55 // pred_check_branch
        %4552 = sbr.rel (%p4550) target = $region60
      $region59: #{sae_forward.1} parent=55 // pred_region
        %s4553 = smul.u32 16, %s20
      $region60: #{sae_forward.1} parent=55 // pred_fallthru
        _
    $region56: #{sae_forward.1} parent=5 // pred_fallthru
      _
    %p4554 = scmp.le.s32.totalorder 2, %s15
    // Predicated region
    $region61: #{sae_forward.1} parent=5 // pred_check
      %p4555 = pneg %p4554
    $region62: #{sae_forward.1} parent=5 // pred_check_branch
      %4557 = sbr.rel (%p4555) target = $region64
    $region63: #{sae_forward.1} parent=5 // pred_region
      %s4558 = ssub.s32 %s15, 2
      // Predicated region
      $region65: #{sae_forward.1} parent=63 // pred_check
        %p4559 = pneg %p238
      $region66: #{sae_forward.1} parent=63 // pred_check_branch
        %4561 = sbr.rel (%p4559) target = $region68
      $region67: #{sae_forward.1} parent=63 // pred_region
        %s4562 = smul.u32 16, %s21
        %p4563 = scmp.lt.s32.totalorder %s4562, 63
        %s4564 = scalar_select %p4563, %s4562, 63
        %s4565 = smul.addr %s4564, 14
        %s4566 = smul.addr %s4565, 8
        %s4567 = scalar_lea.vmem %s9, %s4566
      $region68: #{sae_forward.1} parent=63 // pred_fallthru
        _
    $region64: #{sae_forward.1} parent=5 // pred_fallthru
      _
  $region6: #{sae_forward.1} parent=0 // loop_footer
    %s19 = sadd.s32 1, %s15
  $region7: #{sae_forward.1} parent=0 // loop_footer_branch
    %14 = sbr.rel target = $region3
  $region8: #{sae_forward.1} parent=0 // loop_exit
    _

</llo_original>
